<compile_context>
chip_gen: v7x
topology: tpu7x:2x2x1
jax: 0.10.0
libtpu: 0.0.40
codegen_flags: <defaults>
</compile_context>

<pallas_src>
import jax
import jax.numpy as jnp
from jax.experimental import pallas as pl
from jax.experimental.pallas import tpu as pltpu


def _round_up(n, m):
    return ((n + m - 1) // m) * m


def _choose_batch_tile(B, batch_tile):
    """Pick a batch tile that is a multiple of 8, <= min(batch_tile, 1024),
    and gives at least 2 grid steps when the batch is big enough (v7x megacore)."""
    B8 = _round_up(B, 8)
    cap = min(max(batch_tile, 8), 1024)
    if B8 >= 16:
        half = _round_up((B8 + 1) // 2, 8)
        bt = min(cap, half)
    else:
        bt = B8
    return max(_round_up(bt, 8), 8)


def generator_kernel(x_ref,
                     w1_ref, b1_ref,
                     w2_ref, b2_ref,
                     w3_ref, b3_ref,
                     w4_ref, b4_ref,
                     o_ref):
    """Fused 4-layer MLP: (Linear+ReLU) x3 -> Linear -> Tanh, all in VMEM.

    Matmul inputs are bf16 (full MXU rate); accumulation, bias add, ReLU and
    tanh are f32; the final store is bf16 (lane-dense, half the writeback)."""
    h = x_ref[...]  # already bf16

    h = jnp.dot(h, w1_ref[...], preferred_element_type=jnp.float32)
    h = jnp.maximum(h + b1_ref[...], 0.0).astype(jnp.bfloat16)

    h = jnp.dot(h, w2_ref[...], preferred_element_type=jnp.float32)
    h = jnp.maximum(h + b2_ref[...], 0.0).astype(jnp.bfloat16)

    h = jnp.dot(h, w3_ref[...], preferred_element_type=jnp.float32)
    h = jnp.maximum(h + b3_ref[...], 0.0).astype(jnp.bfloat16)

    h = jnp.dot(h, w4_ref[...], preferred_element_type=jnp.float32)
    o_ref[...] = jnp.tanh(h + b4_ref[...]).astype(o_ref.dtype)


def generator_forward(x, params, *, batch_tile=512, out_dtype=jnp.float32):
    """Run the fused Generator MLP with Pallas.

    x:      (B, nz) float (any dtype; cast to bf16 for the kernel)
    params: list of (W, b) with W as (in, out), b as (out,) or (1, out)

    Handles arbitrary batch sizes (pads to the tile) and arbitrary output
    widths (pads the last layer to a multiple of 128 lanes, slices after).
    """
    B, nz = x.shape
    out_dim = params[-1][0].shape[1]

    # --- batch tiling: >=2 grid steps when possible, tile padded to 8.
    bt = _choose_batch_tile(B, batch_tile)
    B_pad = _round_up(B, bt)

    # --- bf16 input: halves input DMA bytes; matmul numerics unchanged.
    x = jnp.asarray(x, jnp.bfloat16)
    if B_pad != B:
        x = jnp.pad(x, ((0, B_pad - B), (0, 0)))

    # --- lane-dense output: pad final out dim up to a multiple of 128.
    out_dim_pad = _round_up(out_dim, 128)

    # --- prepare params: bf16 weights, f32 (1, out) biases, pad last layer.
    proc = []
    n_layers = len(params)
    for li, (w, b) in enumerate(params):
        w = jnp.asarray(w, jnp.bfloat16)
        b = jnp.asarray(b, jnp.float32).reshape(1, -1)
        if li == n_layers - 1 and out_dim_pad != out_dim:
            w = jnp.pad(w, ((0, 0), (0, out_dim_pad - out_dim)))
            b = jnp.pad(b, ((0, 0), (0, out_dim_pad - out_dim)))
        proc.append((w, b))

    # Batch is tiled over the grid; weights/biases are grid-invariant, so
    # single-buffer them (pl.Buffered(1)) to avoid a wasted pipeline buffer.
    in_specs = [pl.BlockSpec((bt, nz), lambda i: (i, 0))]
    flat_params = []
    for (w, b) in proc:
        in_specs.append(pl.BlockSpec(w.shape, lambda i: (0, 0),
                                     pipeline_mode=pl.Buffered(1)))
        in_specs.append(pl.BlockSpec(b.shape, lambda i: (0, 0),
                                     pipeline_mode=pl.Buffered(1)))
        flat_params.extend([w, b])

    out_specs = pl.BlockSpec((bt, out_dim_pad), lambda i: (i, 0))

    out = pl.pallas_call(
        generator_kernel,
        out_shape=jax.ShapeDtypeStruct((B_pad, out_dim_pad), jnp.bfloat16),
        grid_spec=pltpu.PrefetchScalarGridSpec(
            num_scalar_prefetch=0,
            grid=(B_pad // bt,),
            in_specs=in_specs,
            out_specs=out_specs,
        ),
        compiler_params=pltpu.CompilerParams(
            dimension_semantics=("parallel",),
            vmem_limit_bytes=32 * 1024 * 1024,
        ),
    )(x, *flat_params)

    out = out[:B, :out_dim]
    if out.dtype != out_dtype:
        out = out.astype(out_dtype)
    return out


def init_params(key, nz, model_input_dimension):
    """Deterministic init mimicking PyTorch Linear default (U[-1/sqrt(in), 1/sqrt(in)])."""
    dims = [nz, 1024, 512, 256, model_input_dimension]
    params = []
    for d_in, d_out in zip(dims[:-1], dims[1:]):
        key, kw, kb = jax.random.split(key, 3)
        bound = 1.0 / jnp.sqrt(jnp.float32(d_in))
        w = jax.random.uniform(kw, (d_in, d_out), jnp.float32, -bound, bound)
        b = jax.random.uniform(kb, (1, d_out), jnp.float32, -bound, bound)
        params.append((w, b))
    return params


def reference_forward_f32(x, params):
    h = x
    for i, (w, b) in enumerate(params):
        h = h @ w + b
        h = jnp.maximum(h, 0.0) if i < len(params) - 1 else jnp.tanh(h)
    return h


def reference_forward_bf16(x, params):
    """Reference with the same bf16-weight / f32-accumulate numerics as the kernel."""
    h = x
    for i, (w, b) in enumerate(params):
        h = jnp.dot(h.astype(jnp.bfloat16), w.astype(jnp.bfloat16),
                    preferred_element_type=jnp.float32) + b
        h = jnp.maximum(h, 0.0) if i < len(params) - 1 else jnp.tanh(h)
    return h


if __name__ == "__main__":
    nz = 100                      # latent dim (not a 128 multiple -> exercises K handling)
    model_input_dimension = 784   # generator output dim (not a 128 multiple -> exercises padding)
    B = 37                        # ragged batch (exercises batch padding + 2-step grid)

    key = jax.random.PRNGKey(0)
    key, kx = jax.random.split(key)
    x = jax.random.normal(kx, (B, nz), dtype=jnp.float32)
    params = init_params(key, nz, model_input_dimension)

    out = generator_forward(x, params, batch_tile=512, out_dtype=jnp.float32)
    out = jax.block_until_ready(out)
    assert out.shape == (B, model_input_dimension)
    assert out.dtype == jnp.float32

    # Match against a reference using the same bf16-weight numerics (tight-ish;
    # tolerance accounts for the bf16 output store), and against the full-f32
    # reference (loose, sanity on semantics).
    ref_bf16 = reference_forward_bf16(x, params)
    ref_f32 = reference_forward_f32(x, params)
    assert jnp.allclose(out, ref_bf16, atol=1e-2, rtol=1e-2), "mismatch vs bf16 reference"
    assert jnp.allclose(out, ref_f32, atol=6e-2, rtol=6e-2), "mismatch vs f32 reference"

    print("KERNEL_OK")
</pallas_src>

<mosaic_0001>
module attributes {stable_mosaic.version = 11 : i64} {
  func.func @generator_kernel(%arg0: i32, %arg1: memref<24x100xbf16, #tpu.memory_space<vmem>>, %arg2: memref<100x1024xbf16, #tpu.memory_space<vmem>>, %arg3: memref<1x1024xf32, #tpu.memory_space<vmem>>, %arg4: memref<1024x512xbf16, #tpu.memory_space<vmem>>, %arg5: memref<1x512xf32, #tpu.memory_space<vmem>>, %arg6: memref<512x256xbf16, #tpu.memory_space<vmem>>, %arg7: memref<1x256xf32, #tpu.memory_space<vmem>>, %arg8: memref<256x896xbf16, #tpu.memory_space<vmem>>, %arg9: memref<1x896xf32, #tpu.memory_space<vmem>>, %arg10: memref<24x896xbf16, #tpu.memory_space<vmem>>) attributes {dimension_semantics = [#tpu.dimension_semantics<parallel>], iteration_bounds = array<i64: 2>, scalar_prefetch = 0 : i64, scratch_operands = 0 : i64, tpu.core_type = #tpu.core_type<tc>, window_params = [{transform_indices = @transform_0, window_bounds = array<i64: 24, 100>}, {pipeline_mode = #tpu.pipeline_mode<synchronous>, transform_indices = @transform_1, window_bounds = array<i64: 100, 1024>}, {pipeline_mode = #tpu.pipeline_mode<synchronous>, transform_indices = @transform_2, window_bounds = array<i64: 1, 1024>}, {pipeline_mode = #tpu.pipeline_mode<synchronous>, transform_indices = @transform_3, window_bounds = array<i64: 1024, 512>}, {pipeline_mode = #tpu.pipeline_mode<synchronous>, transform_indices = @transform_4, window_bounds = array<i64: 1, 512>}, {pipeline_mode = #tpu.pipeline_mode<synchronous>, transform_indices = @transform_5, window_bounds = array<i64: 512, 256>}, {pipeline_mode = #tpu.pipeline_mode<synchronous>, transform_indices = @transform_6, window_bounds = array<i64: 1, 256>}, {pipeline_mode = #tpu.pipeline_mode<synchronous>, transform_indices = @transform_7, window_bounds = array<i64: 256, 896>}, {pipeline_mode = #tpu.pipeline_mode<synchronous>, transform_indices = @transform_8, window_bounds = array<i64: 1, 896>}, {transform_indices = @transform_9, window_bounds = array<i64: 24, 896>}]} {
    %c0 = arith.constant 0 : index
    %c0_0 = arith.constant 0 : index
    %0 = vector.load %arg1[%c0, %c0_0] : memref<24x100xbf16, #tpu.memory_space<vmem>>, vector<24x100xbf16>
    %c0_1 = arith.constant 0 : index
    %c0_2 = arith.constant 0 : index
    %1 = vector.load %arg2[%c0_1, %c0_2] : memref<100x1024xbf16, #tpu.memory_space<vmem>>, vector<100x1024xbf16>
    %cst = arith.constant dense<0.000000e+00> : vector<24x1024xf32>
    %2 = tpu.matmul %0, %1, %cst {dimension_numbers = #tpu.dot_dimension_numbers<[1], [0], [0], [1], [0, 0, 1, 1], [], []>} : vector<24x100xbf16>, vector<100x1024xbf16>, vector<24x1024xf32> -> vector<24x1024xf32>
    %c0_3 = arith.constant 0 : index
    %c0_4 = arith.constant 0 : index
    %3 = vector.load %arg3[%c0_3, %c0_4] : memref<1x1024xf32, #tpu.memory_space<vmem>>, vector<1x1024xf32>
    %4 = vector.broadcast %3 : vector<1x1024xf32> to vector<24x1024xf32>
    %5 = arith.addf %2, %4 : vector<24x1024xf32>
    %cst_5 = arith.constant 0.000000e+00 : f32
    %6 = vector.broadcast %cst_5 : f32 to vector<24x1024xf32>
    %7 = arith.maximumf %5, %6 : vector<24x1024xf32>
    %8 = arith.truncf %7 : vector<24x1024xf32> to vector<24x1024xbf16>
    %c0_6 = arith.constant 0 : index
    %c0_7 = arith.constant 0 : index
    %9 = vector.load %arg4[%c0_6, %c0_7] : memref<1024x512xbf16, #tpu.memory_space<vmem>>, vector<1024x512xbf16>
    %cst_8 = arith.constant dense<0.000000e+00> : vector<24x512xf32>
    %10 = tpu.matmul %8, %9, %cst_8 {dimension_numbers = #tpu.dot_dimension_numbers<[1], [0], [0], [1], [0, 0, 1, 1], [], []>} : vector<24x1024xbf16>, vector<1024x512xbf16>, vector<24x512xf32> -> vector<24x512xf32>
    %c0_9 = arith.constant 0 : index
    %c0_10 = arith.constant 0 : index
    %11 = vector.load %arg5[%c0_9, %c0_10] : memref<1x512xf32, #tpu.memory_space<vmem>>, vector<1x512xf32>
    %12 = vector.broadcast %11 : vector<1x512xf32> to vector<24x512xf32>
    %13 = arith.addf %10, %12 : vector<24x512xf32>
    %cst_11 = arith.constant 0.000000e+00 : f32
    %14 = vector.broadcast %cst_11 : f32 to vector<24x512xf32>
    %15 = arith.maximumf %13, %14 : vector<24x512xf32>
    %16 = arith.truncf %15 : vector<24x512xf32> to vector<24x512xbf16>
    %c0_12 = arith.constant 0 : index
    %c0_13 = arith.constant 0 : index
    %17 = vector.load %arg6[%c0_12, %c0_13] : memref<512x256xbf16, #tpu.memory_space<vmem>>, vector<512x256xbf16>
    %cst_14 = arith.constant dense<0.000000e+00> : vector<24x256xf32>
    %18 = tpu.matmul %16, %17, %cst_14 {dimension_numbers = #tpu.dot_dimension_numbers<[1], [0], [0], [1], [0, 0, 1, 1], [], []>} : vector<24x512xbf16>, vector<512x256xbf16>, vector<24x256xf32> -> vector<24x256xf32>
    %c0_15 = arith.constant 0 : index
    %c0_16 = arith.constant 0 : index
    %19 = vector.load %arg7[%c0_15, %c0_16] : memref<1x256xf32, #tpu.memory_space<vmem>>, vector<1x256xf32>
    %20 = vector.broadcast %19 : vector<1x256xf32> to vector<24x256xf32>
    %21 = arith.addf %18, %20 : vector<24x256xf32>
    %cst_17 = arith.constant 0.000000e+00 : f32
    %22 = vector.broadcast %cst_17 : f32 to vector<24x256xf32>
    %23 = arith.maximumf %21, %22 : vector<24x256xf32>
    %24 = arith.truncf %23 : vector<24x256xf32> to vector<24x256xbf16>
    %c0_18 = arith.constant 0 : index
    %c0_19 = arith.constant 0 : index
    %25 = vector.load %arg8[%c0_18, %c0_19] : memref<256x896xbf16, #tpu.memory_space<vmem>>, vector<256x896xbf16>
    %cst_20 = arith.constant dense<0.000000e+00> : vector<24x896xf32>
    %26 = tpu.matmul %24, %25, %cst_20 {dimension_numbers = #tpu.dot_dimension_numbers<[1], [0], [0], [1], [0, 0, 1, 1], [], []>} : vector<24x256xbf16>, vector<256x896xbf16>, vector<24x896xf32> -> vector<24x896xf32>
    %c0_21 = arith.constant 0 : index
    %c0_22 = arith.constant 0 : index
    %27 = vector.load %arg9[%c0_21, %c0_22] : memref<1x896xf32, #tpu.memory_space<vmem>>, vector<1x896xf32>
    %28 = vector.broadcast %27 : vector<1x896xf32> to vector<24x896xf32>
    %29 = arith.addf %26, %28 : vector<24x896xf32>
    %30 = math.tanh %29 : vector<24x896xf32>
    %31 = arith.truncf %30 : vector<24x896xf32> to vector<24x896xbf16>
    %c0_23 = arith.constant 0 : index
    %c0_24 = arith.constant 0 : index
    %32 = vector.load %arg10[%c0_23, %c0_24] : memref<24x896xbf16, #tpu.memory_space<vmem>>, vector<24x896xbf16>
    tpu.vector_store %arg10[%c0_23, %c0_24], %31 {strides = array<i32>} : memref<24x896xbf16, #tpu.memory_space<vmem>>, vector<24x896xbf16>,
    return
  }
  func.func @transform_0(%arg0: i32) -> (i32, i32) {
    %c0_i32 = arith.constant 0 : i32
    %c0_i32_0 = arith.constant 0 : i32
    return %arg0, %c0_i32 : i32, i32
  }
  func.func @transform_1(%arg0: i32) -> (i32, i32) {
    %c0_i32 = arith.constant 0 : i32
    %c0_i32_0 = arith.constant 0 : i32
    %c0_i32_1 = arith.constant 0 : i32
    return %c0_i32, %c0_i32_0 : i32, i32
  }
  func.func @transform_2(%arg0: i32) -> (i32, i32) {
    %c0_i32 = arith.constant 0 : i32
    %c0_i32_0 = arith.constant 0 : i32
    %c0_i32_1 = arith.constant 0 : i32
    return %c0_i32, %c0_i32_0 : i32, i32
  }
  func.func @transform_3(%arg0: i32) -> (i32, i32) {
    %c0_i32 = arith.constant 0 : i32
    %c0_i32_0 = arith.constant 0 : i32
    %c0_i32_1 = arith.constant 0 : i32
    return %c0_i32, %c0_i32_0 : i32, i32
  }
  func.func @transform_4(%arg0: i32) -> (i32, i32) {
    %c0_i32 = arith.constant 0 : i32
    %c0_i32_0 = arith.constant 0 : i32
    %c0_i32_1 = arith.constant 0 : i32
    return %c0_i32, %c0_i32_0 : i32, i32
  }
  func.func @transform_5(%arg0: i32) -> (i32, i32) {
    %c0_i32 = arith.constant 0 : i32
    %c0_i32_0 = arith.constant 0 : i32
    %c0_i32_1 = arith.constant 0 : i32
    return %c0_i32, %c0_i32_0 : i32, i32
  }
  func.func @transform_6(%arg0: i32) -> (i32, i32) {
    %c0_i32 = arith.constant 0 : i32
    %c0_i32_0 = arith.constant 0 : i32
    %c0_i32_1 = arith.constant 0 : i32
    return %c0_i32, %c0_i32_0 : i32, i32
  }
  func.func @transform_7(%arg0: i32) -> (i32, i32) {
    %c0_i32 = arith.constant 0 : i32
    %c0_i32_0 = arith.constant 0 : i32
    %c0_i32_1 = arith.constant 0 : i32
    return %c0_i32, %c0_i32_0 : i32, i32
  }
  func.func @transform_8(%arg0: i32) -> (i32, i32) {
    %c0_i32 = arith.constant 0 : i32
    %c0_i32_0 = arith.constant 0 : i32
    %c0_i32_1 = arith.constant 0 : i32
    return %c0_i32, %c0_i32_0 : i32, i32
  }
  func.func @transform_9(%arg0: i32) -> (i32, i32) {
    %c0_i32 = arith.constant 0 : i32
    %c0_i32_0 = arith.constant 0 : i32
    return %arg0, %c0_i32 : i32, i32
  }
}

</mosaic_0001>

<llo_original>
// kernel: tpu_custom_call.1
$region0: #{tpu_custom_call.1}
  #allocation0 [shape = 'u32[]', space=smem, size = 0x4, offset = 0x4, fixed_abs, tag = 'smem constant byte address 0x4 - core index']
  #allocation1 [shape = 'u32[144,128]{1,0:T(1,128)}', space=vmem, size = 0x12000, scoped, tag = 'internal scratch']
  %s0 = inlined_call_operand.hbm [shape: bf16[48,100], index: 0, kind: input, shape index: {}]
  %s1 = inlined_call_operand.hbm [shape: bf16[100,1024], index: 1, kind: input, shape index: {}]
  %s2 = inlined_call_operand.hbm [shape: f32[1,1024], index: 2, kind: input, shape index: {}]
  %s3 = inlined_call_operand.hbm [shape: bf16[1024,512], index: 3, kind: input, shape index: {}]
  %s4 = inlined_call_operand.vmem [shape: f32[1,512], index: 4, kind: input, shape index: {}]
  %s5 = inlined_call_operand.hbm [shape: bf16[512,256], index: 5, kind: input, shape index: {}]
  %s6 = inlined_call_operand.vmem [shape: f32[1,256], index: 6, kind: input, shape index: {}]
  %s7 = inlined_call_operand.hbm [shape: bf16[256,896], index: 7, kind: input, shape index: {}]
  %s8 = inlined_call_operand.vmem [shape: f32[1,896], index: 8, kind: input, shape index: {}]
  %s9 = inlined_call_operand.hbm [shape: bf16[48,896], index: 9, kind: output, shape index: {}]
  %s10 = sld [smem:[#allocation0]]
  $region93: #{tpu_custom_call.1} parent=0
    _
  %s12 = ssub.s32 1, %s10
  %s13 = scalar_select 0, %s12, %s10
  $region1: #{tpu_custom_call.1} parent=0
    #allocation2 [shape = 'u8[12288]{0}', space=vmem, size = 0x3000, scoped, tag = 'input window, operand 0']
    #allocation3 [shape = 's32[2]{0}', space=sflag, size = 0x8, scoped, tag = 'scoped memory for tpu_custom_call.1']
    #allocation4 [shape = 's32[2]{0}', space=sflag, size = 0x8, scoped, tag = 'scoped memory for tpu_custom_call.1']
    #allocation5 [shape = 'u8[212992]{0}', space=vmem, size = 0x34000, scoped, tag = 'input window, operand 1, single buffered']
    #allocation6 [shape = 's32[1]{0}', space=sflag, size = 0x4, scoped, tag = 'scoped memory for tpu_custom_call.1']
    #allocation7 [shape = 'u8[4096]{0}', space=vmem, size = 0x1000, scoped, tag = 'input window, operand 2, single buffered']
    #allocation8 [shape = 'u8[1048576]{0}', space=vmem, size = 0x100000, scoped, tag = 'input window, operand 3, single buffered']
    #allocation9 [shape = 's32[1]{0}', space=sflag, size = 0x4, scoped, tag = 'scoped memory for tpu_custom_call.1']
    #allocation10 [shape = 'u8[262144]{0}', space=vmem, size = 0x40000, scoped, tag = 'input window, operand 5, single buffered']
    #allocation11 [shape = 'u8[458752]{0}', space=vmem, size = 0x70000, scoped, tag = 'input window, operand 7, single buffered']
    #allocation12 [shape = 's32[1]{0}', space=sflag, size = 0x4, scoped, tag = 'scoped memory for tpu_custom_call.1']
    #allocation13 [shape = 'u8[86016]{0}', space=vmem, size = 0x15000, scoped, tag = 'output window, operand 0']
    %14 = vsyncpa [#allocation3], 0
    %s15 = scalar_lea.sflag [#allocation3], 1
    %16 = vsyncpa %s15, 0
    %17 = vsyncpa [#allocation6], 0
    %18 = vsyncpa [#allocation9], 0
    %19 = vsyncpa [#allocation12], 0
    %20 = vsyncpa [#allocation4], 0
    %s21 = scalar_lea.sflag [#allocation4], 1
    %22 = vsyncpa %s21, 0
    loop: start=0, step=1, limit=4
    $region2: #{tpu_custom_call.1} parent=1 // loop_pre_header
      _
    $region3: #{tpu_custom_call.1} parent=1 // loop_header
      %s24 = sphi 0, %s28
      %p25 = scmp.ge.s32.totalorder %s24, 4
      %s34 = sphi 0, %s36
      %s37 = sphi 0, %s34
      %s38 = sphi 0, %s37
      %s54 = sphi 0, %s38
      %s58 = sphi 0, %s58
      %s60 = sphi 0, %s58
      %s61 = sphi 0, %s60
      %s75 = sphi 0, %s61
      %s79 = sphi 0, %s79
      %s81 = sphi 0, %s79
      %s82 = sphi 0, %s81
      %s96 = sphi 0, %s82
      %s100 = sphi 0, %s100
      %s102 = sphi 0, %s100
      %s103 = sphi 0, %s102
      %s117 = sphi 0, %s103
      %s121 = sphi 0, %s121
      %s123 = sphi 0, %s121
      %s124 = sphi 0, %s123
      %s138 = sphi 0, %s124
      %s142 = sphi 0, %s142
      %s144 = sphi 0, %s142
      %s145 = sphi 0, %s144
      %s159 = sphi 0, %s145
      %s163 = sphi 0, %s163
      %s165 = sphi 0, %s163
      %s166 = sphi 0, %s165
      %s180 = sphi 0, %s166
      %s184 = sphi 0, %s184
      %s186 = sphi 0, %s184
      %s187 = sphi 0, %s186
      %s201 = sphi 0, %s187
      %s205 = sphi 0, %s205
      %s207 = sphi 0, %s205
      %s208 = sphi 0, %s207
      %s222 = sphi 0, %s208
      %s228 = sphi 0, %s230
      %s231 = sphi 0, %s228
      %s232 = sphi 0, %s231
      %s248 = sphi 0, %s232
    $region4: #{tpu_custom_call.1} parent=1 // loop_header_branch
      %27 = sbr.rel (%p25) target = $region8
    $region5: #{tpu_custom_call.1} parent=1 // loop_body
      %s29 = ssub.s32 %s24, 1
      %s30 = ssub.s32 %s24, 2
      %s31 = sadd.s32 %s24, 1
      %s32 = ssub.s32 %s24, %s31
      %p33 = scmp.eq.s32.totalorder %s32, 0
      %s35 = sadd.s32 %s34, 1
      %s36 = scalar_select %p33, %s34, %s35
      %p39 = pneg %p33
      %p40 = scmp.eq.s32.totalorder %s24, 1
      %p41 = por %p39, %p40
      %p42 = scmp.ne.s32.totalorder %s34, %s37
      %p43 = scmp.eq.s32.totalorder %s24, 0
      %p44 = por %p42, %p43
      %p45 = scmp.ne.s32.totalorder %s34, %s37
      %p46 = scmp.eq.s32.totalorder %s29, 1
      %p47 = por %p45, %p46
      %p48 = scmp.ne.s32.totalorder %s37, %s38
      %p49 = scmp.eq.s32.totalorder %s29, 0
      %p50 = por %p48, %p49
      %p51 = scmp.ne.s32.totalorder %s37, %s38
      %p52 = scmp.eq.s32.totalorder %s30, 1
      %p53 = por %p51, %p52
      %p55 = scmp.ne.s32.totalorder %s38, %s54
      %p56 = scmp.eq.s32.totalorder %s30, 0
      %p57 = por %p55, %p56
      %s59 = sadd.s32 %s58, 1
      %p62 = scmp.eq.s32.totalorder %s24, 1
      %p63 = scmp.ne.s32.totalorder %s58, %s60
      %p64 = scmp.eq.s32.totalorder %s24, 0
      %p65 = por %p63, %p64
      %p66 = scmp.ne.s32.totalorder %s58, %s60
      %p67 = scmp.eq.s32.totalorder %s29, 1
      %p68 = por %p66, %p67
      %p69 = scmp.ne.s32.totalorder %s60, %s61
      %p70 = scmp.eq.s32.totalorder %s29, 0
      %p71 = por %p69, %p70
      %p72 = scmp.ne.s32.totalorder %s60, %s61
      %p73 = scmp.eq.s32.totalorder %s30, 1
      %p74 = por %p72, %p73
      %p76 = scmp.ne.s32.totalorder %s61, %s75
      %p77 = scmp.eq.s32.totalorder %s30, 0
      %p78 = por %p76, %p77
      %s80 = sadd.s32 %s79, 1
      %p83 = scmp.eq.s32.totalorder %s24, 1
      %p84 = scmp.ne.s32.totalorder %s79, %s81
      %p85 = scmp.eq.s32.totalorder %s24, 0
      %p86 = por %p84, %p85
      %p87 = scmp.ne.s32.totalorder %s79, %s81
      %p88 = scmp.eq.s32.totalorder %s29, 1
      %p89 = por %p87, %p88
      %p90 = scmp.ne.s32.totalorder %s81, %s82
      %p91 = scmp.eq.s32.totalorder %s29, 0
      %p92 = por %p90, %p91
      %p93 = scmp.ne.s32.totalorder %s81, %s82
      %p94 = scmp.eq.s32.totalorder %s30, 1
      %p95 = por %p93, %p94
      %p97 = scmp.ne.s32.totalorder %s82, %s96
      %p98 = scmp.eq.s32.totalorder %s30, 0
      %p99 = por %p97, %p98
      %s101 = sadd.s32 %s100, 1
      %p104 = scmp.eq.s32.totalorder %s24, 1
      %p105 = scmp.ne.s32.totalorder %s100, %s102
      %p106 = scmp.eq.s32.totalorder %s24, 0
      %p107 = por %p105, %p106
      %p108 = scmp.ne.s32.totalorder %s100, %s102
      %p109 = scmp.eq.s32.totalorder %s29, 1
      %p110 = por %p108, %p109
      %p111 = scmp.ne.s32.totalorder %s102, %s103
      %p112 = scmp.eq.s32.totalorder %s29, 0
      %p113 = por %p111, %p112
      %p114 = scmp.ne.s32.totalorder %s102, %s103
      %p115 = scmp.eq.s32.totalorder %s30, 1
      %p116 = por %p114, %p115
      %p118 = scmp.ne.s32.totalorder %s103, %s117
      %p119 = scmp.eq.s32.totalorder %s30, 0
      %p120 = por %p118, %p119
      %s122 = sadd.s32 %s121, 1
      %p125 = scmp.eq.s32.totalorder %s24, 1
      %p126 = scmp.ne.s32.totalorder %s121, %s123
      %p127 = scmp.eq.s32.totalorder %s24, 0
      %p128 = por %p126, %p127
      %p129 = scmp.ne.s32.totalorder %s121, %s123
      %p130 = scmp.eq.s32.totalorder %s29, 1
      %p131 = por %p129, %p130
      %p132 = scmp.ne.s32.totalorder %s123, %s124
      %p133 = scmp.eq.s32.totalorder %s29, 0
      %p134 = por %p132, %p133
      %p135 = scmp.ne.s32.totalorder %s123, %s124
      %p136 = scmp.eq.s32.totalorder %s30, 1
      %p137 = por %p135, %p136
      %p139 = scmp.ne.s32.totalorder %s124, %s138
      %p140 = scmp.eq.s32.totalorder %s30, 0
      %p141 = por %p139, %p140
      %s143 = sadd.s32 %s142, 1
      %p146 = scmp.eq.s32.totalorder %s24, 1
      %p147 = scmp.ne.s32.totalorder %s142, %s144
      %p148 = scmp.eq.s32.totalorder %s24, 0
      %p149 = por %p147, %p148
      %p150 = scmp.ne.s32.totalorder %s142, %s144
      %p151 = scmp.eq.s32.totalorder %s29, 1
      %p152 = por %p150, %p151
      %p153 = scmp.ne.s32.totalorder %s144, %s145
      %p154 = scmp.eq.s32.totalorder %s29, 0
      %p155 = por %p153, %p154
      %p156 = scmp.ne.s32.totalorder %s144, %s145
      %p157 = scmp.eq.s32.totalorder %s30, 1
      %p158 = por %p156, %p157
      %p160 = scmp.ne.s32.totalorder %s145, %s159
      %p161 = scmp.eq.s32.totalorder %s30, 0
      %p162 = por %p160, %p161
      %s164 = sadd.s32 %s163, 1
      %p167 = scmp.eq.s32.totalorder %s24, 1
      %p168 = scmp.ne.s32.totalorder %s163, %s165
      %p169 = scmp.eq.s32.totalorder %s24, 0
      %p170 = por %p168, %p169
      %p171 = scmp.ne.s32.totalorder %s163, %s165
      %p172 = scmp.eq.s32.totalorder %s29, 1
      %p173 = por %p171, %p172
      %p174 = scmp.ne.s32.totalorder %s165, %s166
      %p175 = scmp.eq.s32.totalorder %s29, 0
      %p176 = por %p174, %p175
      %p177 = scmp.ne.s32.totalorder %s165, %s166
      %p178 = scmp.eq.s32.totalorder %s30, 1
      %p179 = por %p177, %p178
      %p181 = scmp.ne.s32.totalorder %s166, %s180
      %p182 = scmp.eq.s32.totalorder %s30, 0
      %p183 = por %p181, %p182
      %s185 = sadd.s32 %s184, 1
      %p188 = scmp.eq.s32.totalorder %s24, 1
      %p189 = scmp.ne.s32.totalorder %s184, %s186
      %p190 = scmp.eq.s32.totalorder %s24, 0
      %p191 = por %p189, %p190
      %p192 = scmp.ne.s32.totalorder %s184, %s186
      %p193 = scmp.eq.s32.totalorder %s29, 1
      %p194 = por %p192, %p193
      %p195 = scmp.ne.s32.totalorder %s186, %s187
      %p196 = scmp.eq.s32.totalorder %s29, 0
      %p197 = por %p195, %p196
      %p198 = scmp.ne.s32.totalorder %s186, %s187
      %p199 = scmp.eq.s32.totalorder %s30, 1
      %p200 = por %p198, %p199
      %p202 = scmp.ne.s32.totalorder %s187, %s201
      %p203 = scmp.eq.s32.totalorder %s30, 0
      %p204 = por %p202, %p203
      %s206 = sadd.s32 %s205, 1
      %p209 = scmp.eq.s32.totalorder %s24, 1
      %p210 = scmp.ne.s32.totalorder %s205, %s207
      %p211 = scmp.eq.s32.totalorder %s24, 0
      %p212 = por %p210, %p211
      %p213 = scmp.ne.s32.totalorder %s205, %s207
      %p214 = scmp.eq.s32.totalorder %s29, 1
      %p215 = por %p213, %p214
      %p216 = scmp.ne.s32.totalorder %s207, %s208
      %p217 = scmp.eq.s32.totalorder %s29, 0
      %p218 = por %p216, %p217
      %p219 = scmp.ne.s32.totalorder %s207, %s208
      %p220 = scmp.eq.s32.totalorder %s30, 1
      %p221 = por %p219, %p220
      %p223 = scmp.ne.s32.totalorder %s208, %s222
      %p224 = scmp.eq.s32.totalorder %s30, 0
      %p225 = por %p223, %p224
      %s226 = ssub.s32 %s24, %s31
      %p227 = scmp.eq.s32.totalorder %s226, 0
      %s229 = sadd.s32 %s228, 1
      %s230 = scalar_select %p227, %s228, %s229
      %p233 = pneg %p227
      %p234 = scmp.eq.s32.totalorder %s24, 1
      %p235 = por %p233, %p234
      %p236 = scmp.ne.s32.totalorder %s228, %s231
      %p237 = scmp.eq.s32.totalorder %s24, 0
      %p238 = por %p236, %p237
      %p239 = scmp.ne.s32.totalorder %s228, %s231
      %p240 = scmp.eq.s32.totalorder %s29, 1
      %p241 = por %p239, %p240
      %p242 = scmp.ne.s32.totalorder %s231, %s232
      %p243 = scmp.eq.s32.totalorder %s29, 0
      %p244 = por %p242, %p243
      %p245 = scmp.ne.s32.totalorder %s231, %s232
      %p246 = scmp.eq.s32.totalorder %s30, 1
      %p247 = por %p245, %p246
      %p249 = scmp.ne.s32.totalorder %s232, %s248
      %p250 = scmp.eq.s32.totalorder %s30, 0
      %p251 = por %p249, %p250
      %p252 = scmp.le.s32.totalorder 1, %s24
      %p253 = scmp.lt.s32.totalorder %s24, 3
      %p254 = pnand %p252, %p253
      %p255 = pneg %p254
      // Predicated region
      $region9: #{tpu_custom_call.1} parent=5 // pred_check
        _
      $region10: #{tpu_custom_call.1} parent=5 // pred_check_branch
        %257 = sbr.rel (%p254) target = $region12
      $region11: #{tpu_custom_call.1} parent=5 // pred_region
        %s258 = ssub.s32 %s24, 1
        // Predicated region
        $region13: #{tpu_custom_call.1} parent=11 // pred_check
          %p259 = pneg %p71
        $region14: #{tpu_custom_call.1} parent=11 // pred_check_branch
          %261 = sbr.rel (%p259) target = $region16
        $region15: #{tpu_custom_call.1} parent=11 // pred_region
          %s263 = ssub.s32 6656, 6656
          %264 = vsyncadd [#allocation6], %s263
          %s265 = sshll.u32 [#allocation5], 4
          %s266 = int_to_ptr.vmem [resolvable:$true] %s265
          %271 = dma.hbm_to_vmem [thread:$0]  %s1, 6656, %s266, [#allocation6], 512, 512, 32
        $region16: #{tpu_custom_call.1} parent=11 // pred_fallthru
          _
        // Predicated region
        $region17: #{tpu_custom_call.1} parent=11 // pred_check
          %p272 = pneg %p92
        $region18: #{tpu_custom_call.1} parent=11 // pred_check_branch
          %274 = sbr.rel (%p272) target = $region20
        $region19: #{tpu_custom_call.1} parent=11 // pred_region
          %s276 = ssub.s32 128, 128
          %277 = vsyncadd [#allocation6], %s276
          %s279 = sshll.u32 [#allocation7], 4
          %s280 = int_to_ptr.vmem [resolvable:$true] %s279
          %282 = dma.hbm_to_vmem [thread:$0]  %s2, 128, %s280, [#allocation6]
        $region20: #{tpu_custom_call.1} parent=11 // pred_fallthru
          _
        // Predicated region
        $region21: #{tpu_custom_call.1} parent=11 // pred_check
          %p283 = pneg %p113
        $region22: #{tpu_custom_call.1} parent=11 // pred_check_branch
          %285 = sbr.rel (%p283) target = $region24
        $region23: #{tpu_custom_call.1} parent=11 // pred_region
          %s287 = ssub.s32 32768, 32768
          %288 = vsyncadd [#allocation9], %s287
          %s289 = sshll.u32 [#allocation8], 4
          %s290 = int_to_ptr.vmem [resolvable:$true] %s289
          %295 = dma.hbm_to_vmem [thread:$0]  %s3, 32768, %s290, [#allocation9], 256, 256, 16
        $region24: #{tpu_custom_call.1} parent=11 // pred_fallthru
          _
        // Predicated region
        $region25: #{tpu_custom_call.1} parent=11 // pred_check
          %p296 = pneg %p134
        $region26: #{tpu_custom_call.1} parent=11 // pred_check_branch
          %298 = sbr.rel (%p296) target = $region28
        $region27: #{tpu_custom_call.1} parent=11 // pred_region
          _
        $region28: #{tpu_custom_call.1} parent=11 // pred_fallthru
          _
        // Predicated region
        $region29: #{tpu_custom_call.1} parent=11 // pred_check
          %p299 = pneg %p155
        $region30: #{tpu_custom_call.1} parent=11 // pred_check_branch
          %301 = sbr.rel (%p299) target = $region32
        $region31: #{tpu_custom_call.1} parent=11 // pred_region
          %s303 = ssub.s32 8192, 8192
          %304 = vsyncadd [#allocation9], %s303
          %s305 = sshll.u32 [#allocation10], 4
          %s306 = int_to_ptr.vmem [resolvable:$true] %s305
          %311 = dma.hbm_to_vmem [thread:$0]  %s5, 8192, %s306, [#allocation9], 128, 128, 8
        $region32: #{tpu_custom_call.1} parent=11 // pred_fallthru
          _
        // Predicated region
        $region33: #{tpu_custom_call.1} parent=11 // pred_check
          %p312 = pneg %p176
        $region34: #{tpu_custom_call.1} parent=11 // pred_check_branch
          %314 = sbr.rel (%p312) target = $region36
        $region35: #{tpu_custom_call.1} parent=11 // pred_region
          _
        $region36: #{tpu_custom_call.1} parent=11 // pred_fallthru
          _
        // Predicated region
        $region37: #{tpu_custom_call.1} parent=11 // pred_check
          %p315 = pneg %p197
        $region38: #{tpu_custom_call.1} parent=11 // pred_check_branch
          %317 = sbr.rel (%p315) target = $region40
        $region39: #{tpu_custom_call.1} parent=11 // pred_region
          %s319 = ssub.s32 14336, 14336
          %320 = vsyncadd [#allocation12], %s319
          %s321 = sshll.u32 [#allocation11], 4
          %s322 = int_to_ptr.vmem [resolvable:$true] %s321
          %327 = dma.hbm_to_vmem [thread:$0]  %s7, 14336, %s322, [#allocation12], 448, 448, 28
        $region40: #{tpu_custom_call.1} parent=11 // pred_fallthru
          _
        // Predicated region
        $region41: #{tpu_custom_call.1} parent=11 // pred_check
          %p328 = pneg %p218
        $region42: #{tpu_custom_call.1} parent=11 // pred_check_branch
          %330 = sbr.rel (%p328) target = $region44
        $region43: #{tpu_custom_call.1} parent=11 // pred_region
          _
        $region44: #{tpu_custom_call.1} parent=11 // pred_fallthru
          _
      $region12: #{tpu_custom_call.1} parent=5 // pred_fallthru
        _
      %p331 = scmp.lt.s32.totalorder %s24, 2
      // Predicated region
      $region45: #{tpu_custom_call.1} parent=5 // pred_check
        %p332 = pneg %p331
      $region46: #{tpu_custom_call.1} parent=5 // pred_check_branch
        %334 = sbr.rel (%p332) target = $region48
      $region47: #{tpu_custom_call.1} parent=5 // pred_region
        // Predicated region
        $region49: #{tpu_custom_call.1} parent=47 // pred_check
          %p335 = pneg %p44
        $region50: #{tpu_custom_call.1} parent=47 // pred_check_branch
          %337 = sbr.rel (%p335) target = $region52
        $region51: #{tpu_custom_call.1} parent=47 // pred_region
          %s338 = sand.u32 %s34, 1
          %s339 = scalar_lea.sflag [#allocation3], %s338
          %s340 = sand.u32 %s34, 1
          %s341 = smul.addr %s340, 12
          %s342 = scalar_lea.vmem [#allocation2], %s341
          %s343 = smul.u32 3, %s24
          %s345 = ssub.s32 192, 192
          %346 = vsyncadd %s339, %s345
          %s347 = smul.addr %s343, 64
          %s348 = scalar_lea.hbm %s0, %s347
          %s349 = sshll.u32 %s342, 4
          %s350 = int_to_ptr.vmem [resolvable:$true] %s349
          %355 = dma.hbm_to_vmem [thread:$0]  %s348, 192, %s350, %s339, 64, 64, 4
        $region52: #{tpu_custom_call.1} parent=47 // pred_fallthru
          _
      $region48: #{tpu_custom_call.1} parent=5 // pred_fallthru
        _
      %p356 = scmp.le.s32.totalorder 1, %s24
      %p357 = scmp.lt.s32.totalorder %s24, 3
      %p358 = pnand %p356, %p357
      %p359 = pneg %p358
      // Predicated region
      $region53: #{tpu_custom_call.1} parent=5 // pred_check
        _
      $region54: #{tpu_custom_call.1} parent=5 // pred_check_branch
        %361 = sbr.rel (%p358) target = $region56
      $region55: #{tpu_custom_call.1} parent=5 // pred_region
        %s362 = ssub.s32 %s24, 1
        %s363 = sand.u32 %s37, 1
        %s364 = scalar_lea.sflag [#allocation3], %s363
        %s365 = sand.u32 %s37, 1
        %s366 = smul.addr %s365, 12
        %s367 = scalar_lea.vmem [#allocation2], %s366
        // Predicated region
        $region57: #{tpu_custom_call.1} parent=55 // pred_check
          %p368 = pneg %p50
        $region58: #{tpu_custom_call.1} parent=55 // pred_check_branch
          %370 = sbr.rel (%p368) target = $region60
        $region59: #{tpu_custom_call.1} parent=55 // pred_region
          %371 = dma.done %s364, 192
        $region60: #{tpu_custom_call.1} parent=55 // pred_fallthru
          _
        // Predicated region
        $region61: #{tpu_custom_call.1} parent=55 // pred_check
          %p372 = pneg %p71
        $region62: #{tpu_custom_call.1} parent=55 // pred_check_branch
          %374 = sbr.rel (%p372) target = $region64
        $region63: #{tpu_custom_call.1} parent=55 // pred_region
          %375 = dma.done [#allocation6], 6656
        $region64: #{tpu_custom_call.1} parent=55 // pred_fallthru
          _
        // Predicated region
        $region65: #{tpu_custom_call.1} parent=55 // pred_check
          %p376 = pneg %p92
        $region66: #{tpu_custom_call.1} parent=55 // pred_check_branch
          %378 = sbr.rel (%p376) target = $region68
        $region67: #{tpu_custom_call.1} parent=55 // pred_region
          %379 = dma.done [#allocation6], 128
        $region68: #{tpu_custom_call.1} parent=55 // pred_fallthru
          _
        // Predicated region
        $region69: #{tpu_custom_call.1} parent=55 // pred_check
          %p380 = pneg %p113
        $region70: #{tpu_custom_call.1} parent=55 // pred_check_branch
          %382 = sbr.rel (%p380) target = $region72
        $region71: #{tpu_custom_call.1} parent=55 // pred_region
          %383 = dma.done [#allocation9], 32768
        $region72: #{tpu_custom_call.1} parent=55 // pred_fallthru
          _
        // Predicated region
        $region73: #{tpu_custom_call.1} parent=55 // pred_check
          %p384 = pneg %p155
        $region74: #{tpu_custom_call.1} parent=55 // pred_check_branch
          %386 = sbr.rel (%p384) target = $region76
        $region75: #{tpu_custom_call.1} parent=55 // pred_region
          %387 = dma.done [#allocation9], 8192
        $region76: #{tpu_custom_call.1} parent=55 // pred_fallthru
          _
        // Predicated region
        $region77: #{tpu_custom_call.1} parent=55 // pred_check
          %p388 = pneg %p197
        $region78: #{tpu_custom_call.1} parent=55 // pred_check_branch
          %390 = sbr.rel (%p388) target = $region80
        $region79: #{tpu_custom_call.1} parent=55 // pred_region
          %391 = dma.done [#allocation12], 14336
        $region80: #{tpu_custom_call.1} parent=55 // pred_fallthru
          _
        %s392 = sand.u32 %s37, 1
        %s393 = scalar_lea.sflag [#allocation3], %s392
        %s394 = sand.u32 %s37, 1
        %s395 = smul.addr %s394, 12
        %s396 = scalar_lea.vmem [#allocation2], %s395
        %p397 = pneg %p50
        %p398 = pneg %p47
        %p399 = pneg %p71
        %p400 = pneg %p68
        %p401 = pneg %p92
        %p402 = pneg %p89
        %p403 = pneg %p113
        %p404 = pneg %p110
        %p405 = pneg %p134
        %p406 = pneg %p131
        %p407 = pneg %p155
        %p408 = pneg %p152
        %p409 = pneg %p176
        %p410 = pneg %p173
        %p411 = pneg %p197
        %p412 = pneg %p194
        %p413 = pneg %p218
        %p414 = pneg %p215
        %p415 = pneg %p244
        %p416 = pneg %p241
        %s417 = sand.u32 %s231, 1
        %s418 = scalar_lea.sflag [#allocation4], %s417
        %s419 = sand.u32 %s231, 1
        %s420 = smul.addr %s419, 84
        %s421 = scalar_lea.vmem [#allocation13], %s420
        %s422 = smul.u32 3, %s29
        %s423 = smul.u32 3, %s29
        %v425 = vld [vmem:[%s367] sm:$0xf]
        %v426 = vld [vmem:[%s367 + $0x4] sm:$0xf]
        %v427 = vld [vmem:[%s367 + $0x8] sm:$0xf]
        %v428 = vld [vmem:[#allocation5] sm:$0xff]
        %v429 = vld [vmem:[#allocation5 + $0x8] sm:$0xff]
        %v430 = vld [vmem:[#allocation5 + $0x10] sm:$0xff]
        %v431 = vld [vmem:[#allocation5 + $0x18] sm:$0xff]
        %v432 = vld [vmem:[#allocation5 + $0x20] sm:$0xff]
        %v433 = vld [vmem:[#allocation5 + $0x28] sm:$0xff]
        %v434 = vld [vmem:[#allocation5 + $0x30] sm:$0xff]
        %v435 = vld [vmem:[#allocation5 + $0x38] sm:$0xff]
        %v436 = vld [vmem:[#allocation5 + $0x40] sm:$0xff]
        %v437 = vld [vmem:[#allocation5 + $0x48] sm:$0xff]
        %v438 = vld [vmem:[#allocation5 + $0x50] sm:$0xff]
        %v439 = vld [vmem:[#allocation5 + $0x58] sm:$0xff]
        %v440 = vld [vmem:[#allocation5 + $0x60] sm:$0xff]
        %v441 = vld [vmem:[#allocation5 + $0x68] sm:$0xff]
        %v442 = vld [vmem:[#allocation5 + $0x70] sm:$0xff]
        %v443 = vld [vmem:[#allocation5 + $0x78] sm:$0xff]
        %v444 = vld [vmem:[#allocation5 + $0x80] sm:$0xff]
        %v445 = vld [vmem:[#allocation5 + $0x88] sm:$0xff]
        %v446 = vld [vmem:[#allocation5 + $0x90] sm:$0xff]
        %v447 = vld [vmem:[#allocation5 + $0x98] sm:$0xff]
        %v448 = vld [vmem:[#allocation5 + $0xa0] sm:$0xff]
        %v449 = vld [vmem:[#allocation5 + $0xa8] sm:$0xff]
        %v450 = vld [vmem:[#allocation5 + $0xb0] sm:$0xff]
        %v451 = vld [vmem:[#allocation5 + $0xb8] sm:$0xff]
        %v452 = vld [vmem:[#allocation5 + $0xc0] sm:$0xff]
        %v453 = vld [vmem:[#allocation5 + $0xc8] sm:$0xff]
        %v454 = vld [vmem:[#allocation5 + $0xd0] sm:$0xff]
        %v455 = vld [vmem:[#allocation5 + $0xd8] sm:$0xff]
        %v456 = vld [vmem:[#allocation5 + $0xe0] sm:$0xff]
        %v457 = vld [vmem:[#allocation5 + $0xe8] sm:$0xff]
        %v458 = vld [vmem:[#allocation5 + $0xf0] sm:$0xff]
        %v459 = vld [vmem:[#allocation5 + $0xf8] sm:$0xff]
        %v460 = vld [vmem:[#allocation5 + $0x100] sm:$0xff]
        %v461 = vld [vmem:[#allocation5 + $0x108] sm:$0xff]
        %v462 = vld [vmem:[#allocation5 + $0x110] sm:$0xff]
        %v463 = vld [vmem:[#allocation5 + $0x118] sm:$0xff]
        %v464 = vld [vmem:[#allocation5 + $0x120] sm:$0xff]
        %v465 = vld [vmem:[#allocation5 + $0x128] sm:$0xff]
        %v466 = vld [vmem:[#allocation5 + $0x130] sm:$0xff]
        %v467 = vld [vmem:[#allocation5 + $0x138] sm:$0xff]
        %v468 = vld [vmem:[#allocation5 + $0x140] sm:$0xff]
        %v469 = vld [vmem:[#allocation5 + $0x148] sm:$0xff]
        %v470 = vld [vmem:[#allocation5 + $0x150] sm:$0xff]
        %v471 = vld [vmem:[#allocation5 + $0x158] sm:$0xff]
        %v472 = vld [vmem:[#allocation5 + $0x160] sm:$0xff]
        %v473 = vld [vmem:[#allocation5 + $0x168] sm:$0xff]
        %v474 = vld [vmem:[#allocation5 + $0x170] sm:$0xff]
        %v475 = vld [vmem:[#allocation5 + $0x178] sm:$0xff]
        %v476 = vld [vmem:[#allocation5 + $0x180] sm:$0x33]
        %v477 = vld [vmem:[#allocation5 + $0x188] sm:$0x33]
        %v478 = vld [vmem:[#allocation5 + $0x190] sm:$0x33]
        %v479 = vld [vmem:[#allocation5 + $0x198] sm:$0x33]
        %v480 = vld [vmem:[#allocation7] sm:$0xff]
        %v482 = vlaneseq
        %v483 = vshrl.u32 %v482, 7
        %v484 = vsub.s32 0, %v483
        %v485 = vrot.slane %v480, %v484
        %v486 = vlaneseq
        %v487 = vshrl.u32 %v486, 7
        %v488 = vsub.s32 1, %v487
        %v489 = vrot.slane %v480, %v488
        %v490 = vlaneseq
        %v491 = vshrl.u32 %v490, 7
        %v492 = vsub.s32 2, %v491
        %v493 = vrot.slane %v480, %v492
        %v494 = vlaneseq
        %v495 = vshrl.u32 %v494, 7
        %v496 = vsub.s32 3, %v495
        %v497 = vrot.slane %v480, %v496
        %v498 = vlaneseq
        %v499 = vshrl.u32 %v498, 7
        %v500 = vsub.s32 4, %v499
        %v501 = vrot.slane %v480, %v500
        %v502 = vlaneseq
        %v503 = vshrl.u32 %v502, 7
        %v504 = vsub.s32 5, %v503
        %v505 = vrot.slane %v480, %v504
        %v506 = vlaneseq
        %v507 = vshrl.u32 %v506, 7
        %v508 = vsub.s32 6, %v507
        %v509 = vrot.slane %v480, %v508
        %v510 = vlaneseq
        %v511 = vshrl.u32 %v510, 7
        %v512 = vsub.s32 7, %v511
        %v513 = vrot.slane %v480, %v512
        %v525 = vunpack.c.l.b16 %v425
        %v526 = vunpack.c.l.b16 %v426
        %v527 = vunpack.c.l.b16 %v427
        %v528 = vpack.c.b16 %v526, %v525
        %v529 = vpack.c.b16 %v527, %v527
        %v582 = vunpack.c.l.b16 %v428
        %v583 = vunpack.c.h.b16 %v428
        %v584 = vunpack.c.l.b16 %v429
        %v585 = vunpack.c.h.b16 %v429
        %v586 = vunpack.c.l.b16 %v430
        %v587 = vunpack.c.h.b16 %v430
        %v588 = vunpack.c.l.b16 %v431
        %v589 = vunpack.c.h.b16 %v431
        %v590 = vunpack.c.l.b16 %v432
        %v591 = vunpack.c.h.b16 %v432
        %v592 = vunpack.c.l.b16 %v433
        %v593 = vunpack.c.h.b16 %v433
        %v594 = vunpack.c.l.b16 %v434
        %v595 = vunpack.c.h.b16 %v434
        %v596 = vunpack.c.l.b16 %v435
        %v597 = vunpack.c.h.b16 %v435
        %v598 = vunpack.c.l.b16 %v436
        %v599 = vunpack.c.h.b16 %v436
        %v600 = vunpack.c.l.b16 %v437
        %v601 = vunpack.c.h.b16 %v437
        %v602 = vunpack.c.l.b16 %v438
        %v603 = vunpack.c.h.b16 %v438
        %v604 = vunpack.c.l.b16 %v439
        %v605 = vunpack.c.h.b16 %v439
        %v606 = vunpack.c.l.b16 %v440
        %v607 = vunpack.c.h.b16 %v440
        %v608 = vunpack.c.l.b16 %v441
        %v609 = vunpack.c.h.b16 %v441
        %v610 = vunpack.c.l.b16 %v442
        %v611 = vunpack.c.h.b16 %v442
        %v612 = vunpack.c.l.b16 %v443
        %v613 = vunpack.c.h.b16 %v443
        %v614 = vunpack.c.l.b16 %v444
        %v615 = vunpack.c.h.b16 %v444
        %v616 = vunpack.c.l.b16 %v445
        %v617 = vunpack.c.h.b16 %v445
        %v618 = vunpack.c.l.b16 %v446
        %v619 = vunpack.c.h.b16 %v446
        %v620 = vunpack.c.l.b16 %v447
        %v621 = vunpack.c.h.b16 %v447
        %v622 = vunpack.c.l.b16 %v448
        %v623 = vunpack.c.h.b16 %v448
        %v624 = vunpack.c.l.b16 %v449
        %v625 = vunpack.c.h.b16 %v449
        %v626 = vunpack.c.l.b16 %v450
        %v627 = vunpack.c.h.b16 %v450
        %v628 = vunpack.c.l.b16 %v451
        %v629 = vunpack.c.h.b16 %v451
        %v630 = vunpack.c.l.b16 %v452
        %v631 = vunpack.c.h.b16 %v452
        %v632 = vunpack.c.l.b16 %v453
        %v633 = vunpack.c.h.b16 %v453
        %v634 = vunpack.c.l.b16 %v454
        %v635 = vunpack.c.h.b16 %v454
        %v636 = vunpack.c.l.b16 %v455
        %v637 = vunpack.c.h.b16 %v455
        %v638 = vunpack.c.l.b16 %v456
        %v639 = vunpack.c.h.b16 %v456
        %v640 = vunpack.c.l.b16 %v457
        %v641 = vunpack.c.h.b16 %v457
        %v642 = vunpack.c.l.b16 %v458
        %v643 = vunpack.c.h.b16 %v458
        %v644 = vunpack.c.l.b16 %v459
        %v645 = vunpack.c.h.b16 %v459
        %v646 = vunpack.c.l.b16 %v460
        %v647 = vunpack.c.h.b16 %v460
        %v648 = vunpack.c.l.b16 %v461
        %v649 = vunpack.c.h.b16 %v461
        %v650 = vunpack.c.l.b16 %v462
        %v651 = vunpack.c.h.b16 %v462
        %v652 = vunpack.c.l.b16 %v463
        %v653 = vunpack.c.h.b16 %v463
        %v654 = vunpack.c.l.b16 %v464
        %v655 = vunpack.c.h.b16 %v464
        %v656 = vunpack.c.l.b16 %v465
        %v657 = vunpack.c.h.b16 %v465
        %v658 = vunpack.c.l.b16 %v466
        %v659 = vunpack.c.h.b16 %v466
        %v660 = vunpack.c.l.b16 %v467
        %v661 = vunpack.c.h.b16 %v467
        %v662 = vunpack.c.l.b16 %v468
        %v663 = vunpack.c.h.b16 %v468
        %v664 = vunpack.c.l.b16 %v469
        %v665 = vunpack.c.h.b16 %v469
        %v666 = vunpack.c.l.b16 %v470
        %v667 = vunpack.c.h.b16 %v470
        %v668 = vunpack.c.l.b16 %v471
        %v669 = vunpack.c.h.b16 %v471
        %v670 = vunpack.c.l.b16 %v472
        %v671 = vunpack.c.h.b16 %v472
        %v672 = vunpack.c.l.b16 %v473
        %v673 = vunpack.c.h.b16 %v473
        %v674 = vunpack.c.l.b16 %v474
        %v675 = vunpack.c.h.b16 %v474
        %v676 = vunpack.c.l.b16 %v475
        %v677 = vunpack.c.h.b16 %v475
        %v678 = vunpack.c.l.b16 %v476
        %v679 = vunpack.c.h.b16 %v476
        %v680 = vunpack.c.l.b16 %v477
        %v681 = vunpack.c.h.b16 %v477
        %v682 = vunpack.c.l.b16 %v478
        %v683 = vunpack.c.h.b16 %v478
        %v684 = vunpack.c.l.b16 %v479
        %v685 = vunpack.c.h.b16 %v479
        %v686 = vpack.c.b16 %v590, %v582
        %v687 = vpack.c.b16 %v591, %v583
        %v688 = vpack.c.b16 %v592, %v584
        %v689 = vpack.c.b16 %v593, %v585
        %v690 = vpack.c.b16 %v594, %v586
        %v691 = vpack.c.b16 %v595, %v587
        %v692 = vpack.c.b16 %v596, %v588
        %v693 = vpack.c.b16 %v597, %v589
        %v694 = vpack.c.b16 %v606, %v598
        %v695 = vpack.c.b16 %v607, %v599
        %v696 = vpack.c.b16 %v608, %v600
        %v697 = vpack.c.b16 %v609, %v601
        %v698 = vpack.c.b16 %v610, %v602
        %v699 = vpack.c.b16 %v611, %v603
        %v700 = vpack.c.b16 %v612, %v604
        %v701 = vpack.c.b16 %v613, %v605
        %v702 = vpack.c.b16 %v622, %v614
        %v703 = vpack.c.b16 %v623, %v615
        %v704 = vpack.c.b16 %v624, %v616
        %v705 = vpack.c.b16 %v625, %v617
        %v706 = vpack.c.b16 %v626, %v618
        %v707 = vpack.c.b16 %v627, %v619
        %v708 = vpack.c.b16 %v628, %v620
        %v709 = vpack.c.b16 %v629, %v621
        %v710 = vpack.c.b16 %v638, %v630
        %v711 = vpack.c.b16 %v639, %v631
        %v712 = vpack.c.b16 %v640, %v632
        %v713 = vpack.c.b16 %v641, %v633
        %v714 = vpack.c.b16 %v642, %v634
        %v715 = vpack.c.b16 %v643, %v635
        %v716 = vpack.c.b16 %v644, %v636
        %v717 = vpack.c.b16 %v645, %v637
        %v718 = vpack.c.b16 %v654, %v646
        %v719 = vpack.c.b16 %v655, %v647
        %v720 = vpack.c.b16 %v656, %v648
        %v721 = vpack.c.b16 %v657, %v649
        %v722 = vpack.c.b16 %v658, %v650
        %v723 = vpack.c.b16 %v659, %v651
        %v724 = vpack.c.b16 %v660, %v652
        %v725 = vpack.c.b16 %v661, %v653
        %v726 = vpack.c.b16 %v670, %v662
        %v727 = vpack.c.b16 %v671, %v663
        %v728 = vpack.c.b16 %v672, %v664
        %v729 = vpack.c.b16 %v673, %v665
        %v730 = vpack.c.b16 %v674, %v666
        %v731 = vpack.c.b16 %v675, %v667
        %v732 = vpack.c.b16 %v676, %v668
        %v733 = vpack.c.b16 %v677, %v669
        %v734 = vpack.c.b16 %v678, %v678
        %v735 = vpack.c.b16 %v679, %v679
        %v736 = vpack.c.b16 %v680, %v680
        %v737 = vpack.c.b16 %v681, %v681
        %v738 = vpack.c.b16 %v682, %v682
        %v739 = vpack.c.b16 %v683, %v683
        %v740 = vpack.c.b16 %v684, %v684
        %v741 = vpack.c.b16 %v685, %v685
        %vm790 = vcmask 818176
        %v792 = vsel %vm790, %v528, 0
        %v795 = vsel %vm790, %v529, 0
        %vm797 = vcmask 1041408
        %v799 = vsel %vm797, %v734, 0
        %v802 = vsel %vm797, %v735, 0
        %v805 = vsel %vm797, %v736, 0
        %v808 = vsel %vm797, %v737, 0
        %v811 = vsel %vm797, %v738, 0
        %v814 = vsel %vm797, %v739, 0
        %v817 = vsel %vm797, %v740, 0
        %v820 = vsel %vm797, %v741, 0
        %822 = vmatprep.subr.bf16.mxu0 %v687
        %823 = vmatpush1.bf16.msra.mxu0 %v686
        %824 = vmatprep.subr.bf16.mxu0 %v695
        %825 = vmatpush1.bf16.msra.mxu0 %v694
        %826 = vmatprep.subr.bf16.mxu0 %v703
        %827 = vmatpush1.bf16.msra.mxu0 %v702
        %828 = vmatprep.subr.bf16.mxu0 %v711
        %829 = vmatpush1.bf16.msra.mxu0 %v710
        %830 = vmatprep.subr.bf16.mxu0 %v719
        %831 = vmatpush1.bf16.msra.mxu0 %v718
        %832 = vmatprep.subr.bf16.mxu0 %v727
        %833 = vmatpush1.bf16.msra.mxu0 %v726
        %834 = vmatprep.subr.bf16.mxu0 %v802
        %835 = vmatpush1.bf16.msra.mxu0 %v799
        %836 = vmatprep.subr.bf16.mxu0 0
        %837 = vmatpush1.bf16.msra.mxu0 0
        %838 = vmatprep.subr.bf16.mxu0 0
        %839 = vmatpush1.bf16.msra.mxu0 0
        %840 = vmatprep.subr.bf16.mxu0 0
        %841 = vmatpush1.bf16.msra.mxu0 0
        %842 = vmatprep.subr.bf16.mxu0 0
        %843 = vmatpush1.bf16.msra.mxu0 0
        %844 = vmatprep.subr.bf16.mxu0 0
        %845 = vmatpush1.bf16.msra.mxu0 0
        %846 = vmatprep.subr.bf16.mxu0 0
        %847 = vmatpush1.bf16.msra.mxu0 0
        %848 = vmatprep.subr.bf16.mxu0 0
        %849 = vmatpush1.bf16.msra.mxu0 0
        %850 = vmatprep.subr.bf16.mxu0 0
        %851 = vmatpush1.bf16.msra.mxu0 0
        %852 = vmatprep.subr.bf16.mxu0 0
        %853 = vmatpush1.bf16.msra.mxu0 0
        %854 = vmatprep.mubr.bf16.mxu0 0
        %855 = vmatmul.mubr.bf16.gmra.mrb[0].mxu0 %v792
        %v856 = vpop.f32.mrb[0].mxu0
        %v857 = vadd.f32 %v485, %v856
        %v858 = vpop.f32.mrb[0].mxu0
        %v859 = vadd.f32 %v489, %v858
        %v860 = vpop.f32.mrb[0].mxu0
        %v861 = vadd.f32 %v485, %v860
        %v862 = vpop.f32.mrb[0].mxu0
        %v863 = vadd.f32 %v489, %v862
        %864 = vmatprep.mubr.bf16.mxu0 0
        %865 = vmatmul.mubr.bf16.gmra.mrb[0].mxu0 %v795
        %v866 = vpop.f32.mrb[0].mxu0
        %v867 = vadd.f32 %v485, %v866
        %v868 = vpop.f32.mrb[0].mxu0
        %v869 = vadd.f32 %v489, %v868
        %v870 = vpop.f32.mrb[0].mxu0
        %v871 = vpop.f32.mrb[0].mxu0
        %872 = vdwg.mxu0
        %873 = vmatprep.subr.bf16.mxu0 %v689
        %874 = vmatpush1.bf16.msra.mxu0 %v688
        %875 = vmatprep.subr.bf16.mxu0 %v697
        %876 = vmatpush1.bf16.msra.mxu0 %v696
        %877 = vmatprep.subr.bf16.mxu0 %v705
        %878 = vmatpush1.bf16.msra.mxu0 %v704
        %879 = vmatprep.subr.bf16.mxu0 %v713
        %880 = vmatpush1.bf16.msra.mxu0 %v712
        %881 = vmatprep.subr.bf16.mxu0 %v721
        %882 = vmatpush1.bf16.msra.mxu0 %v720
        %883 = vmatprep.subr.bf16.mxu0 %v729
        %884 = vmatpush1.bf16.msra.mxu0 %v728
        %885 = vmatprep.subr.bf16.mxu0 %v808
        %886 = vmatpush1.bf16.msra.mxu0 %v805
        %887 = vmatprep.subr.bf16.mxu0 0
        %888 = vmatpush1.bf16.msra.mxu0 0
        %889 = vmatprep.subr.bf16.mxu0 0
        %890 = vmatpush1.bf16.msra.mxu0 0
        %891 = vmatprep.subr.bf16.mxu0 0
        %892 = vmatpush1.bf16.msra.mxu0 0
        %893 = vmatprep.subr.bf16.mxu0 0
        %894 = vmatpush1.bf16.msra.mxu0 0
        %895 = vmatprep.subr.bf16.mxu0 0
        %896 = vmatpush1.bf16.msra.mxu0 0
        %897 = vmatprep.subr.bf16.mxu0 0
        %898 = vmatpush1.bf16.msra.mxu0 0
        %899 = vmatprep.subr.bf16.mxu0 0
        %900 = vmatpush1.bf16.msra.mxu0 0
        %901 = vmatprep.subr.bf16.mxu0 0
        %902 = vmatpush1.bf16.msra.mxu0 0
        %903 = vmatprep.subr.bf16.mxu0 0
        %904 = vmatpush1.bf16.msra.mxu0 0
        %905 = vmatprep.mubr.bf16.mxu0 0
        %906 = vmatmul.mubr.bf16.gmra.mrb[0].mxu0 %v792
        %v907 = vpop.f32.mrb[0].mxu0
        %v908 = vadd.f32 %v493, %v907
        %v909 = vpop.f32.mrb[0].mxu0
        %v910 = vadd.f32 %v497, %v909
        %v911 = vpop.f32.mrb[0].mxu0
        %v912 = vadd.f32 %v493, %v911
        %v913 = vpop.f32.mrb[0].mxu0
        %v914 = vadd.f32 %v497, %v913
        %915 = vmatprep.mubr.bf16.mxu0 0
        %916 = vmatmul.mubr.bf16.gmra.mrb[0].mxu0 %v795
        %v917 = vpop.f32.mrb[0].mxu0
        %v918 = vadd.f32 %v493, %v917
        %v919 = vpop.f32.mrb[0].mxu0
        %v920 = vadd.f32 %v497, %v919
        %v921 = vpop.f32.mrb[0].mxu0
        %v922 = vpop.f32.mrb[0].mxu0
        %923 = vdwg.mxu0
        %924 = vmatprep.subr.bf16.mxu0 %v691
        %925 = vmatpush1.bf16.msra.mxu0 %v690
        %926 = vmatprep.subr.bf16.mxu0 %v699
        %927 = vmatpush1.bf16.msra.mxu0 %v698
        %928 = vmatprep.subr.bf16.mxu0 %v707
        %929 = vmatpush1.bf16.msra.mxu0 %v706
        %930 = vmatprep.subr.bf16.mxu0 %v715
        %931 = vmatpush1.bf16.msra.mxu0 %v714
        %932 = vmatprep.subr.bf16.mxu0 %v723
        %933 = vmatpush1.bf16.msra.mxu0 %v722
        %934 = vmatprep.subr.bf16.mxu0 %v731
        %935 = vmatpush1.bf16.msra.mxu0 %v730
        %936 = vmatprep.subr.bf16.mxu0 %v814
        %937 = vmatpush1.bf16.msra.mxu0 %v811
        %938 = vmatprep.subr.bf16.mxu0 0
        %939 = vmatpush1.bf16.msra.mxu0 0
        %940 = vmatprep.subr.bf16.mxu0 0
        %941 = vmatpush1.bf16.msra.mxu0 0
        %942 = vmatprep.subr.bf16.mxu0 0
        %943 = vmatpush1.bf16.msra.mxu0 0
        %944 = vmatprep.subr.bf16.mxu0 0
        %945 = vmatpush1.bf16.msra.mxu0 0
        %946 = vmatprep.subr.bf16.mxu0 0
        %947 = vmatpush1.bf16.msra.mxu0 0
        %948 = vmatprep.subr.bf16.mxu0 0
        %949 = vmatpush1.bf16.msra.mxu0 0
        %950 = vmatprep.subr.bf16.mxu0 0
        %951 = vmatpush1.bf16.msra.mxu0 0
        %952 = vmatprep.subr.bf16.mxu0 0
        %953 = vmatpush1.bf16.msra.mxu0 0
        %954 = vmatprep.subr.bf16.mxu0 0
        %955 = vmatpush1.bf16.msra.mxu0 0
        %956 = vmatprep.mubr.bf16.mxu0 0
        %957 = vmatmul.mubr.bf16.gmra.mrb[0].mxu0 %v792
        %v958 = vpop.f32.mrb[0].mxu0
        %v959 = vadd.f32 %v501, %v958
        %v960 = vpop.f32.mrb[0].mxu0
        %v961 = vadd.f32 %v505, %v960
        %v962 = vpop.f32.mrb[0].mxu0
        %v963 = vadd.f32 %v501, %v962
        %v964 = vpop.f32.mrb[0].mxu0
        %v965 = vadd.f32 %v505, %v964
        %966 = vmatprep.mubr.bf16.mxu0 0
        %967 = vmatmul.mubr.bf16.gmra.mrb[0].mxu0 %v795
        %v968 = vpop.f32.mrb[0].mxu0
        %v969 = vadd.f32 %v501, %v968
        %v970 = vpop.f32.mrb[0].mxu0
        %v971 = vadd.f32 %v505, %v970
        %v972 = vpop.f32.mrb[0].mxu0
        %v973 = vpop.f32.mrb[0].mxu0
        %974 = vdwg.mxu0
        %975 = vmatprep.subr.bf16.mxu0 %v693
        %976 = vmatpush1.bf16.msra.mxu0 %v692
        %977 = vmatprep.subr.bf16.mxu0 %v701
        %978 = vmatpush1.bf16.msra.mxu0 %v700
        %979 = vmatprep.subr.bf16.mxu0 %v709
        %980 = vmatpush1.bf16.msra.mxu0 %v708
        %981 = vmatprep.subr.bf16.mxu0 %v717
        %982 = vmatpush1.bf16.msra.mxu0 %v716
        %983 = vmatprep.subr.bf16.mxu0 %v725
        %984 = vmatpush1.bf16.msra.mxu0 %v724
        %985 = vmatprep.subr.bf16.mxu0 %v733
        %986 = vmatpush1.bf16.msra.mxu0 %v732
        %987 = vmatprep.subr.bf16.mxu0 %v820
        %988 = vmatpush1.bf16.msra.mxu0 %v817
        %989 = vmatprep.subr.bf16.mxu0 0
        %990 = vmatpush1.bf16.msra.mxu0 0
        %991 = vmatprep.subr.bf16.mxu0 0
        %992 = vmatpush1.bf16.msra.mxu0 0
        %993 = vmatprep.subr.bf16.mxu0 0
        %994 = vmatpush1.bf16.msra.mxu0 0
        %995 = vmatprep.subr.bf16.mxu0 0
        %996 = vmatpush1.bf16.msra.mxu0 0
        %997 = vmatprep.subr.bf16.mxu0 0
        %998 = vmatpush1.bf16.msra.mxu0 0
        %999 = vmatprep.subr.bf16.mxu0 0
        %1000 = vmatpush1.bf16.msra.mxu0 0
        %1001 = vmatprep.subr.bf16.mxu0 0
        %1002 = vmatpush1.bf16.msra.mxu0 0
        %1003 = vmatprep.subr.bf16.mxu0 0
        %1004 = vmatpush1.bf16.msra.mxu0 0
        %1005 = vmatprep.subr.bf16.mxu0 0
        %1006 = vmatpush1.bf16.msra.mxu0 0
        %1007 = vmatprep.mubr.bf16.mxu0 0
        %1008 = vmatmul.mubr.bf16.gmra.mrb[0].mxu0 %v792
        %v1009 = vpop.f32.mrb[0].mxu0
        %v1010 = vadd.f32 %v509, %v1009
        %v1011 = vpop.f32.mrb[0].mxu0
        %v1012 = vadd.f32 %v513, %v1011
        %v1013 = vpop.f32.mrb[0].mxu0
        %v1014 = vadd.f32 %v509, %v1013
        %v1015 = vpop.f32.mrb[0].mxu0
        %v1016 = vadd.f32 %v513, %v1015
        %1017 = vmatprep.mubr.bf16.mxu0 0
        %1018 = vmatmul.mubr.bf16.gmra.mrb[0].mxu0 %v795
        %v1019 = vpop.f32.mrb[0].mxu0
        %v1020 = vadd.f32 %v509, %v1019
        %v1021 = vpop.f32.mrb[0].mxu0
        %v1022 = vadd.f32 %v513, %v1021
        %v1023 = vpop.f32.mrb[0].mxu0
        %v1024 = vpop.f32.mrb[0].mxu0
        %1025 = vdwg.mxu0
        %v1026 = vmax.f32 %v857, 0.0
        %v1027 = vmax.f32 %v859, 0.0
        %v1028 = vmax.f32 %v908, 0.0
        %v1029 = vmax.f32 %v910, 0.0
        %v1030 = vmax.f32 %v959, 0.0
        %v1031 = vmax.f32 %v961, 0.0
        %v1032 = vmax.f32 %v1010, 0.0
        %v1033 = vmax.f32 %v1012, 0.0
        %v1034 = vmax.f32 %v861, 0.0
        %v1035 = vmax.f32 %v863, 0.0
        %v1036 = vmax.f32 %v912, 0.0
        %v1037 = vmax.f32 %v914, 0.0
        %v1038 = vmax.f32 %v963, 0.0
        %v1039 = vmax.f32 %v965, 0.0
        %v1040 = vmax.f32 %v1014, 0.0
        %v1041 = vmax.f32 %v1016, 0.0
        %v1042 = vmax.f32 %v867, 0.0
        %v1043 = vmax.f32 %v869, 0.0
        %v1044 = vmax.f32 %v918, 0.0
        %v1045 = vmax.f32 %v920, 0.0
        %v1046 = vmax.f32 %v969, 0.0
        %v1047 = vmax.f32 %v971, 0.0
        %v1048 = vmax.f32 %v1020, 0.0
        %v1049 = vmax.f32 %v1022, 0.0
        %v1050 = vpack.c.bf16 %v1034, %v1026
        %v1051 = vpack.c.bf16 %v1035, %v1027
        %v1052 = vpack.c.bf16 %v1036, %v1028
        %v1053 = vpack.c.bf16 %v1037, %v1029
        %v1054 = vpack.c.bf16 %v1038, %v1030
        %v1055 = vpack.c.bf16 %v1039, %v1031
        %v1056 = vpack.c.bf16 %v1040, %v1032
        %v1057 = vpack.c.bf16 %v1041, %v1033
        %v1058 = vpack.c.bf16 %v1042, %v1042
        %v1059 = vpack.c.bf16 %v1043, %v1043
        %v1060 = vpack.c.bf16 %v1044, %v1044
        %v1061 = vpack.c.bf16 %v1045, %v1045
        %v1062 = vpack.c.bf16 %v1046, %v1046
        %v1063 = vpack.c.bf16 %v1047, %v1047
        %v1064 = vpack.c.bf16 %v1048, %v1048
        %v1065 = vpack.c.bf16 %v1049, %v1049
        %v1066 = vld [vmem:[#allocation8] sm:$0xff]
        %v1067 = vld [vmem:[#allocation8 + $0x8] sm:$0xff]
        %v1068 = vld [vmem:[#allocation8 + $0x10] sm:$0xff]
        %v1069 = vld [vmem:[#allocation8 + $0x18] sm:$0xff]
        %v1070 = vld [vmem:[#allocation8 + $0x20] sm:$0xff]
        %v1071 = vld [vmem:[#allocation8 + $0x28] sm:$0xff]
        %v1072 = vld [vmem:[#allocation8 + $0x30] sm:$0xff]
        %v1073 = vld [vmem:[#allocation8 + $0x38] sm:$0xff]
        %v1074 = vld [vmem:[#allocation8 + $0x40] sm:$0xff]
        %v1075 = vld [vmem:[#allocation8 + $0x48] sm:$0xff]
        %v1076 = vld [vmem:[#allocation8 + $0x50] sm:$0xff]
        %v1077 = vld [vmem:[#allocation8 + $0x58] sm:$0xff]
        %v1078 = vld [vmem:[#allocation8 + $0x60] sm:$0xff]
        %v1079 = vld [vmem:[#allocation8 + $0x68] sm:$0xff]
        %v1080 = vld [vmem:[#allocation8 + $0x70] sm:$0xff]
        %v1081 = vld [vmem:[#allocation8 + $0x78] sm:$0xff]
        %v1082 = vld [vmem:[#allocation8 + $0x80] sm:$0xff]
        %v1083 = vld [vmem:[#allocation8 + $0x88] sm:$0xff]
        %v1084 = vld [vmem:[#allocation8 + $0x90] sm:$0xff]
        %v1085 = vld [vmem:[#allocation8 + $0x98] sm:$0xff]
        %v1086 = vld [vmem:[#allocation8 + $0xa0] sm:$0xff]
        %v1087 = vld [vmem:[#allocation8 + $0xa8] sm:$0xff]
        %v1088 = vld [vmem:[#allocation8 + $0xb0] sm:$0xff]
        %v1089 = vld [vmem:[#allocation8 + $0xb8] sm:$0xff]
        %v1090 = vld [vmem:[#allocation8 + $0xc0] sm:$0xff]
        %v1091 = vld [vmem:[#allocation8 + $0xc8] sm:$0xff]
        %v1092 = vld [vmem:[#allocation8 + $0xd0] sm:$0xff]
        %v1093 = vld [vmem:[#allocation8 + $0xd8] sm:$0xff]
        %v1094 = vld [vmem:[#allocation8 + $0xe0] sm:$0xff]
        %v1095 = vld [vmem:[#allocation8 + $0xe8] sm:$0xff]
        %v1096 = vld [vmem:[#allocation8 + $0xf0] sm:$0xff]
        %v1097 = vld [vmem:[#allocation8 + $0xf8] sm:$0xff]
        %v1098 = vld [vmem:[#allocation8 + $0x100] sm:$0xff]
        %v1099 = vld [vmem:[#allocation8 + $0x108] sm:$0xff]
        %v1100 = vld [vmem:[#allocation8 + $0x110] sm:$0xff]
        %v1101 = vld [vmem:[#allocation8 + $0x118] sm:$0xff]
        %v1102 = vld [vmem:[#allocation8 + $0x120] sm:$0xff]
        %v1103 = vld [vmem:[#allocation8 + $0x128] sm:$0xff]
        %v1104 = vld [vmem:[#allocation8 + $0x130] sm:$0xff]
        %v1105 = vld [vmem:[#allocation8 + $0x138] sm:$0xff]
        %v1106 = vld [vmem:[#allocation8 + $0x140] sm:$0xff]
        %v1107 = vld [vmem:[#allocation8 + $0x148] sm:$0xff]
        %v1108 = vld [vmem:[#allocation8 + $0x150] sm:$0xff]
        %v1109 = vld [vmem:[#allocation8 + $0x158] sm:$0xff]
        %v1110 = vld [vmem:[#allocation8 + $0x160] sm:$0xff]
        %v1111 = vld [vmem:[#allocation8 + $0x168] sm:$0xff]
        %v1112 = vld [vmem:[#allocation8 + $0x170] sm:$0xff]
        %v1113 = vld [vmem:[#allocation8 + $0x178] sm:$0xff]
        %v1114 = vld [vmem:[#allocation8 + $0x180] sm:$0xff]
        %v1115 = vld [vmem:[#allocation8 + $0x188] sm:$0xff]
        %v1116 = vld [vmem:[#allocation8 + $0x190] sm:$0xff]
        %v1117 = vld [vmem:[#allocation8 + $0x198] sm:$0xff]
        %v1118 = vld [vmem:[#allocation8 + $0x1a0] sm:$0xff]
        %v1119 = vld [vmem:[#allocation8 + $0x1a8] sm:$0xff]
        %v1120 = vld [vmem:[#allocation8 + $0x1b0] sm:$0xff]
        %v1121 = vld [vmem:[#allocation8 + $0x1b8] sm:$0xff]
        %v1122 = vld [vmem:[#allocation8 + $0x1c0] sm:$0xff]
        %v1123 = vld [vmem:[#allocation8 + $0x1c8] sm:$0xff]
        %v1124 = vld [vmem:[#allocation8 + $0x1d0] sm:$0xff]
        %v1125 = vld [vmem:[#allocation8 + $0x1d8] sm:$0xff]
        %v1126 = vld [vmem:[#allocation8 + $0x1e0] sm:$0xff]
        %v1127 = vld [vmem:[#allocation8 + $0x1e8] sm:$0xff]
        %v1128 = vld [vmem:[#allocation8 + $0x1f0] sm:$0xff]
        %v1129 = vld [vmem:[#allocation8 + $0x1f8] sm:$0xff]
        %v1130 = vld [vmem:[#allocation8 + $0x200] sm:$0xff]
        %v1131 = vld [vmem:[#allocation8 + $0x208] sm:$0xff]
        %v1132 = vld [vmem:[#allocation8 + $0x210] sm:$0xff]
        %v1133 = vld [vmem:[#allocation8 + $0x218] sm:$0xff]
        %v1134 = vld [vmem:[#allocation8 + $0x220] sm:$0xff]
        %v1135 = vld [vmem:[#allocation8 + $0x228] sm:$0xff]
        %v1136 = vld [vmem:[#allocation8 + $0x230] sm:$0xff]
        %v1137 = vld [vmem:[#allocation8 + $0x238] sm:$0xff]
        %v1138 = vld [vmem:[#allocation8 + $0x240] sm:$0xff]
        %v1139 = vld [vmem:[#allocation8 + $0x248] sm:$0xff]
        %v1140 = vld [vmem:[#allocation8 + $0x250] sm:$0xff]
        %v1141 = vld [vmem:[#allocation8 + $0x258] sm:$0xff]
        %v1142 = vld [vmem:[#allocation8 + $0x260] sm:$0xff]
        %v1143 = vld [vmem:[#allocation8 + $0x268] sm:$0xff]
        %v1144 = vld [vmem:[#allocation8 + $0x270] sm:$0xff]
        %v1145 = vld [vmem:[#allocation8 + $0x278] sm:$0xff]
        %v1146 = vld [vmem:[#allocation8 + $0x280] sm:$0xff]
        %v1147 = vld [vmem:[#allocation8 + $0x288] sm:$0xff]
        %v1148 = vld [vmem:[#allocation8 + $0x290] sm:$0xff]
        %v1149 = vld [vmem:[#allocation8 + $0x298] sm:$0xff]
        %v1150 = vld [vmem:[#allocation8 + $0x2a0] sm:$0xff]
        %v1151 = vld [vmem:[#allocation8 + $0x2a8] sm:$0xff]
        %v1152 = vld [vmem:[#allocation8 + $0x2b0] sm:$0xff]
        %v1153 = vld [vmem:[#allocation8 + $0x2b8] sm:$0xff]
        %v1154 = vld [vmem:[#allocation8 + $0x2c0] sm:$0xff]
        %v1155 = vld [vmem:[#allocation8 + $0x2c8] sm:$0xff]
        %v1156 = vld [vmem:[#allocation8 + $0x2d0] sm:$0xff]
        %v1157 = vld [vmem:[#allocation8 + $0x2d8] sm:$0xff]
        %v1158 = vld [vmem:[#allocation8 + $0x2e0] sm:$0xff]
        %v1159 = vld [vmem:[#allocation8 + $0x2e8] sm:$0xff]
        %v1160 = vld [vmem:[#allocation8 + $0x2f0] sm:$0xff]
        %v1161 = vld [vmem:[#allocation8 + $0x2f8] sm:$0xff]
        %v1162 = vld [vmem:[#allocation8 + $0x300] sm:$0xff]
        %v1163 = vld [vmem:[#allocation8 + $0x308] sm:$0xff]
        %v1164 = vld [vmem:[#allocation8 + $0x310] sm:$0xff]
        %v1165 = vld [vmem:[#allocation8 + $0x318] sm:$0xff]
        %v1166 = vld [vmem:[#allocation8 + $0x320] sm:$0xff]
        %v1167 = vld [vmem:[#allocation8 + $0x328] sm:$0xff]
        %v1168 = vld [vmem:[#allocation8 + $0x330] sm:$0xff]
        %v1169 = vld [vmem:[#allocation8 + $0x338] sm:$0xff]
        %v1170 = vld [vmem:[#allocation8 + $0x340] sm:$0xff]
        %v1171 = vld [vmem:[#allocation8 + $0x348] sm:$0xff]
        %v1172 = vld [vmem:[#allocation8 + $0x350] sm:$0xff]
        %v1173 = vld [vmem:[#allocation8 + $0x358] sm:$0xff]
        %v1174 = vld [vmem:[#allocation8 + $0x360] sm:$0xff]
        %v1175 = vld [vmem:[#allocation8 + $0x368] sm:$0xff]
        %v1176 = vld [vmem:[#allocation8 + $0x370] sm:$0xff]
        %v1177 = vld [vmem:[#allocation8 + $0x378] sm:$0xff]
        %v1178 = vld [vmem:[#allocation8 + $0x380] sm:$0xff]
        %v1179 = vld [vmem:[#allocation8 + $0x388] sm:$0xff]
        %v1180 = vld [vmem:[#allocation8 + $0x390] sm:$0xff]
        %v1181 = vld [vmem:[#allocation8 + $0x398] sm:$0xff]
        %v1182 = vld [vmem:[#allocation8 + $0x3a0] sm:$0xff]
        %v1183 = vld [vmem:[#allocation8 + $0x3a8] sm:$0xff]
        %v1184 = vld [vmem:[#allocation8 + $0x3b0] sm:$0xff]
        %v1185 = vld [vmem:[#allocation8 + $0x3b8] sm:$0xff]
        %v1186 = vld [vmem:[#allocation8 + $0x3c0] sm:$0xff]
        %v1187 = vld [vmem:[#allocation8 + $0x3c8] sm:$0xff]
        %v1188 = vld [vmem:[#allocation8 + $0x3d0] sm:$0xff]
        %v1189 = vld [vmem:[#allocation8 + $0x3d8] sm:$0xff]
        %v1190 = vld [vmem:[#allocation8 + $0x3e0] sm:$0xff]
        %v1191 = vld [vmem:[#allocation8 + $0x3e8] sm:$0xff]
        %v1192 = vld [vmem:[#allocation8 + $0x3f0] sm:$0xff]
        %v1193 = vld [vmem:[#allocation8 + $0x3f8] sm:$0xff]
        %v1194 = vld [vmem:[#allocation8 + $0x400] sm:$0xff]
        %v1195 = vld [vmem:[#allocation8 + $0x408] sm:$0xff]
        %v1196 = vld [vmem:[#allocation8 + $0x410] sm:$0xff]
        %v1197 = vld [vmem:[#allocation8 + $0x418] sm:$0xff]
        %v1198 = vld [vmem:[#allocation8 + $0x420] sm:$0xff]
        %v1199 = vld [vmem:[#allocation8 + $0x428] sm:$0xff]
        %v1200 = vld [vmem:[#allocation8 + $0x430] sm:$0xff]
        %v1201 = vld [vmem:[#allocation8 + $0x438] sm:$0xff]
        %v1202 = vld [vmem:[#allocation8 + $0x440] sm:$0xff]
        %v1203 = vld [vmem:[#allocation8 + $0x448] sm:$0xff]
        %v1204 = vld [vmem:[#allocation8 + $0x450] sm:$0xff]
        %v1205 = vld [vmem:[#allocation8 + $0x458] sm:$0xff]
        %v1206 = vld [vmem:[#allocation8 + $0x460] sm:$0xff]
        %v1207 = vld [vmem:[#allocation8 + $0x468] sm:$0xff]
        %v1208 = vld [vmem:[#allocation8 + $0x470] sm:$0xff]
        %v1209 = vld [vmem:[#allocation8 + $0x478] sm:$0xff]
        %v1210 = vld [vmem:[#allocation8 + $0x480] sm:$0xff]
        %v1211 = vld [vmem:[#allocation8 + $0x488] sm:$0xff]
        %v1212 = vld [vmem:[#allocation8 + $0x490] sm:$0xff]
        %v1213 = vld [vmem:[#allocation8 + $0x498] sm:$0xff]
        %v1214 = vld [vmem:[#allocation8 + $0x4a0] sm:$0xff]
        %v1215 = vld [vmem:[#allocation8 + $0x4a8] sm:$0xff]
        %v1216 = vld [vmem:[#allocation8 + $0x4b0] sm:$0xff]
        %v1217 = vld [vmem:[#allocation8 + $0x4b8] sm:$0xff]
        %v1218 = vld [vmem:[#allocation8 + $0x4c0] sm:$0xff]
        %v1219 = vld [vmem:[#allocation8 + $0x4c8] sm:$0xff]
        %v1220 = vld [vmem:[#allocation8 + $0x4d0] sm:$0xff]
        %v1221 = vld [vmem:[#allocation8 + $0x4d8] sm:$0xff]
        %v1222 = vld [vmem:[#allocation8 + $0x4e0] sm:$0xff]
        %v1223 = vld [vmem:[#allocation8 + $0x4e8] sm:$0xff]
        %v1224 = vld [vmem:[#allocation8 + $0x4f0] sm:$0xff]
        %v1225 = vld [vmem:[#allocation8 + $0x4f8] sm:$0xff]
        %v1226 = vld [vmem:[#allocation8 + $0x500] sm:$0xff]
        %v1227 = vld [vmem:[#allocation8 + $0x508] sm:$0xff]
        %v1228 = vld [vmem:[#allocation8 + $0x510] sm:$0xff]
        %v1229 = vld [vmem:[#allocation8 + $0x518] sm:$0xff]
        %v1230 = vld [vmem:[#allocation8 + $0x520] sm:$0xff]
        %v1231 = vld [vmem:[#allocation8 + $0x528] sm:$0xff]
        %v1232 = vld [vmem:[#allocation8 + $0x530] sm:$0xff]
        %v1233 = vld [vmem:[#allocation8 + $0x538] sm:$0xff]
        %v1234 = vld [vmem:[#allocation8 + $0x540] sm:$0xff]
        %v1235 = vld [vmem:[#allocation8 + $0x548] sm:$0xff]
        %v1236 = vld [vmem:[#allocation8 + $0x550] sm:$0xff]
        %v1237 = vld [vmem:[#allocation8 + $0x558] sm:$0xff]
        %v1238 = vld [vmem:[#allocation8 + $0x560] sm:$0xff]
        %v1239 = vld [vmem:[#allocation8 + $0x568] sm:$0xff]
        %v1240 = vld [vmem:[#allocation8 + $0x570] sm:$0xff]
        %v1241 = vld [vmem:[#allocation8 + $0x578] sm:$0xff]
        %v1242 = vld [vmem:[#allocation8 + $0x580] sm:$0xff]
        %v1243 = vld [vmem:[#allocation8 + $0x588] sm:$0xff]
        %v1244 = vld [vmem:[#allocation8 + $0x590] sm:$0xff]
        %v1245 = vld [vmem:[#allocation8 + $0x598] sm:$0xff]
        %v1246 = vld [vmem:[#allocation8 + $0x5a0] sm:$0xff]
        %v1247 = vld [vmem:[#allocation8 + $0x5a8] sm:$0xff]
        %v1248 = vld [vmem:[#allocation8 + $0x5b0] sm:$0xff]
        %v1249 = vld [vmem:[#allocation8 + $0x5b8] sm:$0xff]
        %v1250 = vld [vmem:[#allocation8 + $0x5c0] sm:$0xff]
        %v1251 = vld [vmem:[#allocation8 + $0x5c8] sm:$0xff]
        %v1252 = vld [vmem:[#allocation8 + $0x5d0] sm:$0xff]
        %v1253 = vld [vmem:[#allocation8 + $0x5d8] sm:$0xff]
        %v1254 = vld [vmem:[#allocation8 + $0x5e0] sm:$0xff]
        %v1255 = vld [vmem:[#allocation8 + $0x5e8] sm:$0xff]
        %v1256 = vld [vmem:[#allocation8 + $0x5f0] sm:$0xff]
        %v1257 = vld [vmem:[#allocation8 + $0x5f8] sm:$0xff]
        %v1258 = vld [vmem:[#allocation8 + $0x600] sm:$0xff]
        %v1259 = vld [vmem:[#allocation8 + $0x608] sm:$0xff]
        %v1260 = vld [vmem:[#allocation8 + $0x610] sm:$0xff]
        %v1261 = vld [vmem:[#allocation8 + $0x618] sm:$0xff]
        %v1262 = vld [vmem:[#allocation8 + $0x620] sm:$0xff]
        %v1263 = vld [vmem:[#allocation8 + $0x628] sm:$0xff]
        %v1264 = vld [vmem:[#allocation8 + $0x630] sm:$0xff]
        %v1265 = vld [vmem:[#allocation8 + $0x638] sm:$0xff]
        %v1266 = vld [vmem:[#allocation8 + $0x640] sm:$0xff]
        %v1267 = vld [vmem:[#allocation8 + $0x648] sm:$0xff]
        %v1268 = vld [vmem:[#allocation8 + $0x650] sm:$0xff]
        %v1269 = vld [vmem:[#allocation8 + $0x658] sm:$0xff]
        %v1270 = vld [vmem:[#allocation8 + $0x660] sm:$0xff]
        %v1271 = vld [vmem:[#allocation8 + $0x668] sm:$0xff]
        %v1272 = vld [vmem:[#allocation8 + $0x670] sm:$0xff]
        %v1273 = vld [vmem:[#allocation8 + $0x678] sm:$0xff]
        %v1274 = vld [vmem:[#allocation8 + $0x680] sm:$0xff]
        %v1275 = vld [vmem:[#allocation8 + $0x688] sm:$0xff]
        %v1276 = vld [vmem:[#allocation8 + $0x690] sm:$0xff]
        %v1277 = vld [vmem:[#allocation8 + $0x698] sm:$0xff]
        %v1278 = vld [vmem:[#allocation8 + $0x6a0] sm:$0xff]
        %v1279 = vld [vmem:[#allocation8 + $0x6a8] sm:$0xff]
        %v1280 = vld [vmem:[#allocation8 + $0x6b0] sm:$0xff]
        %v1281 = vld [vmem:[#allocation8 + $0x6b8] sm:$0xff]
        %v1282 = vld [vmem:[#allocation8 + $0x6c0] sm:$0xff]
        %v1283 = vld [vmem:[#allocation8 + $0x6c8] sm:$0xff]
        %v1284 = vld [vmem:[#allocation8 + $0x6d0] sm:$0xff]
        %v1285 = vld [vmem:[#allocation8 + $0x6d8] sm:$0xff]
        %v1286 = vld [vmem:[#allocation8 + $0x6e0] sm:$0xff]
        %v1287 = vld [vmem:[#allocation8 + $0x6e8] sm:$0xff]
        %v1288 = vld [vmem:[#allocation8 + $0x6f0] sm:$0xff]
        %v1289 = vld [vmem:[#allocation8 + $0x6f8] sm:$0xff]
        %v1290 = vld [vmem:[#allocation8 + $0x700] sm:$0xff]
        %v1291 = vld [vmem:[#allocation8 + $0x708] sm:$0xff]
        %v1292 = vld [vmem:[#allocation8 + $0x710] sm:$0xff]
        %v1293 = vld [vmem:[#allocation8 + $0x718] sm:$0xff]
        %v1294 = vld [vmem:[#allocation8 + $0x720] sm:$0xff]
        %v1295 = vld [vmem:[#allocation8 + $0x728] sm:$0xff]
        %v1296 = vld [vmem:[#allocation8 + $0x730] sm:$0xff]
        %v1297 = vld [vmem:[#allocation8 + $0x738] sm:$0xff]
        %v1298 = vld [vmem:[#allocation8 + $0x740] sm:$0xff]
        %v1299 = vld [vmem:[#allocation8 + $0x748] sm:$0xff]
        %v1300 = vld [vmem:[#allocation8 + $0x750] sm:$0xff]
        %v1301 = vld [vmem:[#allocation8 + $0x758] sm:$0xff]
        %v1302 = vld [vmem:[#allocation8 + $0x760] sm:$0xff]
        %v1303 = vld [vmem:[#allocation8 + $0x768] sm:$0xff]
        %v1304 = vld [vmem:[#allocation8 + $0x770] sm:$0xff]
        %v1305 = vld [vmem:[#allocation8 + $0x778] sm:$0xff]
        %v1306 = vld [vmem:[#allocation8 + $0x780] sm:$0xff]
        %v1307 = vld [vmem:[#allocation8 + $0x788] sm:$0xff]
        %v1308 = vld [vmem:[#allocation8 + $0x790] sm:$0xff]
        %v1309 = vld [vmem:[#allocation8 + $0x798] sm:$0xff]
        %v1310 = vld [vmem:[#allocation8 + $0x7a0] sm:$0xff]
        %v1311 = vld [vmem:[#allocation8 + $0x7a8] sm:$0xff]
        %v1312 = vld [vmem:[#allocation8 + $0x7b0] sm:$0xff]
        %v1313 = vld [vmem:[#allocation8 + $0x7b8] sm:$0xff]
        %v1314 = vld [vmem:[#allocation8 + $0x7c0] sm:$0xff]
        %v1315 = vld [vmem:[#allocation8 + $0x7c8] sm:$0xff]
        %v1316 = vld [vmem:[#allocation8 + $0x7d0] sm:$0xff]
        %v1317 = vld [vmem:[#allocation8 + $0x7d8] sm:$0xff]
        %v1318 = vld [vmem:[#allocation8 + $0x7e0] sm:$0xff]
        %v1319 = vld [vmem:[#allocation8 + $0x7e8] sm:$0xff]
        %v1320 = vld [vmem:[#allocation8 + $0x7f0] sm:$0xff]
        %v1321 = vld [vmem:[#allocation8 + $0x7f8] sm:$0xff]
        %v1322 = vld [vmem:[%s4] sm:$0xf]
        %v1324 = vlaneseq
        %v1325 = vshrl.u32 %v1324, 7
        %v1326 = vsub.s32 0, %v1325
        %v1327 = vrot.slane %v1322, %v1326
        %v1328 = vlaneseq
        %v1329 = vshrl.u32 %v1328, 7
        %v1330 = vsub.s32 1, %v1329
        %v1331 = vrot.slane %v1322, %v1330
        %v1332 = vlaneseq
        %v1333 = vshrl.u32 %v1332, 7
        %v1334 = vsub.s32 2, %v1333
        %v1335 = vrot.slane %v1322, %v1334
        %v1336 = vlaneseq
        %v1337 = vshrl.u32 %v1336, 7
        %v1338 = vsub.s32 3, %v1337
        %v1339 = vrot.slane %v1322, %v1338
        %v1600 = vunpack.c.l.b16 %v1066
        %v1601 = vunpack.c.h.b16 %v1066
        %v1602 = vunpack.c.l.b16 %v1067
        %v1603 = vunpack.c.h.b16 %v1067
        %v1604 = vunpack.c.l.b16 %v1068
        %v1605 = vunpack.c.h.b16 %v1068
        %v1606 = vunpack.c.l.b16 %v1069
        %v1607 = vunpack.c.h.b16 %v1069
        %v1608 = vunpack.c.l.b16 %v1070
        %v1609 = vunpack.c.h.b16 %v1070
        %v1610 = vunpack.c.l.b16 %v1071
        %v1611 = vunpack.c.h.b16 %v1071
        %v1612 = vunpack.c.l.b16 %v1072
        %v1613 = vunpack.c.h.b16 %v1072
        %v1614 = vunpack.c.l.b16 %v1073
        %v1615 = vunpack.c.h.b16 %v1073
        %v1616 = vunpack.c.l.b16 %v1074
        %v1617 = vunpack.c.h.b16 %v1074
        %v1618 = vunpack.c.l.b16 %v1075
        %v1619 = vunpack.c.h.b16 %v1075
        %v1620 = vunpack.c.l.b16 %v1076
        %v1621 = vunpack.c.h.b16 %v1076
        %v1622 = vunpack.c.l.b16 %v1077
        %v1623 = vunpack.c.h.b16 %v1077
        %v1624 = vunpack.c.l.b16 %v1078
        %v1625 = vunpack.c.h.b16 %v1078
        %v1626 = vunpack.c.l.b16 %v1079
        %v1627 = vunpack.c.h.b16 %v1079
        %v1628 = vunpack.c.l.b16 %v1080
        %v1629 = vunpack.c.h.b16 %v1080
        %v1630 = vunpack.c.l.b16 %v1081
        %v1631 = vunpack.c.h.b16 %v1081
        %v1632 = vunpack.c.l.b16 %v1082
        %v1633 = vunpack.c.h.b16 %v1082
        %v1634 = vunpack.c.l.b16 %v1083
        %v1635 = vunpack.c.h.b16 %v1083
        %v1636 = vunpack.c.l.b16 %v1084
        %v1637 = vunpack.c.h.b16 %v1084
        %v1638 = vunpack.c.l.b16 %v1085
        %v1639 = vunpack.c.h.b16 %v1085
        %v1640 = vunpack.c.l.b16 %v1086
        %v1641 = vunpack.c.h.b16 %v1086
        %v1642 = vunpack.c.l.b16 %v1087
        %v1643 = vunpack.c.h.b16 %v1087
        %v1644 = vunpack.c.l.b16 %v1088
        %v1645 = vunpack.c.h.b16 %v1088
        %v1646 = vunpack.c.l.b16 %v1089
        %v1647 = vunpack.c.h.b16 %v1089
        %v1648 = vunpack.c.l.b16 %v1090
        %v1649 = vunpack.c.h.b16 %v1090
        %v1650 = vunpack.c.l.b16 %v1091
        %v1651 = vunpack.c.h.b16 %v1091
        %v1652 = vunpack.c.l.b16 %v1092
        %v1653 = vunpack.c.h.b16 %v1092
        %v1654 = vunpack.c.l.b16 %v1093
        %v1655 = vunpack.c.h.b16 %v1093
        %v1656 = vunpack.c.l.b16 %v1094
        %v1657 = vunpack.c.h.b16 %v1094
        %v1658 = vunpack.c.l.b16 %v1095
        %v1659 = vunpack.c.h.b16 %v1095
        %v1660 = vunpack.c.l.b16 %v1096
        %v1661 = vunpack.c.h.b16 %v1096
        %v1662 = vunpack.c.l.b16 %v1097
        %v1663 = vunpack.c.h.b16 %v1097
        %v1664 = vunpack.c.l.b16 %v1098
        %v1665 = vunpack.c.h.b16 %v1098
        %v1666 = vunpack.c.l.b16 %v1099
        %v1667 = vunpack.c.h.b16 %v1099
        %v1668 = vunpack.c.l.b16 %v1100
        %v1669 = vunpack.c.h.b16 %v1100
        %v1670 = vunpack.c.l.b16 %v1101
        %v1671 = vunpack.c.h.b16 %v1101
        %v1672 = vunpack.c.l.b16 %v1102
        %v1673 = vunpack.c.h.b16 %v1102
        %v1674 = vunpack.c.l.b16 %v1103
        %v1675 = vunpack.c.h.b16 %v1103
        %v1676 = vunpack.c.l.b16 %v1104
        %v1677 = vunpack.c.h.b16 %v1104
        %v1678 = vunpack.c.l.b16 %v1105
        %v1679 = vunpack.c.h.b16 %v1105
        %v1680 = vunpack.c.l.b16 %v1106
        %v1681 = vunpack.c.h.b16 %v1106
        %v1682 = vunpack.c.l.b16 %v1107
        %v1683 = vunpack.c.h.b16 %v1107
        %v1684 = vunpack.c.l.b16 %v1108
        %v1685 = vunpack.c.h.b16 %v1108
        %v1686 = vunpack.c.l.b16 %v1109
        %v1687 = vunpack.c.h.b16 %v1109
        %v1688 = vunpack.c.l.b16 %v1110
        %v1689 = vunpack.c.h.b16 %v1110
        %v1690 = vunpack.c.l.b16 %v1111
        %v1691 = vunpack.c.h.b16 %v1111
        %v1692 = vunpack.c.l.b16 %v1112
        %v1693 = vunpack.c.h.b16 %v1112
        %v1694 = vunpack.c.l.b16 %v1113
        %v1695 = vunpack.c.h.b16 %v1113
        %v1696 = vunpack.c.l.b16 %v1114
        %v1697 = vunpack.c.h.b16 %v1114
        %v1698 = vunpack.c.l.b16 %v1115
        %v1699 = vunpack.c.h.b16 %v1115
        %v1700 = vunpack.c.l.b16 %v1116
        %v1701 = vunpack.c.h.b16 %v1116
        %v1702 = vunpack.c.l.b16 %v1117
        %v1703 = vunpack.c.h.b16 %v1117
        %v1704 = vunpack.c.l.b16 %v1118
        %v1705 = vunpack.c.h.b16 %v1118
        %v1706 = vunpack.c.l.b16 %v1119
        %v1707 = vunpack.c.h.b16 %v1119
        %v1708 = vunpack.c.l.b16 %v1120
        %v1709 = vunpack.c.h.b16 %v1120
        %v1710 = vunpack.c.l.b16 %v1121
        %v1711 = vunpack.c.h.b16 %v1121
        %v1712 = vunpack.c.l.b16 %v1122
        %v1713 = vunpack.c.h.b16 %v1122
        %v1714 = vunpack.c.l.b16 %v1123
        %v1715 = vunpack.c.h.b16 %v1123
        %v1716 = vunpack.c.l.b16 %v1124
        %v1717 = vunpack.c.h.b16 %v1124
        %v1718 = vunpack.c.l.b16 %v1125
        %v1719 = vunpack.c.h.b16 %v1125
        %v1720 = vunpack.c.l.b16 %v1126
        %v1721 = vunpack.c.h.b16 %v1126
        %v1722 = vunpack.c.l.b16 %v1127
        %v1723 = vunpack.c.h.b16 %v1127
        %v1724 = vunpack.c.l.b16 %v1128
        %v1725 = vunpack.c.h.b16 %v1128
        %v1726 = vunpack.c.l.b16 %v1129
        %v1727 = vunpack.c.h.b16 %v1129
        %v1728 = vunpack.c.l.b16 %v1130
        %v1729 = vunpack.c.h.b16 %v1130
        %v1730 = vunpack.c.l.b16 %v1131
        %v1731 = vunpack.c.h.b16 %v1131
        %v1732 = vunpack.c.l.b16 %v1132
        %v1733 = vunpack.c.h.b16 %v1132
        %v1734 = vunpack.c.l.b16 %v1133
        %v1735 = vunpack.c.h.b16 %v1133
        %v1736 = vunpack.c.l.b16 %v1134
        %v1737 = vunpack.c.h.b16 %v1134
        %v1738 = vunpack.c.l.b16 %v1135
        %v1739 = vunpack.c.h.b16 %v1135
        %v1740 = vunpack.c.l.b16 %v1136
        %v1741 = vunpack.c.h.b16 %v1136
        %v1742 = vunpack.c.l.b16 %v1137
        %v1743 = vunpack.c.h.b16 %v1137
        %v1744 = vunpack.c.l.b16 %v1138
        %v1745 = vunpack.c.h.b16 %v1138
        %v1746 = vunpack.c.l.b16 %v1139
        %v1747 = vunpack.c.h.b16 %v1139
        %v1748 = vunpack.c.l.b16 %v1140
        %v1749 = vunpack.c.h.b16 %v1140
        %v1750 = vunpack.c.l.b16 %v1141
        %v1751 = vunpack.c.h.b16 %v1141
        %v1752 = vunpack.c.l.b16 %v1142
        %v1753 = vunpack.c.h.b16 %v1142
        %v1754 = vunpack.c.l.b16 %v1143
        %v1755 = vunpack.c.h.b16 %v1143
        %v1756 = vunpack.c.l.b16 %v1144
        %v1757 = vunpack.c.h.b16 %v1144
        %v1758 = vunpack.c.l.b16 %v1145
        %v1759 = vunpack.c.h.b16 %v1145
        %v1760 = vunpack.c.l.b16 %v1146
        %v1761 = vunpack.c.h.b16 %v1146
        %v1762 = vunpack.c.l.b16 %v1147
        %v1763 = vunpack.c.h.b16 %v1147
        %v1764 = vunpack.c.l.b16 %v1148
        %v1765 = vunpack.c.h.b16 %v1148
        %v1766 = vunpack.c.l.b16 %v1149
        %v1767 = vunpack.c.h.b16 %v1149
        %v1768 = vunpack.c.l.b16 %v1150
        %v1769 = vunpack.c.h.b16 %v1150
        %v1770 = vunpack.c.l.b16 %v1151
        %v1771 = vunpack.c.h.b16 %v1151
        %v1772 = vunpack.c.l.b16 %v1152
        %v1773 = vunpack.c.h.b16 %v1152
        %v1774 = vunpack.c.l.b16 %v1153
        %v1775 = vunpack.c.h.b16 %v1153
        %v1776 = vunpack.c.l.b16 %v1154
        %v1777 = vunpack.c.h.b16 %v1154
        %v1778 = vunpack.c.l.b16 %v1155
        %v1779 = vunpack.c.h.b16 %v1155
        %v1780 = vunpack.c.l.b16 %v1156
        %v1781 = vunpack.c.h.b16 %v1156
        %v1782 = vunpack.c.l.b16 %v1157
        %v1783 = vunpack.c.h.b16 %v1157
        %v1784 = vunpack.c.l.b16 %v1158
        %v1785 = vunpack.c.h.b16 %v1158
        %v1786 = vunpack.c.l.b16 %v1159
        %v1787 = vunpack.c.h.b16 %v1159
        %v1788 = vunpack.c.l.b16 %v1160
        %v1789 = vunpack.c.h.b16 %v1160
        %v1790 = vunpack.c.l.b16 %v1161
        %v1791 = vunpack.c.h.b16 %v1161
        %v1792 = vunpack.c.l.b16 %v1162
        %v1793 = vunpack.c.h.b16 %v1162
        %v1794 = vunpack.c.l.b16 %v1163
        %v1795 = vunpack.c.h.b16 %v1163
        %v1796 = vunpack.c.l.b16 %v1164
        %v1797 = vunpack.c.h.b16 %v1164
        %v1798 = vunpack.c.l.b16 %v1165
        %v1799 = vunpack.c.h.b16 %v1165
        %v1800 = vunpack.c.l.b16 %v1166
        %v1801 = vunpack.c.h.b16 %v1166
        %v1802 = vunpack.c.l.b16 %v1167
        %v1803 = vunpack.c.h.b16 %v1167
        %v1804 = vunpack.c.l.b16 %v1168
        %v1805 = vunpack.c.h.b16 %v1168
        %v1806 = vunpack.c.l.b16 %v1169
        %v1807 = vunpack.c.h.b16 %v1169
        %v1808 = vunpack.c.l.b16 %v1170
        %v1809 = vunpack.c.h.b16 %v1170
        %v1810 = vunpack.c.l.b16 %v1171
        %v1811 = vunpack.c.h.b16 %v1171
        %v1812 = vunpack.c.l.b16 %v1172
        %v1813 = vunpack.c.h.b16 %v1172
        %v1814 = vunpack.c.l.b16 %v1173
        %v1815 = vunpack.c.h.b16 %v1173
        %v1816 = vunpack.c.l.b16 %v1174
        %v1817 = vunpack.c.h.b16 %v1174
        %v1818 = vunpack.c.l.b16 %v1175
        %v1819 = vunpack.c.h.b16 %v1175
        %v1820 = vunpack.c.l.b16 %v1176
        %v1821 = vunpack.c.h.b16 %v1176
        %v1822 = vunpack.c.l.b16 %v1177
        %v1823 = vunpack.c.h.b16 %v1177
        %v1824 = vunpack.c.l.b16 %v1178
        %v1825 = vunpack.c.h.b16 %v1178
        %v1826 = vunpack.c.l.b16 %v1179
        %v1827 = vunpack.c.h.b16 %v1179
        %v1828 = vunpack.c.l.b16 %v1180
        %v1829 = vunpack.c.h.b16 %v1180
        %v1830 = vunpack.c.l.b16 %v1181
        %v1831 = vunpack.c.h.b16 %v1181
        %v1832 = vunpack.c.l.b16 %v1182
        %v1833 = vunpack.c.h.b16 %v1182
        %v1834 = vunpack.c.l.b16 %v1183
        %v1835 = vunpack.c.h.b16 %v1183
        %v1836 = vunpack.c.l.b16 %v1184
        %v1837 = vunpack.c.h.b16 %v1184
        %v1838 = vunpack.c.l.b16 %v1185
        %v1839 = vunpack.c.h.b16 %v1185
        %v1840 = vunpack.c.l.b16 %v1186
        %v1841 = vunpack.c.h.b16 %v1186
        %v1842 = vunpack.c.l.b16 %v1187
        %v1843 = vunpack.c.h.b16 %v1187
        %v1844 = vunpack.c.l.b16 %v1188
        %v1845 = vunpack.c.h.b16 %v1188
        %v1846 = vunpack.c.l.b16 %v1189
        %v1847 = vunpack.c.h.b16 %v1189
        %v1848 = vunpack.c.l.b16 %v1190
        %v1849 = vunpack.c.h.b16 %v1190
        %v1850 = vunpack.c.l.b16 %v1191
        %v1851 = vunpack.c.h.b16 %v1191
        %v1852 = vunpack.c.l.b16 %v1192
        %v1853 = vunpack.c.h.b16 %v1192
        %v1854 = vunpack.c.l.b16 %v1193
        %v1855 = vunpack.c.h.b16 %v1193
        %v1856 = vunpack.c.l.b16 %v1194
        %v1857 = vunpack.c.h.b16 %v1194
        %v1858 = vunpack.c.l.b16 %v1195
        %v1859 = vunpack.c.h.b16 %v1195
        %v1860 = vunpack.c.l.b16 %v1196
        %v1861 = vunpack.c.h.b16 %v1196
        %v1862 = vunpack.c.l.b16 %v1197
        %v1863 = vunpack.c.h.b16 %v1197
        %v1864 = vunpack.c.l.b16 %v1198
        %v1865 = vunpack.c.h.b16 %v1198
        %v1866 = vunpack.c.l.b16 %v1199
        %v1867 = vunpack.c.h.b16 %v1199
        %v1868 = vunpack.c.l.b16 %v1200
        %v1869 = vunpack.c.h.b16 %v1200
        %v1870 = vunpack.c.l.b16 %v1201
        %v1871 = vunpack.c.h.b16 %v1201
        %v1872 = vunpack.c.l.b16 %v1202
        %v1873 = vunpack.c.h.b16 %v1202
        %v1874 = vunpack.c.l.b16 %v1203
        %v1875 = vunpack.c.h.b16 %v1203
        %v1876 = vunpack.c.l.b16 %v1204
        %v1877 = vunpack.c.h.b16 %v1204
        %v1878 = vunpack.c.l.b16 %v1205
        %v1879 = vunpack.c.h.b16 %v1205
        %v1880 = vunpack.c.l.b16 %v1206
        %v1881 = vunpack.c.h.b16 %v1206
        %v1882 = vunpack.c.l.b16 %v1207
        %v1883 = vunpack.c.h.b16 %v1207
        %v1884 = vunpack.c.l.b16 %v1208
        %v1885 = vunpack.c.h.b16 %v1208
        %v1886 = vunpack.c.l.b16 %v1209
        %v1887 = vunpack.c.h.b16 %v1209
        %v1888 = vunpack.c.l.b16 %v1210
        %v1889 = vunpack.c.h.b16 %v1210
        %v1890 = vunpack.c.l.b16 %v1211
        %v1891 = vunpack.c.h.b16 %v1211
        %v1892 = vunpack.c.l.b16 %v1212
        %v1893 = vunpack.c.h.b16 %v1212
        %v1894 = vunpack.c.l.b16 %v1213
        %v1895 = vunpack.c.h.b16 %v1213
        %v1896 = vunpack.c.l.b16 %v1214
        %v1897 = vunpack.c.h.b16 %v1214
        %v1898 = vunpack.c.l.b16 %v1215
        %v1899 = vunpack.c.h.b16 %v1215
        %v1900 = vunpack.c.l.b16 %v1216
        %v1901 = vunpack.c.h.b16 %v1216
        %v1902 = vunpack.c.l.b16 %v1217
        %v1903 = vunpack.c.h.b16 %v1217
        %v1904 = vunpack.c.l.b16 %v1218
        %v1905 = vunpack.c.h.b16 %v1218
        %v1906 = vunpack.c.l.b16 %v1219
        %v1907 = vunpack.c.h.b16 %v1219
        %v1908 = vunpack.c.l.b16 %v1220
        %v1909 = vunpack.c.h.b16 %v1220
        %v1910 = vunpack.c.l.b16 %v1221
        %v1911 = vunpack.c.h.b16 %v1221
        %v1912 = vunpack.c.l.b16 %v1222
        %v1913 = vunpack.c.h.b16 %v1222
        %v1914 = vunpack.c.l.b16 %v1223
        %v1915 = vunpack.c.h.b16 %v1223
        %v1916 = vunpack.c.l.b16 %v1224
        %v1917 = vunpack.c.h.b16 %v1224
        %v1918 = vunpack.c.l.b16 %v1225
        %v1919 = vunpack.c.h.b16 %v1225
        %v1920 = vunpack.c.l.b16 %v1226
        %v1921 = vunpack.c.h.b16 %v1226
        %v1922 = vunpack.c.l.b16 %v1227
        %v1923 = vunpack.c.h.b16 %v1227
        %v1924 = vunpack.c.l.b16 %v1228
        %v1925 = vunpack.c.h.b16 %v1228
        %v1926 = vunpack.c.l.b16 %v1229
        %v1927 = vunpack.c.h.b16 %v1229
        %v1928 = vunpack.c.l.b16 %v1230
        %v1929 = vunpack.c.h.b16 %v1230
        %v1930 = vunpack.c.l.b16 %v1231
        %v1931 = vunpack.c.h.b16 %v1231
        %v1932 = vunpack.c.l.b16 %v1232
        %v1933 = vunpack.c.h.b16 %v1232
        %v1934 = vunpack.c.l.b16 %v1233
        %v1935 = vunpack.c.h.b16 %v1233
        %v1936 = vunpack.c.l.b16 %v1234
        %v1937 = vunpack.c.h.b16 %v1234
        %v1938 = vunpack.c.l.b16 %v1235
        %v1939 = vunpack.c.h.b16 %v1235
        %v1940 = vunpack.c.l.b16 %v1236
        %v1941 = vunpack.c.h.b16 %v1236
        %v1942 = vunpack.c.l.b16 %v1237
        %v1943 = vunpack.c.h.b16 %v1237
        %v1944 = vunpack.c.l.b16 %v1238
        %v1945 = vunpack.c.h.b16 %v1238
        %v1946 = vunpack.c.l.b16 %v1239
        %v1947 = vunpack.c.h.b16 %v1239
        %v1948 = vunpack.c.l.b16 %v1240
        %v1949 = vunpack.c.h.b16 %v1240
        %v1950 = vunpack.c.l.b16 %v1241
        %v1951 = vunpack.c.h.b16 %v1241
        %v1952 = vunpack.c.l.b16 %v1242
        %v1953 = vunpack.c.h.b16 %v1242
        %v1954 = vunpack.c.l.b16 %v1243
        %v1955 = vunpack.c.h.b16 %v1243
        %v1956 = vunpack.c.l.b16 %v1244
        %v1957 = vunpack.c.h.b16 %v1244
        %v1958 = vunpack.c.l.b16 %v1245
        %v1959 = vunpack.c.h.b16 %v1245
        %v1960 = vunpack.c.l.b16 %v1246
        %v1961 = vunpack.c.h.b16 %v1246
        %v1962 = vunpack.c.l.b16 %v1247
        %v1963 = vunpack.c.h.b16 %v1247
        %v1964 = vunpack.c.l.b16 %v1248
        %v1965 = vunpack.c.h.b16 %v1248
        %v1966 = vunpack.c.l.b16 %v1249
        %v1967 = vunpack.c.h.b16 %v1249
        %v1968 = vunpack.c.l.b16 %v1250
        %v1969 = vunpack.c.h.b16 %v1250
        %v1970 = vunpack.c.l.b16 %v1251
        %v1971 = vunpack.c.h.b16 %v1251
        %v1972 = vunpack.c.l.b16 %v1252
        %v1973 = vunpack.c.h.b16 %v1252
        %v1974 = vunpack.c.l.b16 %v1253
        %v1975 = vunpack.c.h.b16 %v1253
        %v1976 = vunpack.c.l.b16 %v1254
        %v1977 = vunpack.c.h.b16 %v1254
        %v1978 = vunpack.c.l.b16 %v1255
        %v1979 = vunpack.c.h.b16 %v1255
        %v1980 = vunpack.c.l.b16 %v1256
        %v1981 = vunpack.c.h.b16 %v1256
        %v1982 = vunpack.c.l.b16 %v1257
        %v1983 = vunpack.c.h.b16 %v1257
        %v1984 = vunpack.c.l.b16 %v1258
        %v1985 = vunpack.c.h.b16 %v1258
        %v1986 = vunpack.c.l.b16 %v1259
        %v1987 = vunpack.c.h.b16 %v1259
        %v1988 = vunpack.c.l.b16 %v1260
        %v1989 = vunpack.c.h.b16 %v1260
        %v1990 = vunpack.c.l.b16 %v1261
        %v1991 = vunpack.c.h.b16 %v1261
        %v1992 = vunpack.c.l.b16 %v1262
        %v1993 = vunpack.c.h.b16 %v1262
        %v1994 = vunpack.c.l.b16 %v1263
        %v1995 = vunpack.c.h.b16 %v1263
        %v1996 = vunpack.c.l.b16 %v1264
        %v1997 = vunpack.c.h.b16 %v1264
        %v1998 = vunpack.c.l.b16 %v1265
        %v1999 = vunpack.c.h.b16 %v1265
        %v2000 = vunpack.c.l.b16 %v1266
        %v2001 = vunpack.c.h.b16 %v1266
        %v2002 = vunpack.c.l.b16 %v1267
        %v2003 = vunpack.c.h.b16 %v1267
        %v2004 = vunpack.c.l.b16 %v1268
        %v2005 = vunpack.c.h.b16 %v1268
        %v2006 = vunpack.c.l.b16 %v1269
        %v2007 = vunpack.c.h.b16 %v1269
        %v2008 = vunpack.c.l.b16 %v1270
        %v2009 = vunpack.c.h.b16 %v1270
        %v2010 = vunpack.c.l.b16 %v1271
        %v2011 = vunpack.c.h.b16 %v1271
        %v2012 = vunpack.c.l.b16 %v1272
        %v2013 = vunpack.c.h.b16 %v1272
        %v2014 = vunpack.c.l.b16 %v1273
        %v2015 = vunpack.c.h.b16 %v1273
        %v2016 = vunpack.c.l.b16 %v1274
        %v2017 = vunpack.c.h.b16 %v1274
        %v2018 = vunpack.c.l.b16 %v1275
        %v2019 = vunpack.c.h.b16 %v1275
        %v2020 = vunpack.c.l.b16 %v1276
        %v2021 = vunpack.c.h.b16 %v1276
        %v2022 = vunpack.c.l.b16 %v1277
        %v2023 = vunpack.c.h.b16 %v1277
        %v2024 = vunpack.c.l.b16 %v1278
        %v2025 = vunpack.c.h.b16 %v1278
        %v2026 = vunpack.c.l.b16 %v1279
        %v2027 = vunpack.c.h.b16 %v1279
        %v2028 = vunpack.c.l.b16 %v1280
        %v2029 = vunpack.c.h.b16 %v1280
        %v2030 = vunpack.c.l.b16 %v1281
        %v2031 = vunpack.c.h.b16 %v1281
        %v2032 = vunpack.c.l.b16 %v1282
        %v2033 = vunpack.c.h.b16 %v1282
        %v2034 = vunpack.c.l.b16 %v1283
        %v2035 = vunpack.c.h.b16 %v1283
        %v2036 = vunpack.c.l.b16 %v1284
        %v2037 = vunpack.c.h.b16 %v1284
        %v2038 = vunpack.c.l.b16 %v1285
        %v2039 = vunpack.c.h.b16 %v1285
        %v2040 = vunpack.c.l.b16 %v1286
        %v2041 = vunpack.c.h.b16 %v1286
        %v2042 = vunpack.c.l.b16 %v1287
        %v2043 = vunpack.c.h.b16 %v1287
        %v2044 = vunpack.c.l.b16 %v1288
        %v2045 = vunpack.c.h.b16 %v1288
        %v2046 = vunpack.c.l.b16 %v1289
        %v2047 = vunpack.c.h.b16 %v1289
        %v2048 = vunpack.c.l.b16 %v1290
        %v2049 = vunpack.c.h.b16 %v1290
        %v2050 = vunpack.c.l.b16 %v1291
        %v2051 = vunpack.c.h.b16 %v1291
        %v2052 = vunpack.c.l.b16 %v1292
        %v2053 = vunpack.c.h.b16 %v1292
        %v2054 = vunpack.c.l.b16 %v1293
        %v2055 = vunpack.c.h.b16 %v1293
        %v2056 = vunpack.c.l.b16 %v1294
        %v2057 = vunpack.c.h.b16 %v1294
        %v2058 = vunpack.c.l.b16 %v1295
        %v2059 = vunpack.c.h.b16 %v1295
        %v2060 = vunpack.c.l.b16 %v1296
        %v2061 = vunpack.c.h.b16 %v1296
        %v2062 = vunpack.c.l.b16 %v1297
        %v2063 = vunpack.c.h.b16 %v1297
        %v2064 = vunpack.c.l.b16 %v1298
        %v2065 = vunpack.c.h.b16 %v1298
        %v2066 = vunpack.c.l.b16 %v1299
        %v2067 = vunpack.c.h.b16 %v1299
        %v2068 = vunpack.c.l.b16 %v1300
        %v2069 = vunpack.c.h.b16 %v1300
        %v2070 = vunpack.c.l.b16 %v1301
        %v2071 = vunpack.c.h.b16 %v1301
        %v2072 = vunpack.c.l.b16 %v1302
        %v2073 = vunpack.c.h.b16 %v1302
        %v2074 = vunpack.c.l.b16 %v1303
        %v2075 = vunpack.c.h.b16 %v1303
        %v2076 = vunpack.c.l.b16 %v1304
        %v2077 = vunpack.c.h.b16 %v1304
        %v2078 = vunpack.c.l.b16 %v1305
        %v2079 = vunpack.c.h.b16 %v1305
        %v2080 = vunpack.c.l.b16 %v1306
        %v2081 = vunpack.c.h.b16 %v1306
        %v2082 = vunpack.c.l.b16 %v1307
        %v2083 = vunpack.c.h.b16 %v1307
        %v2084 = vunpack.c.l.b16 %v1308
        %v2085 = vunpack.c.h.b16 %v1308
        %v2086 = vunpack.c.l.b16 %v1309
        %v2087 = vunpack.c.h.b16 %v1309
        %v2088 = vunpack.c.l.b16 %v1310
        %v2089 = vunpack.c.h.b16 %v1310
        %v2090 = vunpack.c.l.b16 %v1311
        %v2091 = vunpack.c.h.b16 %v1311
        %v2092 = vunpack.c.l.b16 %v1312
        %v2093 = vunpack.c.h.b16 %v1312
        %v2094 = vunpack.c.l.b16 %v1313
        %v2095 = vunpack.c.h.b16 %v1313
        %v2096 = vunpack.c.l.b16 %v1314
        %v2097 = vunpack.c.h.b16 %v1314
        %v2098 = vunpack.c.l.b16 %v1315
        %v2099 = vunpack.c.h.b16 %v1315
        %v2100 = vunpack.c.l.b16 %v1316
        %v2101 = vunpack.c.h.b16 %v1316
        %v2102 = vunpack.c.l.b16 %v1317
        %v2103 = vunpack.c.h.b16 %v1317
        %v2104 = vunpack.c.l.b16 %v1318
        %v2105 = vunpack.c.h.b16 %v1318
        %v2106 = vunpack.c.l.b16 %v1319
        %v2107 = vunpack.c.h.b16 %v1319
        %v2108 = vunpack.c.l.b16 %v1320
        %v2109 = vunpack.c.h.b16 %v1320
        %v2110 = vunpack.c.l.b16 %v1321
        %v2111 = vunpack.c.h.b16 %v1321
        %v2112 = vpack.c.b16 %v1604, %v1600
        %v2113 = vpack.c.b16 %v1605, %v1601
        %v2114 = vpack.c.b16 %v1606, %v1602
        %v2115 = vpack.c.b16 %v1607, %v1603
        %v2116 = vpack.c.b16 %v1612, %v1608
        %v2117 = vpack.c.b16 %v1613, %v1609
        %v2118 = vpack.c.b16 %v1614, %v1610
        %v2119 = vpack.c.b16 %v1615, %v1611
        %v2120 = vpack.c.b16 %v1620, %v1616
        %v2121 = vpack.c.b16 %v1621, %v1617
        %v2122 = vpack.c.b16 %v1622, %v1618
        %v2123 = vpack.c.b16 %v1623, %v1619
        %v2124 = vpack.c.b16 %v1628, %v1624
        %v2125 = vpack.c.b16 %v1629, %v1625
        %v2126 = vpack.c.b16 %v1630, %v1626
        %v2127 = vpack.c.b16 %v1631, %v1627
        %v2128 = vpack.c.b16 %v1636, %v1632
        %v2129 = vpack.c.b16 %v1637, %v1633
        %v2130 = vpack.c.b16 %v1638, %v1634
        %v2131 = vpack.c.b16 %v1639, %v1635
        %v2132 = vpack.c.b16 %v1644, %v1640
        %v2133 = vpack.c.b16 %v1645, %v1641
        %v2134 = vpack.c.b16 %v1646, %v1642
        %v2135 = vpack.c.b16 %v1647, %v1643
        %v2136 = vpack.c.b16 %v1652, %v1648
        %v2137 = vpack.c.b16 %v1653, %v1649
        %v2138 = vpack.c.b16 %v1654, %v1650
        %v2139 = vpack.c.b16 %v1655, %v1651
        %v2140 = vpack.c.b16 %v1660, %v1656
        %v2141 = vpack.c.b16 %v1661, %v1657
        %v2142 = vpack.c.b16 %v1662, %v1658
        %v2143 = vpack.c.b16 %v1663, %v1659
        %v2144 = vpack.c.b16 %v1668, %v1664
        %v2145 = vpack.c.b16 %v1669, %v1665
        %v2146 = vpack.c.b16 %v1670, %v1666
        %v2147 = vpack.c.b16 %v1671, %v1667
        %v2148 = vpack.c.b16 %v1676, %v1672
        %v2149 = vpack.c.b16 %v1677, %v1673
        %v2150 = vpack.c.b16 %v1678, %v1674
        %v2151 = vpack.c.b16 %v1679, %v1675
        %v2152 = vpack.c.b16 %v1684, %v1680
        %v2153 = vpack.c.b16 %v1685, %v1681
        %v2154 = vpack.c.b16 %v1686, %v1682
        %v2155 = vpack.c.b16 %v1687, %v1683
        %v2156 = vpack.c.b16 %v1692, %v1688
        %v2157 = vpack.c.b16 %v1693, %v1689
        %v2158 = vpack.c.b16 %v1694, %v1690
        %v2159 = vpack.c.b16 %v1695, %v1691
        %v2160 = vpack.c.b16 %v1700, %v1696
        %v2161 = vpack.c.b16 %v1701, %v1697
        %v2162 = vpack.c.b16 %v1702, %v1698
        %v2163 = vpack.c.b16 %v1703, %v1699
        %v2164 = vpack.c.b16 %v1708, %v1704
        %v2165 = vpack.c.b16 %v1709, %v1705
        %v2166 = vpack.c.b16 %v1710, %v1706
        %v2167 = vpack.c.b16 %v1711, %v1707
        %v2168 = vpack.c.b16 %v1716, %v1712
        %v2169 = vpack.c.b16 %v1717, %v1713
        %v2170 = vpack.c.b16 %v1718, %v1714
        %v2171 = vpack.c.b16 %v1719, %v1715
        %v2172 = vpack.c.b16 %v1724, %v1720
        %v2173 = vpack.c.b16 %v1725, %v1721
        %v2174 = vpack.c.b16 %v1726, %v1722
        %v2175 = vpack.c.b16 %v1727, %v1723
        %v2176 = vpack.c.b16 %v1732, %v1728
        %v2177 = vpack.c.b16 %v1733, %v1729
        %v2178 = vpack.c.b16 %v1734, %v1730
        %v2179 = vpack.c.b16 %v1735, %v1731
        %v2180 = vpack.c.b16 %v1740, %v1736
        %v2181 = vpack.c.b16 %v1741, %v1737
        %v2182 = vpack.c.b16 %v1742, %v1738
        %v2183 = vpack.c.b16 %v1743, %v1739
        %v2184 = vpack.c.b16 %v1748, %v1744
        %v2185 = vpack.c.b16 %v1749, %v1745
        %v2186 = vpack.c.b16 %v1750, %v1746
        %v2187 = vpack.c.b16 %v1751, %v1747
        %v2188 = vpack.c.b16 %v1756, %v1752
        %v2189 = vpack.c.b16 %v1757, %v1753
        %v2190 = vpack.c.b16 %v1758, %v1754
        %v2191 = vpack.c.b16 %v1759, %v1755
        %v2192 = vpack.c.b16 %v1764, %v1760
        %v2193 = vpack.c.b16 %v1765, %v1761
        %v2194 = vpack.c.b16 %v1766, %v1762
        %v2195 = vpack.c.b16 %v1767, %v1763
        %v2196 = vpack.c.b16 %v1772, %v1768
        %v2197 = vpack.c.b16 %v1773, %v1769
        %v2198 = vpack.c.b16 %v1774, %v1770
        %v2199 = vpack.c.b16 %v1775, %v1771
        %v2200 = vpack.c.b16 %v1780, %v1776
        %v2201 = vpack.c.b16 %v1781, %v1777
        %v2202 = vpack.c.b16 %v1782, %v1778
        %v2203 = vpack.c.b16 %v1783, %v1779
        %v2204 = vpack.c.b16 %v1788, %v1784
        %v2205 = vpack.c.b16 %v1789, %v1785
        %v2206 = vpack.c.b16 %v1790, %v1786
        %v2207 = vpack.c.b16 %v1791, %v1787
        %v2208 = vpack.c.b16 %v1796, %v1792
        %v2209 = vpack.c.b16 %v1797, %v1793
        %v2210 = vpack.c.b16 %v1798, %v1794
        %v2211 = vpack.c.b16 %v1799, %v1795
        %v2212 = vpack.c.b16 %v1804, %v1800
        %v2213 = vpack.c.b16 %v1805, %v1801
        %v2214 = vpack.c.b16 %v1806, %v1802
        %v2215 = vpack.c.b16 %v1807, %v1803
        %v2216 = vpack.c.b16 %v1812, %v1808
        %v2217 = vpack.c.b16 %v1813, %v1809
        %v2218 = vpack.c.b16 %v1814, %v1810
        %v2219 = vpack.c.b16 %v1815, %v1811
        %v2220 = vpack.c.b16 %v1820, %v1816
        %v2221 = vpack.c.b16 %v1821, %v1817
        %v2222 = vpack.c.b16 %v1822, %v1818
        %v2223 = vpack.c.b16 %v1823, %v1819
        %v2224 = vpack.c.b16 %v1828, %v1824
        %v2225 = vpack.c.b16 %v1829, %v1825
        %v2226 = vpack.c.b16 %v1830, %v1826
        %v2227 = vpack.c.b16 %v1831, %v1827
        %v2228 = vpack.c.b16 %v1836, %v1832
        %v2229 = vpack.c.b16 %v1837, %v1833
        %v2230 = vpack.c.b16 %v1838, %v1834
        %v2231 = vpack.c.b16 %v1839, %v1835
        %v2232 = vpack.c.b16 %v1844, %v1840
        %v2233 = vpack.c.b16 %v1845, %v1841
        %v2234 = vpack.c.b16 %v1846, %v1842
        %v2235 = vpack.c.b16 %v1847, %v1843
        %v2236 = vpack.c.b16 %v1852, %v1848
        %v2237 = vpack.c.b16 %v1853, %v1849
        %v2238 = vpack.c.b16 %v1854, %v1850
        %v2239 = vpack.c.b16 %v1855, %v1851
        %v2240 = vpack.c.b16 %v1860, %v1856
        %v2241 = vpack.c.b16 %v1861, %v1857
        %v2242 = vpack.c.b16 %v1862, %v1858
        %v2243 = vpack.c.b16 %v1863, %v1859
        %v2244 = vpack.c.b16 %v1868, %v1864
        %v2245 = vpack.c.b16 %v1869, %v1865
        %v2246 = vpack.c.b16 %v1870, %v1866
        %v2247 = vpack.c.b16 %v1871, %v1867
        %v2248 = vpack.c.b16 %v1876, %v1872
        %v2249 = vpack.c.b16 %v1877, %v1873
        %v2250 = vpack.c.b16 %v1878, %v1874
        %v2251 = vpack.c.b16 %v1879, %v1875
        %v2252 = vpack.c.b16 %v1884, %v1880
        %v2253 = vpack.c.b16 %v1885, %v1881
        %v2254 = vpack.c.b16 %v1886, %v1882
        %v2255 = vpack.c.b16 %v1887, %v1883
        %v2256 = vpack.c.b16 %v1892, %v1888
        %v2257 = vpack.c.b16 %v1893, %v1889
        %v2258 = vpack.c.b16 %v1894, %v1890
        %v2259 = vpack.c.b16 %v1895, %v1891
        %v2260 = vpack.c.b16 %v1900, %v1896
        %v2261 = vpack.c.b16 %v1901, %v1897
        %v2262 = vpack.c.b16 %v1902, %v1898
        %v2263 = vpack.c.b16 %v1903, %v1899
        %v2264 = vpack.c.b16 %v1908, %v1904
        %v2265 = vpack.c.b16 %v1909, %v1905
        %v2266 = vpack.c.b16 %v1910, %v1906
        %v2267 = vpack.c.b16 %v1911, %v1907
        %v2268 = vpack.c.b16 %v1916, %v1912
        %v2269 = vpack.c.b16 %v1917, %v1913
        %v2270 = vpack.c.b16 %v1918, %v1914
        %v2271 = vpack.c.b16 %v1919, %v1915
        %v2272 = vpack.c.b16 %v1924, %v1920
        %v2273 = vpack.c.b16 %v1925, %v1921
        %v2274 = vpack.c.b16 %v1926, %v1922
        %v2275 = vpack.c.b16 %v1927, %v1923
        %v2276 = vpack.c.b16 %v1932, %v1928
        %v2277 = vpack.c.b16 %v1933, %v1929
        %v2278 = vpack.c.b16 %v1934, %v1930
        %v2279 = vpack.c.b16 %v1935, %v1931
        %v2280 = vpack.c.b16 %v1940, %v1936
        %v2281 = vpack.c.b16 %v1941, %v1937
        %v2282 = vpack.c.b16 %v1942, %v1938
        %v2283 = vpack.c.b16 %v1943, %v1939
        %v2284 = vpack.c.b16 %v1948, %v1944
        %v2285 = vpack.c.b16 %v1949, %v1945
        %v2286 = vpack.c.b16 %v1950, %v1946
        %v2287 = vpack.c.b16 %v1951, %v1947
        %v2288 = vpack.c.b16 %v1956, %v1952
        %v2289 = vpack.c.b16 %v1957, %v1953
        %v2290 = vpack.c.b16 %v1958, %v1954
        %v2291 = vpack.c.b16 %v1959, %v1955
        %v2292 = vpack.c.b16 %v1964, %v1960
        %v2293 = vpack.c.b16 %v1965, %v1961
        %v2294 = vpack.c.b16 %v1966, %v1962
        %v2295 = vpack.c.b16 %v1967, %v1963
        %v2296 = vpack.c.b16 %v1972, %v1968
        %v2297 = vpack.c.b16 %v1973, %v1969
        %v2298 = vpack.c.b16 %v1974, %v1970
        %v2299 = vpack.c.b16 %v1975, %v1971
        %v2300 = vpack.c.b16 %v1980, %v1976
        %v2301 = vpack.c.b16 %v1981, %v1977
        %v2302 = vpack.c.b16 %v1982, %v1978
        %v2303 = vpack.c.b16 %v1983, %v1979
        %v2304 = vpack.c.b16 %v1988, %v1984
        %v2305 = vpack.c.b16 %v1989, %v1985
        %v2306 = vpack.c.b16 %v1990, %v1986
        %v2307 = vpack.c.b16 %v1991, %v1987
        %v2308 = vpack.c.b16 %v1996, %v1992
        %v2309 = vpack.c.b16 %v1997, %v1993
        %v2310 = vpack.c.b16 %v1998, %v1994
        %v2311 = vpack.c.b16 %v1999, %v1995
        %v2312 = vpack.c.b16 %v2004, %v2000
        %v2313 = vpack.c.b16 %v2005, %v2001
        %v2314 = vpack.c.b16 %v2006, %v2002
        %v2315 = vpack.c.b16 %v2007, %v2003
        %v2316 = vpack.c.b16 %v2012, %v2008
        %v2317 = vpack.c.b16 %v2013, %v2009
        %v2318 = vpack.c.b16 %v2014, %v2010
        %v2319 = vpack.c.b16 %v2015, %v2011
        %v2320 = vpack.c.b16 %v2020, %v2016
        %v2321 = vpack.c.b16 %v2021, %v2017
        %v2322 = vpack.c.b16 %v2022, %v2018
        %v2323 = vpack.c.b16 %v2023, %v2019
        %v2324 = vpack.c.b16 %v2028, %v2024
        %v2325 = vpack.c.b16 %v2029, %v2025
        %v2326 = vpack.c.b16 %v2030, %v2026
        %v2327 = vpack.c.b16 %v2031, %v2027
        %v2328 = vpack.c.b16 %v2036, %v2032
        %v2329 = vpack.c.b16 %v2037, %v2033
        %v2330 = vpack.c.b16 %v2038, %v2034
        %v2331 = vpack.c.b16 %v2039, %v2035
        %v2332 = vpack.c.b16 %v2044, %v2040
        %v2333 = vpack.c.b16 %v2045, %v2041
        %v2334 = vpack.c.b16 %v2046, %v2042
        %v2335 = vpack.c.b16 %v2047, %v2043
        %v2336 = vpack.c.b16 %v2052, %v2048
        %v2337 = vpack.c.b16 %v2053, %v2049
        %v2338 = vpack.c.b16 %v2054, %v2050
        %v2339 = vpack.c.b16 %v2055, %v2051
        %v2340 = vpack.c.b16 %v2060, %v2056
        %v2341 = vpack.c.b16 %v2061, %v2057
        %v2342 = vpack.c.b16 %v2062, %v2058
        %v2343 = vpack.c.b16 %v2063, %v2059
        %v2344 = vpack.c.b16 %v2068, %v2064
        %v2345 = vpack.c.b16 %v2069, %v2065
        %v2346 = vpack.c.b16 %v2070, %v2066
        %v2347 = vpack.c.b16 %v2071, %v2067
        %v2348 = vpack.c.b16 %v2076, %v2072
        %v2349 = vpack.c.b16 %v2077, %v2073
        %v2350 = vpack.c.b16 %v2078, %v2074
        %v2351 = vpack.c.b16 %v2079, %v2075
        %v2352 = vpack.c.b16 %v2084, %v2080
        %v2353 = vpack.c.b16 %v2085, %v2081
        %v2354 = vpack.c.b16 %v2086, %v2082
        %v2355 = vpack.c.b16 %v2087, %v2083
        %v2356 = vpack.c.b16 %v2092, %v2088
        %v2357 = vpack.c.b16 %v2093, %v2089
        %v2358 = vpack.c.b16 %v2094, %v2090
        %v2359 = vpack.c.b16 %v2095, %v2091
        %v2360 = vpack.c.b16 %v2100, %v2096
        %v2361 = vpack.c.b16 %v2101, %v2097
        %v2362 = vpack.c.b16 %v2102, %v2098
        %v2363 = vpack.c.b16 %v2103, %v2099
        %v2364 = vpack.c.b16 %v2108, %v2104
        %v2365 = vpack.c.b16 %v2109, %v2105
        %v2366 = vpack.c.b16 %v2110, %v2106
        %v2367 = vpack.c.b16 %v2111, %v2107
        %2624 = vmatprep.subr.bf16.mxu0 %v2113
        %2625 = vmatpush1.bf16.msra.mxu0 %v2112
        %2626 = vmatprep.subr.bf16.mxu0 %v2117
        %2627 = vmatpush1.bf16.msra.mxu0 %v2116
        %2628 = vmatprep.subr.bf16.mxu0 %v2121
        %2629 = vmatpush1.bf16.msra.mxu0 %v2120
        %2630 = vmatprep.subr.bf16.mxu0 %v2125
        %2631 = vmatpush1.bf16.msra.mxu0 %v2124
        %2632 = vmatprep.subr.bf16.mxu0 %v2129
        %2633 = vmatpush1.bf16.msra.mxu0 %v2128
        %2634 = vmatprep.subr.bf16.mxu0 %v2133
        %2635 = vmatpush1.bf16.msra.mxu0 %v2132
        %2636 = vmatprep.subr.bf16.mxu0 %v2137
        %2637 = vmatpush1.bf16.msra.mxu0 %v2136
        %2638 = vmatprep.subr.bf16.mxu0 %v2141
        %2639 = vmatpush1.bf16.msra.mxu0 %v2140
        %2640 = vmatprep.subr.bf16.mxu0 %v2145
        %2641 = vmatpush1.bf16.msra.mxu0 %v2144
        %2642 = vmatprep.subr.bf16.mxu0 %v2149
        %2643 = vmatpush1.bf16.msra.mxu0 %v2148
        %2644 = vmatprep.subr.bf16.mxu0 %v2153
        %2645 = vmatpush1.bf16.msra.mxu0 %v2152
        %2646 = vmatprep.subr.bf16.mxu0 %v2157
        %2647 = vmatpush1.bf16.msra.mxu0 %v2156
        %2648 = vmatprep.subr.bf16.mxu0 %v2161
        %2649 = vmatpush1.bf16.msra.mxu0 %v2160
        %2650 = vmatprep.subr.bf16.mxu0 %v2165
        %2651 = vmatpush1.bf16.msra.mxu0 %v2164
        %2652 = vmatprep.subr.bf16.mxu0 %v2169
        %2653 = vmatpush1.bf16.msra.mxu0 %v2168
        %2654 = vmatprep.subr.bf16.mxu0 %v2173
        %2655 = vmatpush1.bf16.msra.mxu0 %v2172
        %2656 = vmatprep.mubr.bf16.mxu0 %v1051
        %2657 = vmatmul.mubr.bf16.gmra.mrb[0].mxu0 %v1050
        %v2658 = vpop.f32.mrb[0].mxu0
        %v2659 = vadd.f32 %v1327, %v2658
        %v2660 = vpop.f32.mrb[0].mxu0
        %v2661 = vadd.f32 %v1331, %v2660
        %v2662 = vpop.f32.mrb[0].mxu0
        %v2663 = vadd.f32 %v1327, %v2662
        %v2664 = vpop.f32.mrb[0].mxu0
        %v2665 = vadd.f32 %v1331, %v2664
        %2666 = vmatprep.mubr.bf16.mxu0 %v1059
        %2667 = vmatmul.mubr.bf16.gmra.mrb[0].mxu0 %v1058
        %v2668 = vpop.f32.mrb[0].mxu0
        %v2669 = vadd.f32 %v1327, %v2668
        %v2670 = vpop.f32.mrb[0].mxu0
        %v2671 = vadd.f32 %v1331, %v2670
        %v2672 = vpop.f32.mrb[0].mxu0
        %v2673 = vpop.f32.mrb[0].mxu0
        %2674 = vdwg.mxu0
        %2675 = vmatprep.subr.bf16.mxu0 %v2177
        %2676 = vmatpush1.bf16.msra.mxu0 %v2176
        %2677 = vmatprep.subr.bf16.mxu0 %v2181
        %2678 = vmatpush1.bf16.msra.mxu0 %v2180
        %2679 = vmatprep.subr.bf16.mxu0 %v2185
        %2680 = vmatpush1.bf16.msra.mxu0 %v2184
        %2681 = vmatprep.subr.bf16.mxu0 %v2189
        %2682 = vmatpush1.bf16.msra.mxu0 %v2188
        %2683 = vmatprep.subr.bf16.mxu0 %v2193
        %2684 = vmatpush1.bf16.msra.mxu0 %v2192
        %2685 = vmatprep.subr.bf16.mxu0 %v2197
        %2686 = vmatpush1.bf16.msra.mxu0 %v2196
        %2687 = vmatprep.subr.bf16.mxu0 %v2201
        %2688 = vmatpush1.bf16.msra.mxu0 %v2200
        %2689 = vmatprep.subr.bf16.mxu0 %v2205
        %2690 = vmatpush1.bf16.msra.mxu0 %v2204
        %2691 = vmatprep.subr.bf16.mxu0 %v2209
        %2692 = vmatpush1.bf16.msra.mxu0 %v2208
        %2693 = vmatprep.subr.bf16.mxu0 %v2213
        %2694 = vmatpush1.bf16.msra.mxu0 %v2212
        %2695 = vmatprep.subr.bf16.mxu0 %v2217
        %2696 = vmatpush1.bf16.msra.mxu0 %v2216
        %2697 = vmatprep.subr.bf16.mxu0 %v2221
        %2698 = vmatpush1.bf16.msra.mxu0 %v2220
        %2699 = vmatprep.subr.bf16.mxu0 %v2225
        %2700 = vmatpush1.bf16.msra.mxu0 %v2224
        %2701 = vmatprep.subr.bf16.mxu0 %v2229
        %2702 = vmatpush1.bf16.msra.mxu0 %v2228
        %2703 = vmatprep.subr.bf16.mxu0 %v2233
        %2704 = vmatpush1.bf16.msra.mxu0 %v2232
        %2705 = vmatprep.subr.bf16.mxu0 %v2237
        %2706 = vmatpush1.bf16.msra.mxu0 %v2236
        %2707 = vmatprep.mubr.bf16.mxu0 %v1053
        %2708 = vmatmul.mubr.bf16.gmra.mrb[0].mxu0 %v1052
        %v2709 = vpop.f32.mrb[0].mxu0
        %v2710 = vadd.f32 %v2659, %v2709
        %v2711 = vpop.f32.mrb[0].mxu0
        %v2712 = vadd.f32 %v2661, %v2711
        %v2713 = vpop.f32.mrb[0].mxu0
        %v2714 = vadd.f32 %v2663, %v2713
        %v2715 = vpop.f32.mrb[0].mxu0
        %v2716 = vadd.f32 %v2665, %v2715
        %2717 = vmatprep.mubr.bf16.mxu0 %v1061
        %2718 = vmatmul.mubr.bf16.gmra.mrb[0].mxu0 %v1060
        %v2719 = vpop.f32.mrb[0].mxu0
        %v2720 = vadd.f32 %v2669, %v2719
        %v2721 = vpop.f32.mrb[0].mxu0
        %v2722 = vadd.f32 %v2671, %v2721
        %v2723 = vpop.f32.mrb[0].mxu0
        %v2724 = vpop.f32.mrb[0].mxu0
        %2725 = vdwg.mxu0
        %2726 = vmatprep.subr.bf16.mxu0 %v2241
        %2727 = vmatpush1.bf16.msra.mxu0 %v2240
        %2728 = vmatprep.subr.bf16.mxu0 %v2245
        %2729 = vmatpush1.bf16.msra.mxu0 %v2244
        %2730 = vmatprep.subr.bf16.mxu0 %v2249
        %2731 = vmatpush1.bf16.msra.mxu0 %v2248
        %2732 = vmatprep.subr.bf16.mxu0 %v2253
        %2733 = vmatpush1.bf16.msra.mxu0 %v2252
        %2734 = vmatprep.subr.bf16.mxu0 %v2257
        %2735 = vmatpush1.bf16.msra.mxu0 %v2256
        %2736 = vmatprep.subr.bf16.mxu0 %v2261
        %2737 = vmatpush1.bf16.msra.mxu0 %v2260
        %2738 = vmatprep.subr.bf16.mxu0 %v2265
        %2739 = vmatpush1.bf16.msra.mxu0 %v2264
        %2740 = vmatprep.subr.bf16.mxu0 %v2269
        %2741 = vmatpush1.bf16.msra.mxu0 %v2268
        %2742 = vmatprep.subr.bf16.mxu0 %v2273
        %2743 = vmatpush1.bf16.msra.mxu0 %v2272
        %2744 = vmatprep.subr.bf16.mxu0 %v2277
        %2745 = vmatpush1.bf16.msra.mxu0 %v2276
        %2746 = vmatprep.subr.bf16.mxu0 %v2281
        %2747 = vmatpush1.bf16.msra.mxu0 %v2280
        %2748 = vmatprep.subr.bf16.mxu0 %v2285
        %2749 = vmatpush1.bf16.msra.mxu0 %v2284
        %2750 = vmatprep.subr.bf16.mxu0 %v2289
        %2751 = vmatpush1.bf16.msra.mxu0 %v2288
        %2752 = vmatprep.subr.bf16.mxu0 %v2293
        %2753 = vmatpush1.bf16.msra.mxu0 %v2292
        %2754 = vmatprep.subr.bf16.mxu0 %v2297
        %2755 = vmatpush1.bf16.msra.mxu0 %v2296
        %2756 = vmatprep.subr.bf16.mxu0 %v2301
        %2757 = vmatpush1.bf16.msra.mxu0 %v2300
        %2758 = vmatprep.mubr.bf16.mxu0 %v1055
        %2759 = vmatmul.mubr.bf16.gmra.mrb[0].mxu0 %v1054
        %v2760 = vpop.f32.mrb[0].mxu0
        %v2761 = vadd.f32 %v2710, %v2760
        %v2762 = vpop.f32.mrb[0].mxu0
        %v2763 = vadd.f32 %v2712, %v2762
        %v2764 = vpop.f32.mrb[0].mxu0
        %v2765 = vadd.f32 %v2714, %v2764
        %v2766 = vpop.f32.mrb[0].mxu0
        %v2767 = vadd.f32 %v2716, %v2766
        %2768 = vmatprep.mubr.bf16.mxu0 %v1063
        %2769 = vmatmul.mubr.bf16.gmra.mrb[0].mxu0 %v1062
        %v2770 = vpop.f32.mrb[0].mxu0
        %v2771 = vadd.f32 %v2720, %v2770
        %v2772 = vpop.f32.mrb[0].mxu0
        %v2773 = vadd.f32 %v2722, %v2772
        %v2774 = vpop.f32.mrb[0].mxu0
        %v2775 = vpop.f32.mrb[0].mxu0
        %2776 = vdwg.mxu0
        %2777 = vmatprep.subr.bf16.mxu0 %v2305
        %2778 = vmatpush1.bf16.msra.mxu0 %v2304
        %2779 = vmatprep.subr.bf16.mxu0 %v2309
        %2780 = vmatpush1.bf16.msra.mxu0 %v2308
        %2781 = vmatprep.subr.bf16.mxu0 %v2313
        %2782 = vmatpush1.bf16.msra.mxu0 %v2312
        %2783 = vmatprep.subr.bf16.mxu0 %v2317
        %2784 = vmatpush1.bf16.msra.mxu0 %v2316
        %2785 = vmatprep.subr.bf16.mxu0 %v2321
        %2786 = vmatpush1.bf16.msra.mxu0 %v2320
        %2787 = vmatprep.subr.bf16.mxu0 %v2325
        %2788 = vmatpush1.bf16.msra.mxu0 %v2324
        %2789 = vmatprep.subr.bf16.mxu0 %v2329
        %2790 = vmatpush1.bf16.msra.mxu0 %v2328
        %2791 = vmatprep.subr.bf16.mxu0 %v2333
        %2792 = vmatpush1.bf16.msra.mxu0 %v2332
        %2793 = vmatprep.subr.bf16.mxu0 %v2337
        %2794 = vmatpush1.bf16.msra.mxu0 %v2336
        %2795 = vmatprep.subr.bf16.mxu0 %v2341
        %2796 = vmatpush1.bf16.msra.mxu0 %v2340
        %2797 = vmatprep.subr.bf16.mxu0 %v2345
        %2798 = vmatpush1.bf16.msra.mxu0 %v2344
        %2799 = vmatprep.subr.bf16.mxu0 %v2349
        %2800 = vmatpush1.bf16.msra.mxu0 %v2348
        %2801 = vmatprep.subr.bf16.mxu0 %v2353
        %2802 = vmatpush1.bf16.msra.mxu0 %v2352
        %2803 = vmatprep.subr.bf16.mxu0 %v2357
        %2804 = vmatpush1.bf16.msra.mxu0 %v2356
        %2805 = vmatprep.subr.bf16.mxu0 %v2361
        %2806 = vmatpush1.bf16.msra.mxu0 %v2360
        %2807 = vmatprep.subr.bf16.mxu0 %v2365
        %2808 = vmatpush1.bf16.msra.mxu0 %v2364
        %2809 = vmatprep.mubr.bf16.mxu0 %v1057
        %2810 = vmatmul.mubr.bf16.gmra.mrb[0].mxu0 %v1056
        %v2811 = vpop.f32.mrb[0].mxu0
        %v2812 = vadd.f32 %v2761, %v2811
        %v2813 = vpop.f32.mrb[0].mxu0
        %v2814 = vadd.f32 %v2763, %v2813
        %v2815 = vpop.f32.mrb[0].mxu0
        %v2816 = vadd.f32 %v2765, %v2815
        %v2817 = vpop.f32.mrb[0].mxu0
        %v2818 = vadd.f32 %v2767, %v2817
        %2819 = vmatprep.mubr.bf16.mxu0 %v1065
        %2820 = vmatmul.mubr.bf16.gmra.mrb[0].mxu0 %v1064
        %v2821 = vpop.f32.mrb[0].mxu0
        %v2822 = vadd.f32 %v2771, %v2821
        %v2823 = vpop.f32.mrb[0].mxu0
        %v2824 = vadd.f32 %v2773, %v2823
        %v2825 = vpop.f32.mrb[0].mxu0
        %v2826 = vpop.f32.mrb[0].mxu0
        %2827 = vdwg.mxu0
        %2828 = vmatprep.subr.bf16.mxu0 %v2115
        %2829 = vmatpush1.bf16.msra.mxu0 %v2114
        %2830 = vmatprep.subr.bf16.mxu0 %v2119
        %2831 = vmatpush1.bf16.msra.mxu0 %v2118
        %2832 = vmatprep.subr.bf16.mxu0 %v2123
        %2833 = vmatpush1.bf16.msra.mxu0 %v2122
        %2834 = vmatprep.subr.bf16.mxu0 %v2127
        %2835 = vmatpush1.bf16.msra.mxu0 %v2126
        %2836 = vmatprep.subr.bf16.mxu0 %v2131
        %2837 = vmatpush1.bf16.msra.mxu0 %v2130
        %2838 = vmatprep.subr.bf16.mxu0 %v2135
        %2839 = vmatpush1.bf16.msra.mxu0 %v2134
        %2840 = vmatprep.subr.bf16.mxu0 %v2139
        %2841 = vmatpush1.bf16.msra.mxu0 %v2138
        %2842 = vmatprep.subr.bf16.mxu0 %v2143
        %2843 = vmatpush1.bf16.msra.mxu0 %v2142
        %2844 = vmatprep.subr.bf16.mxu0 %v2147
        %2845 = vmatpush1.bf16.msra.mxu0 %v2146
        %2846 = vmatprep.subr.bf16.mxu0 %v2151
        %2847 = vmatpush1.bf16.msra.mxu0 %v2150
        %2848 = vmatprep.subr.bf16.mxu0 %v2155
        %2849 = vmatpush1.bf16.msra.mxu0 %v2154
        %2850 = vmatprep.subr.bf16.mxu0 %v2159
        %2851 = vmatpush1.bf16.msra.mxu0 %v2158
        %2852 = vmatprep.subr.bf16.mxu0 %v2163
        %2853 = vmatpush1.bf16.msra.mxu0 %v2162
        %2854 = vmatprep.subr.bf16.mxu0 %v2167
        %2855 = vmatpush1.bf16.msra.mxu0 %v2166
        %2856 = vmatprep.subr.bf16.mxu0 %v2171
        %2857 = vmatpush1.bf16.msra.mxu0 %v2170
        %2858 = vmatprep.subr.bf16.mxu0 %v2175
        %2859 = vmatpush1.bf16.msra.mxu0 %v2174
        %2860 = vmatprep.mubr.bf16.mxu0 %v1051
        %2861 = vmatmul.mubr.bf16.gmra.mrb[0].mxu0 %v1050
        %v2862 = vpop.f32.mrb[0].mxu0
        %v2863 = vadd.f32 %v1335, %v2862
        %v2864 = vpop.f32.mrb[0].mxu0
        %v2865 = vadd.f32 %v1339, %v2864
        %v2866 = vpop.f32.mrb[0].mxu0
        %v2867 = vadd.f32 %v1335, %v2866
        %v2868 = vpop.f32.mrb[0].mxu0
        %v2869 = vadd.f32 %v1339, %v2868
        %2870 = vmatprep.mubr.bf16.mxu0 %v1059
        %2871 = vmatmul.mubr.bf16.gmra.mrb[0].mxu0 %v1058
        %v2872 = vpop.f32.mrb[0].mxu0
        %v2873 = vadd.f32 %v1335, %v2872
        %v2874 = vpop.f32.mrb[0].mxu0
        %v2875 = vadd.f32 %v1339, %v2874
        %v2876 = vpop.f32.mrb[0].mxu0
        %v2877 = vpop.f32.mrb[0].mxu0
        %2878 = vdwg.mxu0
        %2879 = vmatprep.subr.bf16.mxu0 %v2179
        %2880 = vmatpush1.bf16.msra.mxu0 %v2178
        %2881 = vmatprep.subr.bf16.mxu0 %v2183
        %2882 = vmatpush1.bf16.msra.mxu0 %v2182
        %2883 = vmatprep.subr.bf16.mxu0 %v2187
        %2884 = vmatpush1.bf16.msra.mxu0 %v2186
        %2885 = vmatprep.subr.bf16.mxu0 %v2191
        %2886 = vmatpush1.bf16.msra.mxu0 %v2190
        %2887 = vmatprep.subr.bf16.mxu0 %v2195
        %2888 = vmatpush1.bf16.msra.mxu0 %v2194
        %2889 = vmatprep.subr.bf16.mxu0 %v2199
        %2890 = vmatpush1.bf16.msra.mxu0 %v2198
        %2891 = vmatprep.subr.bf16.mxu0 %v2203
        %2892 = vmatpush1.bf16.msra.mxu0 %v2202
        %2893 = vmatprep.subr.bf16.mxu0 %v2207
        %2894 = vmatpush1.bf16.msra.mxu0 %v2206
        %2895 = vmatprep.subr.bf16.mxu0 %v2211
        %2896 = vmatpush1.bf16.msra.mxu0 %v2210
        %2897 = vmatprep.subr.bf16.mxu0 %v2215
        %2898 = vmatpush1.bf16.msra.mxu0 %v2214
        %2899 = vmatprep.subr.bf16.mxu0 %v2219
        %2900 = vmatpush1.bf16.msra.mxu0 %v2218
        %2901 = vmatprep.subr.bf16.mxu0 %v2223
        %2902 = vmatpush1.bf16.msra.mxu0 %v2222
        %2903 = vmatprep.subr.bf16.mxu0 %v2227
        %2904 = vmatpush1.bf16.msra.mxu0 %v2226
        %2905 = vmatprep.subr.bf16.mxu0 %v2231
        %2906 = vmatpush1.bf16.msra.mxu0 %v2230
        %2907 = vmatprep.subr.bf16.mxu0 %v2235
        %2908 = vmatpush1.bf16.msra.mxu0 %v2234
        %2909 = vmatprep.subr.bf16.mxu0 %v2239
        %2910 = vmatpush1.bf16.msra.mxu0 %v2238
        %2911 = vmatprep.mubr.bf16.mxu0 %v1053
        %2912 = vmatmul.mubr.bf16.gmra.mrb[0].mxu0 %v1052
        %v2913 = vpop.f32.mrb[0].mxu0
        %v2914 = vadd.f32 %v2863, %v2913
        %v2915 = vpop.f32.mrb[0].mxu0
        %v2916 = vadd.f32 %v2865, %v2915
        %v2917 = vpop.f32.mrb[0].mxu0
        %v2918 = vadd.f32 %v2867, %v2917
        %v2919 = vpop.f32.mrb[0].mxu0
        %v2920 = vadd.f32 %v2869, %v2919
        %2921 = vmatprep.mubr.bf16.mxu0 %v1061
        %2922 = vmatmul.mubr.bf16.gmra.mrb[0].mxu0 %v1060
        %v2923 = vpop.f32.mrb[0].mxu0
        %v2924 = vadd.f32 %v2873, %v2923
        %v2925 = vpop.f32.mrb[0].mxu0
        %v2926 = vadd.f32 %v2875, %v2925
        %v2927 = vpop.f32.mrb[0].mxu0
        %v2928 = vpop.f32.mrb[0].mxu0
        %2929 = vdwg.mxu0
        %2930 = vmatprep.subr.bf16.mxu0 %v2243
        %2931 = vmatpush1.bf16.msra.mxu0 %v2242
        %2932 = vmatprep.subr.bf16.mxu0 %v2247
        %2933 = vmatpush1.bf16.msra.mxu0 %v2246
        %2934 = vmatprep.subr.bf16.mxu0 %v2251
        %2935 = vmatpush1.bf16.msra.mxu0 %v2250
        %2936 = vmatprep.subr.bf16.mxu0 %v2255
        %2937 = vmatpush1.bf16.msra.mxu0 %v2254
        %2938 = vmatprep.subr.bf16.mxu0 %v2259
        %2939 = vmatpush1.bf16.msra.mxu0 %v2258
        %2940 = vmatprep.subr.bf16.mxu0 %v2263
        %2941 = vmatpush1.bf16.msra.mxu0 %v2262
        %2942 = vmatprep.subr.bf16.mxu0 %v2267
        %2943 = vmatpush1.bf16.msra.mxu0 %v2266
        %2944 = vmatprep.subr.bf16.mxu0 %v2271
        %2945 = vmatpush1.bf16.msra.mxu0 %v2270
        %2946 = vmatprep.subr.bf16.mxu0 %v2275
        %2947 = vmatpush1.bf16.msra.mxu0 %v2274
        %2948 = vmatprep.subr.bf16.mxu0 %v2279
        %2949 = vmatpush1.bf16.msra.mxu0 %v2278
        %2950 = vmatprep.subr.bf16.mxu0 %v2283
        %2951 = vmatpush1.bf16.msra.mxu0 %v2282
        %2952 = vmatprep.subr.bf16.mxu0 %v2287
        %2953 = vmatpush1.bf16.msra.mxu0 %v2286
        %2954 = vmatprep.subr.bf16.mxu0 %v2291
        %2955 = vmatpush1.bf16.msra.mxu0 %v2290
        %2956 = vmatprep.subr.bf16.mxu0 %v2295
        %2957 = vmatpush1.bf16.msra.mxu0 %v2294
        %2958 = vmatprep.subr.bf16.mxu0 %v2299
        %2959 = vmatpush1.bf16.msra.mxu0 %v2298
        %2960 = vmatprep.subr.bf16.mxu0 %v2303
        %2961 = vmatpush1.bf16.msra.mxu0 %v2302
        %2962 = vmatprep.mubr.bf16.mxu0 %v1055
        %2963 = vmatmul.mubr.bf16.gmra.mrb[0].mxu0 %v1054
        %v2964 = vpop.f32.mrb[0].mxu0
        %v2965 = vadd.f32 %v2914, %v2964
        %v2966 = vpop.f32.mrb[0].mxu0
        %v2967 = vadd.f32 %v2916, %v2966
        %v2968 = vpop.f32.mrb[0].mxu0
        %v2969 = vadd.f32 %v2918, %v2968
        %v2970 = vpop.f32.mrb[0].mxu0
        %v2971 = vadd.f32 %v2920, %v2970
        %2972 = vmatprep.mubr.bf16.mxu0 %v1063
        %2973 = vmatmul.mubr.bf16.gmra.mrb[0].mxu0 %v1062
        %v2974 = vpop.f32.mrb[0].mxu0
        %v2975 = vadd.f32 %v2924, %v2974
        %v2976 = vpop.f32.mrb[0].mxu0
        %v2977 = vadd.f32 %v2926, %v2976
        %v2978 = vpop.f32.mrb[0].mxu0
        %v2979 = vpop.f32.mrb[0].mxu0
        %2980 = vdwg.mxu0
        %2981 = vmatprep.subr.bf16.mxu0 %v2307
        %2982 = vmatpush1.bf16.msra.mxu0 %v2306
        %2983 = vmatprep.subr.bf16.mxu0 %v2311
        %2984 = vmatpush1.bf16.msra.mxu0 %v2310
        %2985 = vmatprep.subr.bf16.mxu0 %v2315
        %2986 = vmatpush1.bf16.msra.mxu0 %v2314
        %2987 = vmatprep.subr.bf16.mxu0 %v2319
        %2988 = vmatpush1.bf16.msra.mxu0 %v2318
        %2989 = vmatprep.subr.bf16.mxu0 %v2323
        %2990 = vmatpush1.bf16.msra.mxu0 %v2322
        %2991 = vmatprep.subr.bf16.mxu0 %v2327
        %2992 = vmatpush1.bf16.msra.mxu0 %v2326
        %2993 = vmatprep.subr.bf16.mxu0 %v2331
        %2994 = vmatpush1.bf16.msra.mxu0 %v2330
        %2995 = vmatprep.subr.bf16.mxu0 %v2335
        %2996 = vmatpush1.bf16.msra.mxu0 %v2334
        %2997 = vmatprep.subr.bf16.mxu0 %v2339
        %2998 = vmatpush1.bf16.msra.mxu0 %v2338
        %2999 = vmatprep.subr.bf16.mxu0 %v2343
        %3000 = vmatpush1.bf16.msra.mxu0 %v2342
        %3001 = vmatprep.subr.bf16.mxu0 %v2347
        %3002 = vmatpush1.bf16.msra.mxu0 %v2346
        %3003 = vmatprep.subr.bf16.mxu0 %v2351
        %3004 = vmatpush1.bf16.msra.mxu0 %v2350
        %3005 = vmatprep.subr.bf16.mxu0 %v2355
        %3006 = vmatpush1.bf16.msra.mxu0 %v2354
        %3007 = vmatprep.subr.bf16.mxu0 %v2359
        %3008 = vmatpush1.bf16.msra.mxu0 %v2358
        %3009 = vmatprep.subr.bf16.mxu0 %v2363
        %3010 = vmatpush1.bf16.msra.mxu0 %v2362
        %3011 = vmatprep.subr.bf16.mxu0 %v2367
        %3012 = vmatpush1.bf16.msra.mxu0 %v2366
        %3013 = vmatprep.mubr.bf16.mxu0 %v1057
        %3014 = vmatmul.mubr.bf16.gmra.mrb[0].mxu0 %v1056
        %v3015 = vpop.f32.mrb[0].mxu0
        %v3016 = vadd.f32 %v2965, %v3015
        %v3017 = vpop.f32.mrb[0].mxu0
        %v3018 = vadd.f32 %v2967, %v3017
        %v3019 = vpop.f32.mrb[0].mxu0
        %v3020 = vadd.f32 %v2969, %v3019
        %v3021 = vpop.f32.mrb[0].mxu0
        %v3022 = vadd.f32 %v2971, %v3021
        %3023 = vmatprep.mubr.bf16.mxu0 %v1065
        %3024 = vmatmul.mubr.bf16.gmra.mrb[0].mxu0 %v1064
        %v3025 = vpop.f32.mrb[0].mxu0
        %v3026 = vadd.f32 %v2975, %v3025
        %v3027 = vpop.f32.mrb[0].mxu0
        %v3028 = vadd.f32 %v2977, %v3027
        %v3029 = vpop.f32.mrb[0].mxu0
        %v3030 = vpop.f32.mrb[0].mxu0
        %3031 = vdwg.mxu0
        %v3032 = vmax.f32 %v2812, 0.0
        %v3033 = vmax.f32 %v2814, 0.0
        %v3034 = vmax.f32 %v3016, 0.0
        %v3035 = vmax.f32 %v3018, 0.0
        %v3036 = vmax.f32 %v2816, 0.0
        %v3037 = vmax.f32 %v2818, 0.0
        %v3038 = vmax.f32 %v3020, 0.0
        %v3039 = vmax.f32 %v3022, 0.0
        %v3040 = vmax.f32 %v2822, 0.0
        %v3041 = vmax.f32 %v2824, 0.0
        %v3042 = vmax.f32 %v3026, 0.0
        %v3043 = vmax.f32 %v3028, 0.0
        %v3044 = vpack.c.bf16 %v3036, %v3032
        %v3045 = vpack.c.bf16 %v3037, %v3033
        %v3046 = vpack.c.bf16 %v3038, %v3034
        %v3047 = vpack.c.bf16 %v3039, %v3035
        %v3048 = vpack.c.bf16 %v3040, %v3040
        %v3049 = vpack.c.bf16 %v3041, %v3041
        %v3050 = vpack.c.bf16 %v3042, %v3042
        %v3051 = vpack.c.bf16 %v3043, %v3043
        %v3052 = vld [vmem:[#allocation10] sm:$0xff]
        %v3053 = vld [vmem:[#allocation10 + $0x8] sm:$0xff]
        %v3054 = vld [vmem:[#allocation10 + $0x10] sm:$0xff]
        %v3055 = vld [vmem:[#allocation10 + $0x18] sm:$0xff]
        %v3056 = vld [vmem:[#allocation10 + $0x20] sm:$0xff]
        %v3057 = vld [vmem:[#allocation10 + $0x28] sm:$0xff]
        %v3058 = vld [vmem:[#allocation10 + $0x30] sm:$0xff]
        %v3059 = vld [vmem:[#allocation10 + $0x38] sm:$0xff]
        %v3060 = vld [vmem:[#allocation10 + $0x40] sm:$0xff]
        %v3061 = vld [vmem:[#allocation10 + $0x48] sm:$0xff]
        %v3062 = vld [vmem:[#allocation10 + $0x50] sm:$0xff]
        %v3063 = vld [vmem:[#allocation10 + $0x58] sm:$0xff]
        %v3064 = vld [vmem:[#allocation10 + $0x60] sm:$0xff]
        %v3065 = vld [vmem:[#allocation10 + $0x68] sm:$0xff]
        %v3066 = vld [vmem:[#allocation10 + $0x70] sm:$0xff]
        %v3067 = vld [vmem:[#allocation10 + $0x78] sm:$0xff]
        %v3068 = vld [vmem:[#allocation10 + $0x80] sm:$0xff]
        %v3069 = vld [vmem:[#allocation10 + $0x88] sm:$0xff]
        %v3070 = vld [vmem:[#allocation10 + $0x90] sm:$0xff]
        %v3071 = vld [vmem:[#allocation10 + $0x98] sm:$0xff]
        %v3072 = vld [vmem:[#allocation10 + $0xa0] sm:$0xff]
        %v3073 = vld [vmem:[#allocation10 + $0xa8] sm:$0xff]
        %v3074 = vld [vmem:[#allocation10 + $0xb0] sm:$0xff]
        %v3075 = vld [vmem:[#allocation10 + $0xb8] sm:$0xff]
        %v3076 = vld [vmem:[#allocation10 + $0xc0] sm:$0xff]
        %v3077 = vld [vmem:[#allocation10 + $0xc8] sm:$0xff]
        %v3078 = vld [vmem:[#allocation10 + $0xd0] sm:$0xff]
        %v3079 = vld [vmem:[#allocation10 + $0xd8] sm:$0xff]
        %v3080 = vld [vmem:[#allocation10 + $0xe0] sm:$0xff]
        %v3081 = vld [vmem:[#allocation10 + $0xe8] sm:$0xff]
        %v3082 = vld [vmem:[#allocation10 + $0xf0] sm:$0xff]
        %v3083 = vld [vmem:[#allocation10 + $0xf8] sm:$0xff]
        %v3084 = vld [vmem:[#allocation10 + $0x100] sm:$0xff]
        %v3085 = vld [vmem:[#allocation10 + $0x108] sm:$0xff]
        %v3086 = vld [vmem:[#allocation10 + $0x110] sm:$0xff]
        %v3087 = vld [vmem:[#allocation10 + $0x118] sm:$0xff]
        %v3088 = vld [vmem:[#allocation10 + $0x120] sm:$0xff]
        %v3089 = vld [vmem:[#allocation10 + $0x128] sm:$0xff]
        %v3090 = vld [vmem:[#allocation10 + $0x130] sm:$0xff]
        %v3091 = vld [vmem:[#allocation10 + $0x138] sm:$0xff]
        %v3092 = vld [vmem:[#allocation10 + $0x140] sm:$0xff]
        %v3093 = vld [vmem:[#allocation10 + $0x148] sm:$0xff]
        %v3094 = vld [vmem:[#allocation10 + $0x150] sm:$0xff]
        %v3095 = vld [vmem:[#allocation10 + $0x158] sm:$0xff]
        %v3096 = vld [vmem:[#allocation10 + $0x160] sm:$0xff]
        %v3097 = vld [vmem:[#allocation10 + $0x168] sm:$0xff]
        %v3098 = vld [vmem:[#allocation10 + $0x170] sm:$0xff]
        %v3099 = vld [vmem:[#allocation10 + $0x178] sm:$0xff]
        %v3100 = vld [vmem:[#allocation10 + $0x180] sm:$0xff]
        %v3101 = vld [vmem:[#allocation10 + $0x188] sm:$0xff]
        %v3102 = vld [vmem:[#allocation10 + $0x190] sm:$0xff]
        %v3103 = vld [vmem:[#allocation10 + $0x198] sm:$0xff]
        %v3104 = vld [vmem:[#allocation10 + $0x1a0] sm:$0xff]
        %v3105 = vld [vmem:[#allocation10 + $0x1a8] sm:$0xff]
        %v3106 = vld [vmem:[#allocation10 + $0x1b0] sm:$0xff]
        %v3107 = vld [vmem:[#allocation10 + $0x1b8] sm:$0xff]
        %v3108 = vld [vmem:[#allocation10 + $0x1c0] sm:$0xff]
        %v3109 = vld [vmem:[#allocation10 + $0x1c8] sm:$0xff]
        %v3110 = vld [vmem:[#allocation10 + $0x1d0] sm:$0xff]
        %v3111 = vld [vmem:[#allocation10 + $0x1d8] sm:$0xff]
        %v3112 = vld [vmem:[#allocation10 + $0x1e0] sm:$0xff]
        %v3113 = vld [vmem:[#allocation10 + $0x1e8] sm:$0xff]
        %v3114 = vld [vmem:[#allocation10 + $0x1f0] sm:$0xff]
        %v3115 = vld [vmem:[#allocation10 + $0x1f8] sm:$0xff]
        %v3116 = vld [vmem:[%s6] sm:$0x3]
        %v3118 = vlaneseq
        %v3119 = vshrl.u32 %v3118, 7
        %v3120 = vsub.s32 0, %v3119
        %v3121 = vrot.slane %v3116, %v3120
        %v3122 = vlaneseq
        %v3123 = vshrl.u32 %v3122, 7
        %v3124 = vsub.s32 1, %v3123
        %v3125 = vrot.slane %v3116, %v3124
        %v3192 = vunpack.c.l.b16 %v3052
        %v3193 = vunpack.c.h.b16 %v3052
        %v3194 = vunpack.c.l.b16 %v3053
        %v3195 = vunpack.c.h.b16 %v3053
        %v3196 = vunpack.c.l.b16 %v3054
        %v3197 = vunpack.c.h.b16 %v3054
        %v3198 = vunpack.c.l.b16 %v3055
        %v3199 = vunpack.c.h.b16 %v3055
        %v3200 = vunpack.c.l.b16 %v3056
        %v3201 = vunpack.c.h.b16 %v3056
        %v3202 = vunpack.c.l.b16 %v3057
        %v3203 = vunpack.c.h.b16 %v3057
        %v3204 = vunpack.c.l.b16 %v3058
        %v3205 = vunpack.c.h.b16 %v3058
        %v3206 = vunpack.c.l.b16 %v3059
        %v3207 = vunpack.c.h.b16 %v3059
        %v3208 = vunpack.c.l.b16 %v3060
        %v3209 = vunpack.c.h.b16 %v3060
        %v3210 = vunpack.c.l.b16 %v3061
        %v3211 = vunpack.c.h.b16 %v3061
        %v3212 = vunpack.c.l.b16 %v3062
        %v3213 = vunpack.c.h.b16 %v3062
        %v3214 = vunpack.c.l.b16 %v3063
        %v3215 = vunpack.c.h.b16 %v3063
        %v3216 = vunpack.c.l.b16 %v3064
        %v3217 = vunpack.c.h.b16 %v3064
        %v3218 = vunpack.c.l.b16 %v3065
        %v3219 = vunpack.c.h.b16 %v3065
        %v3220 = vunpack.c.l.b16 %v3066
        %v3221 = vunpack.c.h.b16 %v3066
        %v3222 = vunpack.c.l.b16 %v3067
        %v3223 = vunpack.c.h.b16 %v3067
        %v3224 = vunpack.c.l.b16 %v3068
        %v3225 = vunpack.c.h.b16 %v3068
        %v3226 = vunpack.c.l.b16 %v3069
        %v3227 = vunpack.c.h.b16 %v3069
        %v3228 = vunpack.c.l.b16 %v3070
        %v3229 = vunpack.c.h.b16 %v3070
        %v3230 = vunpack.c.l.b16 %v3071
        %v3231 = vunpack.c.h.b16 %v3071
        %v3232 = vunpack.c.l.b16 %v3072
        %v3233 = vunpack.c.h.b16 %v3072
        %v3234 = vunpack.c.l.b16 %v3073
        %v3235 = vunpack.c.h.b16 %v3073
        %v3236 = vunpack.c.l.b16 %v3074
        %v3237 = vunpack.c.h.b16 %v3074
        %v3238 = vunpack.c.l.b16 %v3075
        %v3239 = vunpack.c.h.b16 %v3075
        %v3240 = vunpack.c.l.b16 %v3076
        %v3241 = vunpack.c.h.b16 %v3076
        %v3242 = vunpack.c.l.b16 %v3077
        %v3243 = vunpack.c.h.b16 %v3077
        %v3244 = vunpack.c.l.b16 %v3078
        %v3245 = vunpack.c.h.b16 %v3078
        %v3246 = vunpack.c.l.b16 %v3079
        %v3247 = vunpack.c.h.b16 %v3079
        %v3248 = vunpack.c.l.b16 %v3080
        %v3249 = vunpack.c.h.b16 %v3080
        %v3250 = vunpack.c.l.b16 %v3081
        %v3251 = vunpack.c.h.b16 %v3081
        %v3252 = vunpack.c.l.b16 %v3082
        %v3253 = vunpack.c.h.b16 %v3082
        %v3254 = vunpack.c.l.b16 %v3083
        %v3255 = vunpack.c.h.b16 %v3083
        %v3256 = vunpack.c.l.b16 %v3084
        %v3257 = vunpack.c.h.b16 %v3084
        %v3258 = vunpack.c.l.b16 %v3085
        %v3259 = vunpack.c.h.b16 %v3085
        %v3260 = vunpack.c.l.b16 %v3086
        %v3261 = vunpack.c.h.b16 %v3086
        %v3262 = vunpack.c.l.b16 %v3087
        %v3263 = vunpack.c.h.b16 %v3087
        %v3264 = vunpack.c.l.b16 %v3088
        %v3265 = vunpack.c.h.b16 %v3088
        %v3266 = vunpack.c.l.b16 %v3089
        %v3267 = vunpack.c.h.b16 %v3089
        %v3268 = vunpack.c.l.b16 %v3090
        %v3269 = vunpack.c.h.b16 %v3090
        %v3270 = vunpack.c.l.b16 %v3091
        %v3271 = vunpack.c.h.b16 %v3091
        %v3272 = vunpack.c.l.b16 %v3092
        %v3273 = vunpack.c.h.b16 %v3092
        %v3274 = vunpack.c.l.b16 %v3093
        %v3275 = vunpack.c.h.b16 %v3093
        %v3276 = vunpack.c.l.b16 %v3094
        %v3277 = vunpack.c.h.b16 %v3094
        %v3278 = vunpack.c.l.b16 %v3095
        %v3279 = vunpack.c.h.b16 %v3095
        %v3280 = vunpack.c.l.b16 %v3096
        %v3281 = vunpack.c.h.b16 %v3096
        %v3282 = vunpack.c.l.b16 %v3097
        %v3283 = vunpack.c.h.b16 %v3097
        %v3284 = vunpack.c.l.b16 %v3098
        %v3285 = vunpack.c.h.b16 %v3098
        %v3286 = vunpack.c.l.b16 %v3099
        %v3287 = vunpack.c.h.b16 %v3099
        %v3288 = vunpack.c.l.b16 %v3100
        %v3289 = vunpack.c.h.b16 %v3100
        %v3290 = vunpack.c.l.b16 %v3101
        %v3291 = vunpack.c.h.b16 %v3101
        %v3292 = vunpack.c.l.b16 %v3102
        %v3293 = vunpack.c.h.b16 %v3102
        %v3294 = vunpack.c.l.b16 %v3103
        %v3295 = vunpack.c.h.b16 %v3103
        %v3296 = vunpack.c.l.b16 %v3104
        %v3297 = vunpack.c.h.b16 %v3104
        %v3298 = vunpack.c.l.b16 %v3105
        %v3299 = vunpack.c.h.b16 %v3105
        %v3300 = vunpack.c.l.b16 %v3106
        %v3301 = vunpack.c.h.b16 %v3106
        %v3302 = vunpack.c.l.b16 %v3107
        %v3303 = vunpack.c.h.b16 %v3107
        %v3304 = vunpack.c.l.b16 %v3108
        %v3305 = vunpack.c.h.b16 %v3108
        %v3306 = vunpack.c.l.b16 %v3109
        %v3307 = vunpack.c.h.b16 %v3109
        %v3308 = vunpack.c.l.b16 %v3110
        %v3309 = vunpack.c.h.b16 %v3110
        %v3310 = vunpack.c.l.b16 %v3111
        %v3311 = vunpack.c.h.b16 %v3111
        %v3312 = vunpack.c.l.b16 %v3112
        %v3313 = vunpack.c.h.b16 %v3112
        %v3314 = vunpack.c.l.b16 %v3113
        %v3315 = vunpack.c.h.b16 %v3113
        %v3316 = vunpack.c.l.b16 %v3114
        %v3317 = vunpack.c.h.b16 %v3114
        %v3318 = vunpack.c.l.b16 %v3115
        %v3319 = vunpack.c.h.b16 %v3115
        %v3320 = vpack.c.b16 %v3194, %v3192
        %v3321 = vpack.c.b16 %v3195, %v3193
        %v3322 = vpack.c.b16 %v3198, %v3196
        %v3323 = vpack.c.b16 %v3199, %v3197
        %v3324 = vpack.c.b16 %v3202, %v3200
        %v3325 = vpack.c.b16 %v3203, %v3201
        %v3326 = vpack.c.b16 %v3206, %v3204
        %v3327 = vpack.c.b16 %v3207, %v3205
        %v3328 = vpack.c.b16 %v3210, %v3208
        %v3329 = vpack.c.b16 %v3211, %v3209
        %v3330 = vpack.c.b16 %v3214, %v3212
        %v3331 = vpack.c.b16 %v3215, %v3213
        %v3332 = vpack.c.b16 %v3218, %v3216
        %v3333 = vpack.c.b16 %v3219, %v3217
        %v3334 = vpack.c.b16 %v3222, %v3220
        %v3335 = vpack.c.b16 %v3223, %v3221
        %v3336 = vpack.c.b16 %v3226, %v3224
        %v3337 = vpack.c.b16 %v3227, %v3225
        %v3338 = vpack.c.b16 %v3230, %v3228
        %v3339 = vpack.c.b16 %v3231, %v3229
        %v3340 = vpack.c.b16 %v3234, %v3232
        %v3341 = vpack.c.b16 %v3235, %v3233
        %v3342 = vpack.c.b16 %v3238, %v3236
        %v3343 = vpack.c.b16 %v3239, %v3237
        %v3344 = vpack.c.b16 %v3242, %v3240
        %v3345 = vpack.c.b16 %v3243, %v3241
        %v3346 = vpack.c.b16 %v3246, %v3244
        %v3347 = vpack.c.b16 %v3247, %v3245
        %v3348 = vpack.c.b16 %v3250, %v3248
        %v3349 = vpack.c.b16 %v3251, %v3249
        %v3350 = vpack.c.b16 %v3254, %v3252
        %v3351 = vpack.c.b16 %v3255, %v3253
        %v3352 = vpack.c.b16 %v3258, %v3256
        %v3353 = vpack.c.b16 %v3259, %v3257
        %v3354 = vpack.c.b16 %v3262, %v3260
        %v3355 = vpack.c.b16 %v3263, %v3261
        %v3356 = vpack.c.b16 %v3266, %v3264
        %v3357 = vpack.c.b16 %v3267, %v3265
        %v3358 = vpack.c.b16 %v3270, %v3268
        %v3359 = vpack.c.b16 %v3271, %v3269
        %v3360 = vpack.c.b16 %v3274, %v3272
        %v3361 = vpack.c.b16 %v3275, %v3273
        %v3362 = vpack.c.b16 %v3278, %v3276
        %v3363 = vpack.c.b16 %v3279, %v3277
        %v3364 = vpack.c.b16 %v3282, %v3280
        %v3365 = vpack.c.b16 %v3283, %v3281
        %v3366 = vpack.c.b16 %v3286, %v3284
        %v3367 = vpack.c.b16 %v3287, %v3285
        %v3368 = vpack.c.b16 %v3290, %v3288
        %v3369 = vpack.c.b16 %v3291, %v3289
        %v3370 = vpack.c.b16 %v3294, %v3292
        %v3371 = vpack.c.b16 %v3295, %v3293
        %v3372 = vpack.c.b16 %v3298, %v3296
        %v3373 = vpack.c.b16 %v3299, %v3297
        %v3374 = vpack.c.b16 %v3302, %v3300
        %v3375 = vpack.c.b16 %v3303, %v3301
        %v3376 = vpack.c.b16 %v3306, %v3304
        %v3377 = vpack.c.b16 %v3307, %v3305
        %v3378 = vpack.c.b16 %v3310, %v3308
        %v3379 = vpack.c.b16 %v3311, %v3309
        %v3380 = vpack.c.b16 %v3314, %v3312
        %v3381 = vpack.c.b16 %v3315, %v3313
        %v3382 = vpack.c.b16 %v3318, %v3316
        %v3383 = vpack.c.b16 %v3319, %v3317
        %3448 = vmatprep.subr.bf16.mxu0 %v3321
        %3449 = vmatpush1.bf16.msra.mxu0 %v3320
        %3450 = vmatprep.subr.bf16.mxu0 %v3323
        %3451 = vmatpush1.bf16.msra.mxu0 %v3322
        %3452 = vmatprep.subr.bf16.mxu0 %v3325
        %3453 = vmatpush1.bf16.msra.mxu0 %v3324
        %3454 = vmatprep.subr.bf16.mxu0 %v3327
        %3455 = vmatpush1.bf16.msra.mxu0 %v3326
        %3456 = vmatprep.subr.bf16.mxu0 %v3329
        %3457 = vmatpush1.bf16.msra.mxu0 %v3328
        %3458 = vmatprep.subr.bf16.mxu0 %v3331
        %3459 = vmatpush1.bf16.msra.mxu0 %v3330
        %3460 = vmatprep.subr.bf16.mxu0 %v3333
        %3461 = vmatpush1.bf16.msra.mxu0 %v3332
        %3462 = vmatprep.subr.bf16.mxu0 %v3335
        %3463 = vmatpush1.bf16.msra.mxu0 %v3334
        %3464 = vmatprep.subr.bf16.mxu0 %v3337
        %3465 = vmatpush1.bf16.msra.mxu0 %v3336
        %3466 = vmatprep.subr.bf16.mxu0 %v3339
        %3467 = vmatpush1.bf16.msra.mxu0 %v3338
        %3468 = vmatprep.subr.bf16.mxu0 %v3341
        %3469 = vmatpush1.bf16.msra.mxu0 %v3340
        %3470 = vmatprep.subr.bf16.mxu0 %v3343
        %3471 = vmatpush1.bf16.msra.mxu0 %v3342
        %3472 = vmatprep.subr.bf16.mxu0 %v3345
        %3473 = vmatpush1.bf16.msra.mxu0 %v3344
        %3474 = vmatprep.subr.bf16.mxu0 %v3347
        %3475 = vmatpush1.bf16.msra.mxu0 %v3346
        %3476 = vmatprep.subr.bf16.mxu0 %v3349
        %3477 = vmatpush1.bf16.msra.mxu0 %v3348
        %3478 = vmatprep.subr.bf16.mxu0 %v3351
        %3479 = vmatpush1.bf16.msra.mxu0 %v3350
        %3480 = vmatprep.mubr.bf16.mxu0 %v3045
        %3481 = vmatmul.mubr.bf16.gmra.mrb[0].mxu0 %v3044
        %v3482 = vpop.f32.mrb[0].mxu0
        %v3483 = vadd.f32 %v3121, %v3482
        %v3484 = vpop.f32.mrb[0].mxu0
        %v3485 = vadd.f32 %v3125, %v3484
        %v3486 = vpop.f32.mrb[0].mxu0
        %v3487 = vadd.f32 %v3121, %v3486
        %v3488 = vpop.f32.mrb[0].mxu0
        %v3489 = vadd.f32 %v3125, %v3488
        %3490 = vmatprep.mubr.bf16.mxu0 %v3049
        %3491 = vmatmul.mubr.bf16.gmra.mrb[0].mxu0 %v3048
        %v3492 = vpop.f32.mrb[0].mxu0
        %v3493 = vadd.f32 %v3121, %v3492
        %v3494 = vpop.f32.mrb[0].mxu0
        %v3495 = vadd.f32 %v3125, %v3494
        %v3496 = vpop.f32.mrb[0].mxu0
        %v3497 = vpop.f32.mrb[0].mxu0
        %3498 = vdwg.mxu0
        %3499 = vmatprep.subr.bf16.mxu0 %v3353
        %3500 = vmatpush1.bf16.msra.mxu0 %v3352
        %3501 = vmatprep.subr.bf16.mxu0 %v3355
        %3502 = vmatpush1.bf16.msra.mxu0 %v3354
        %3503 = vmatprep.subr.bf16.mxu0 %v3357
        %3504 = vmatpush1.bf16.msra.mxu0 %v3356
        %3505 = vmatprep.subr.bf16.mxu0 %v3359
        %3506 = vmatpush1.bf16.msra.mxu0 %v3358
        %3507 = vmatprep.subr.bf16.mxu0 %v3361
        %3508 = vmatpush1.bf16.msra.mxu0 %v3360
        %3509 = vmatprep.subr.bf16.mxu0 %v3363
        %3510 = vmatpush1.bf16.msra.mxu0 %v3362
        %3511 = vmatprep.subr.bf16.mxu0 %v3365
        %3512 = vmatpush1.bf16.msra.mxu0 %v3364
        %3513 = vmatprep.subr.bf16.mxu0 %v3367
        %3514 = vmatpush1.bf16.msra.mxu0 %v3366
        %3515 = vmatprep.subr.bf16.mxu0 %v3369
        %3516 = vmatpush1.bf16.msra.mxu0 %v3368
        %3517 = vmatprep.subr.bf16.mxu0 %v3371
        %3518 = vmatpush1.bf16.msra.mxu0 %v3370
        %3519 = vmatprep.subr.bf16.mxu0 %v3373
        %3520 = vmatpush1.bf16.msra.mxu0 %v3372
        %3521 = vmatprep.subr.bf16.mxu0 %v3375
        %3522 = vmatpush1.bf16.msra.mxu0 %v3374
        %3523 = vmatprep.subr.bf16.mxu0 %v3377
        %3524 = vmatpush1.bf16.msra.mxu0 %v3376
        %3525 = vmatprep.subr.bf16.mxu0 %v3379
        %3526 = vmatpush1.bf16.msra.mxu0 %v3378
        %3527 = vmatprep.subr.bf16.mxu0 %v3381
        %3528 = vmatpush1.bf16.msra.mxu0 %v3380
        %3529 = vmatprep.subr.bf16.mxu0 %v3383
        %3530 = vmatpush1.bf16.msra.mxu0 %v3382
        %3531 = vmatprep.mubr.bf16.mxu0 %v3047
        %3532 = vmatmul.mubr.bf16.gmra.mrb[0].mxu0 %v3046
        %v3533 = vpop.f32.mrb[0].mxu0
        %v3534 = vadd.f32 %v3483, %v3533
        %v3535 = vpop.f32.mrb[0].mxu0
        %v3536 = vadd.f32 %v3485, %v3535
        %v3537 = vpop.f32.mrb[0].mxu0
        %v3538 = vadd.f32 %v3487, %v3537
        %v3539 = vpop.f32.mrb[0].mxu0
        %v3540 = vadd.f32 %v3489, %v3539
        %3541 = vmatprep.mubr.bf16.mxu0 %v3051
        %3542 = vmatmul.mubr.bf16.gmra.mrb[0].mxu0 %v3050
        %v3543 = vpop.f32.mrb[0].mxu0
        %v3544 = vadd.f32 %v3493, %v3543
        %v3545 = vpop.f32.mrb[0].mxu0
        %v3546 = vadd.f32 %v3495, %v3545
        %v3547 = vpop.f32.mrb[0].mxu0
        %v3548 = vpop.f32.mrb[0].mxu0
        %3549 = vdwg.mxu0
        %v3550 = vmax.f32 %v3534, 0.0
        %v3551 = vmax.f32 %v3536, 0.0
        %v3552 = vmax.f32 %v3538, 0.0
        %v3553 = vmax.f32 %v3540, 0.0
        %v3554 = vmax.f32 %v3544, 0.0
        %v3555 = vmax.f32 %v3546, 0.0
        %v3556 = vpack.c.bf16 %v3552, %v3550
        %v3557 = vpack.c.bf16 %v3553, %v3551
        %v3558 = vpack.c.bf16 %v3554, %v3554
        %v3559 = vpack.c.bf16 %v3555, %v3555
        %v3560 = vld [vmem:[#allocation11] sm:$0xff]
        %v3561 = vld [vmem:[#allocation11 + $0x8] sm:$0xff]
        %v3562 = vld [vmem:[#allocation11 + $0x10] sm:$0xff]
        %v3563 = vld [vmem:[#allocation11 + $0x18] sm:$0xf]
        %v3564 = vld [vmem:[#allocation11 + $0x1c] sm:$0xff]
        %v3565 = vld [vmem:[#allocation11 + $0x24] sm:$0xff]
        %v3566 = vld [vmem:[#allocation11 + $0x2c] sm:$0xff]
        %v3567 = vld [vmem:[#allocation11 + $0x34] sm:$0xf]
        %v3568 = vld [vmem:[#allocation11 + $0x38] sm:$0xff]
        %v3569 = vld [vmem:[#allocation11 + $0x40] sm:$0xff]
        %v3570 = vld [vmem:[#allocation11 + $0x48] sm:$0xff]
        %v3571 = vld [vmem:[#allocation11 + $0x50] sm:$0xf]
        %v3572 = vld [vmem:[#allocation11 + $0x54] sm:$0xff]
        %v3573 = vld [vmem:[#allocation11 + $0x5c] sm:$0xff]
        %v3574 = vld [vmem:[#allocation11 + $0x64] sm:$0xff]
        %v3575 = vld [vmem:[#allocation11 + $0x6c] sm:$0xf]
        %v3576 = vld [vmem:[#allocation11 + $0x70] sm:$0xff]
        %v3577 = vld [vmem:[#allocation11 + $0x78] sm:$0xff]
        %v3578 = vld [vmem:[#allocation11 + $0x80] sm:$0xff]
        %v3579 = vld [vmem:[#allocation11 + $0x88] sm:$0xf]
        %v3580 = vld [vmem:[#allocation11 + $0x8c] sm:$0xff]
        %v3581 = vld [vmem:[#allocation11 + $0x94] sm:$0xff]
        %v3582 = vld [vmem:[#allocation11 + $0x9c] sm:$0xff]
        %v3583 = vld [vmem:[#allocation11 + $0xa4] sm:$0xf]
        %v3584 = vld [vmem:[#allocation11 + $0xa8] sm:$0xff]
        %v3585 = vld [vmem:[#allocation11 + $0xb0] sm:$0xff]
        %v3586 = vld [vmem:[#allocation11 + $0xb8] sm:$0xff]
        %v3587 = vld [vmem:[#allocation11 + $0xc0] sm:$0xf]
        %v3588 = vld [vmem:[#allocation11 + $0xc4] sm:$0xff]
        %v3589 = vld [vmem:[#allocation11 + $0xcc] sm:$0xff]
        %v3590 = vld [vmem:[#allocation11 + $0xd4] sm:$0xff]
        %v3591 = vld [vmem:[#allocation11 + $0xdc] sm:$0xf]
        %v3592 = vld [vmem:[#allocation11 + $0xe0] sm:$0xff]
        %v3593 = vld [vmem:[#allocation11 + $0xe8] sm:$0xff]
        %v3594 = vld [vmem:[#allocation11 + $0xf0] sm:$0xff]
        %v3595 = vld [vmem:[#allocation11 + $0xf8] sm:$0xf]
        %v3596 = vld [vmem:[#allocation11 + $0xfc] sm:$0xff]
        %v3597 = vld [vmem:[#allocation11 + $0x104] sm:$0xff]
        %v3598 = vld [vmem:[#allocation11 + $0x10c] sm:$0xff]
        %v3599 = vld [vmem:[#allocation11 + $0x114] sm:$0xf]
        %v3600 = vld [vmem:[#allocation11 + $0x118] sm:$0xff]
        %v3601 = vld [vmem:[#allocation11 + $0x120] sm:$0xff]
        %v3602 = vld [vmem:[#allocation11 + $0x128] sm:$0xff]
        %v3603 = vld [vmem:[#allocation11 + $0x130] sm:$0xf]
        %v3604 = vld [vmem:[#allocation11 + $0x134] sm:$0xff]
        %v3605 = vld [vmem:[#allocation11 + $0x13c] sm:$0xff]
        %v3606 = vld [vmem:[#allocation11 + $0x144] sm:$0xff]
        %v3607 = vld [vmem:[#allocation11 + $0x14c] sm:$0xf]
        %v3608 = vld [vmem:[#allocation11 + $0x150] sm:$0xff]
        %v3609 = vld [vmem:[#allocation11 + $0x158] sm:$0xff]
        %v3610 = vld [vmem:[#allocation11 + $0x160] sm:$0xff]
        %v3611 = vld [vmem:[#allocation11 + $0x168] sm:$0xf]
        %v3612 = vld [vmem:[#allocation11 + $0x16c] sm:$0xff]
        %v3613 = vld [vmem:[#allocation11 + $0x174] sm:$0xff]
        %v3614 = vld [vmem:[#allocation11 + $0x17c] sm:$0xff]
        %v3615 = vld [vmem:[#allocation11 + $0x184] sm:$0xf]
        %v3616 = vld [vmem:[#allocation11 + $0x188] sm:$0xff]
        %v3617 = vld [vmem:[#allocation11 + $0x190] sm:$0xff]
        %v3618 = vld [vmem:[#allocation11 + $0x198] sm:$0xff]
        %v3619 = vld [vmem:[#allocation11 + $0x1a0] sm:$0xf]
        %v3620 = vld [vmem:[#allocation11 + $0x1a4] sm:$0xff]
        %v3621 = vld [vmem:[#allocation11 + $0x1ac] sm:$0xff]
        %v3622 = vld [vmem:[#allocation11 + $0x1b4] sm:$0xff]
        %v3623 = vld [vmem:[#allocation11 + $0x1bc] sm:$0xf]
        %v3624 = vld [vmem:[#allocation11 + $0x1c0] sm:$0xff]
        %v3625 = vld [vmem:[#allocation11 + $0x1c8] sm:$0xff]
        %v3626 = vld [vmem:[#allocation11 + $0x1d0] sm:$0xff]
        %v3627 = vld [vmem:[#allocation11 + $0x1d8] sm:$0xf]
        %v3628 = vld [vmem:[#allocation11 + $0x1dc] sm:$0xff]
        %v3629 = vld [vmem:[#allocation11 + $0x1e4] sm:$0xff]
        %v3630 = vld [vmem:[#allocation11 + $0x1ec] sm:$0xff]
        %v3631 = vld [vmem:[#allocation11 + $0x1f4] sm:$0xf]
        %v3632 = vld [vmem:[#allocation11 + $0x1f8] sm:$0xff]
        %v3633 = vld [vmem:[#allocation11 + $0x200] sm:$0xff]
        %v3634 = vld [vmem:[#allocation11 + $0x208] sm:$0xff]
        %v3635 = vld [vmem:[#allocation11 + $0x210] sm:$0xf]
        %v3636 = vld [vmem:[#allocation11 + $0x214] sm:$0xff]
        %v3637 = vld [vmem:[#allocation11 + $0x21c] sm:$0xff]
        %v3638 = vld [vmem:[#allocation11 + $0x224] sm:$0xff]
        %v3639 = vld [vmem:[#allocation11 + $0x22c] sm:$0xf]
        %v3640 = vld [vmem:[#allocation11 + $0x230] sm:$0xff]
        %v3641 = vld [vmem:[#allocation11 + $0x238] sm:$0xff]
        %v3642 = vld [vmem:[#allocation11 + $0x240] sm:$0xff]
        %v3643 = vld [vmem:[#allocation11 + $0x248] sm:$0xf]
        %v3644 = vld [vmem:[#allocation11 + $0x24c] sm:$0xff]
        %v3645 = vld [vmem:[#allocation11 + $0x254] sm:$0xff]
        %v3646 = vld [vmem:[#allocation11 + $0x25c] sm:$0xff]
        %v3647 = vld [vmem:[#allocation11 + $0x264] sm:$0xf]
        %v3648 = vld [vmem:[#allocation11 + $0x268] sm:$0xff]
        %v3649 = vld [vmem:[#allocation11 + $0x270] sm:$0xff]
        %v3650 = vld [vmem:[#allocation11 + $0x278] sm:$0xff]
        %v3651 = vld [vmem:[#allocation11 + $0x280] sm:$0xf]
        %v3652 = vld [vmem:[#allocation11 + $0x284] sm:$0xff]
        %v3653 = vld [vmem:[#allocation11 + $0x28c] sm:$0xff]
        %v3654 = vld [vmem:[#allocation11 + $0x294] sm:$0xff]
        %v3655 = vld [vmem:[#allocation11 + $0x29c] sm:$0xf]
        %v3656 = vld [vmem:[#allocation11 + $0x2a0] sm:$0xff]
        %v3657 = vld [vmem:[#allocation11 + $0x2a8] sm:$0xff]
        %v3658 = vld [vmem:[#allocation11 + $0x2b0] sm:$0xff]
        %v3659 = vld [vmem:[#allocation11 + $0x2b8] sm:$0xf]
        %v3660 = vld [vmem:[#allocation11 + $0x2bc] sm:$0xff]
        %v3661 = vld [vmem:[#allocation11 + $0x2c4] sm:$0xff]
        %v3662 = vld [vmem:[#allocation11 + $0x2cc] sm:$0xff]
        %v3663 = vld [vmem:[#allocation11 + $0x2d4] sm:$0xf]
        %v3664 = vld [vmem:[#allocation11 + $0x2d8] sm:$0xff]
        %v3665 = vld [vmem:[#allocation11 + $0x2e0] sm:$0xff]
        %v3666 = vld [vmem:[#allocation11 + $0x2e8] sm:$0xff]
        %v3667 = vld [vmem:[#allocation11 + $0x2f0] sm:$0xf]
        %v3668 = vld [vmem:[#allocation11 + $0x2f4] sm:$0xff]
        %v3669 = vld [vmem:[#allocation11 + $0x2fc] sm:$0xff]
        %v3670 = vld [vmem:[#allocation11 + $0x304] sm:$0xff]
        %v3671 = vld [vmem:[#allocation11 + $0x30c] sm:$0xf]
        %v3672 = vld [vmem:[#allocation11 + $0x310] sm:$0xff]
        %v3673 = vld [vmem:[#allocation11 + $0x318] sm:$0xff]
        %v3674 = vld [vmem:[#allocation11 + $0x320] sm:$0xff]
        %v3675 = vld [vmem:[#allocation11 + $0x328] sm:$0xf]
        %v3676 = vld [vmem:[#allocation11 + $0x32c] sm:$0xff]
        %v3677 = vld [vmem:[#allocation11 + $0x334] sm:$0xff]
        %v3678 = vld [vmem:[#allocation11 + $0x33c] sm:$0xff]
        %v3679 = vld [vmem:[#allocation11 + $0x344] sm:$0xf]
        %v3680 = vld [vmem:[#allocation11 + $0x348] sm:$0xff]
        %v3681 = vld [vmem:[#allocation11 + $0x350] sm:$0xff]
        %v3682 = vld [vmem:[#allocation11 + $0x358] sm:$0xff]
        %v3683 = vld [vmem:[#allocation11 + $0x360] sm:$0xf]
        %v3684 = vld [vmem:[#allocation11 + $0x364] sm:$0xff]
        %v3685 = vld [vmem:[#allocation11 + $0x36c] sm:$0xff]
        %v3686 = vld [vmem:[#allocation11 + $0x374] sm:$0xff]
        %v3687 = vld [vmem:[#allocation11 + $0x37c] sm:$0xf]
        %v3688 = vld [vmem:[%s8] sm:$0xff]
        %v3690 = vlaneseq
        %v3691 = vshrl.u32 %v3690, 7
        %v3692 = vsub.s32 0, %v3691
        %v3693 = vrot.slane %v3688, %v3692
        %v3694 = vlaneseq
        %v3695 = vshrl.u32 %v3694, 7
        %v3696 = vsub.s32 1, %v3695
        %v3697 = vrot.slane %v3688, %v3696
        %v3698 = vlaneseq
        %v3699 = vshrl.u32 %v3698, 7
        %v3700 = vsub.s32 2, %v3699
        %v3701 = vrot.slane %v3688, %v3700
        %v3702 = vlaneseq
        %v3703 = vshrl.u32 %v3702, 7
        %v3704 = vsub.s32 3, %v3703
        %v3705 = vrot.slane %v3688, %v3704
        %v3706 = vlaneseq
        %v3707 = vshrl.u32 %v3706, 7
        %v3708 = vsub.s32 4, %v3707
        %v3709 = vrot.slane %v3688, %v3708
        %v3710 = vlaneseq
        %v3711 = vshrl.u32 %v3710, 7
        %v3712 = vsub.s32 5, %v3711
        %v3713 = vrot.slane %v3688, %v3712
        %v3714 = vlaneseq
        %v3715 = vshrl.u32 %v3714, 7
        %v3716 = vsub.s32 6, %v3715
        %v3717 = vrot.slane %v3688, %v3716
        %v3853 = vunpack.c.l.b16 %v3560
        %v3854 = vunpack.c.h.b16 %v3560
        %v3855 = vunpack.c.l.b16 %v3561
        %v3856 = vunpack.c.h.b16 %v3561
        %v3857 = vunpack.c.l.b16 %v3562
        %v3858 = vunpack.c.h.b16 %v3562
        %v3859 = vunpack.c.l.b16 %v3563
        %v3860 = vunpack.c.l.b16 %v3564
        %v3861 = vunpack.c.h.b16 %v3564
        %v3862 = vunpack.c.l.b16 %v3565
        %v3863 = vunpack.c.h.b16 %v3565
        %v3864 = vunpack.c.l.b16 %v3566
        %v3865 = vunpack.c.h.b16 %v3566
        %v3866 = vunpack.c.l.b16 %v3567
        %v3867 = vunpack.c.l.b16 %v3568
        %v3868 = vunpack.c.h.b16 %v3568
        %v3869 = vunpack.c.l.b16 %v3569
        %v3870 = vunpack.c.h.b16 %v3569
        %v3871 = vunpack.c.l.b16 %v3570
        %v3872 = vunpack.c.h.b16 %v3570
        %v3873 = vunpack.c.l.b16 %v3571
        %v3874 = vunpack.c.l.b16 %v3572
        %v3875 = vunpack.c.h.b16 %v3572
        %v3876 = vunpack.c.l.b16 %v3573
        %v3877 = vunpack.c.h.b16 %v3573
        %v3878 = vunpack.c.l.b16 %v3574
        %v3879 = vunpack.c.h.b16 %v3574
        %v3880 = vunpack.c.l.b16 %v3575
        %v3881 = vunpack.c.l.b16 %v3576
        %v3882 = vunpack.c.h.b16 %v3576
        %v3883 = vunpack.c.l.b16 %v3577
        %v3884 = vunpack.c.h.b16 %v3577
        %v3885 = vunpack.c.l.b16 %v3578
        %v3886 = vunpack.c.h.b16 %v3578
        %v3887 = vunpack.c.l.b16 %v3579
        %v3888 = vunpack.c.l.b16 %v3580
        %v3889 = vunpack.c.h.b16 %v3580
        %v3890 = vunpack.c.l.b16 %v3581
        %v3891 = vunpack.c.h.b16 %v3581
        %v3892 = vunpack.c.l.b16 %v3582
        %v3893 = vunpack.c.h.b16 %v3582
        %v3894 = vunpack.c.l.b16 %v3583
        %v3895 = vunpack.c.l.b16 %v3584
        %v3896 = vunpack.c.h.b16 %v3584
        %v3897 = vunpack.c.l.b16 %v3585
        %v3898 = vunpack.c.h.b16 %v3585
        %v3899 = vunpack.c.l.b16 %v3586
        %v3900 = vunpack.c.h.b16 %v3586
        %v3901 = vunpack.c.l.b16 %v3587
        %v3902 = vunpack.c.l.b16 %v3588
        %v3903 = vunpack.c.h.b16 %v3588
        %v3904 = vunpack.c.l.b16 %v3589
        %v3905 = vunpack.c.h.b16 %v3589
        %v3906 = vunpack.c.l.b16 %v3590
        %v3907 = vunpack.c.h.b16 %v3590
        %v3908 = vunpack.c.l.b16 %v3591
        %v3909 = vunpack.c.l.b16 %v3592
        %v3910 = vunpack.c.h.b16 %v3592
        %v3911 = vunpack.c.l.b16 %v3593
        %v3912 = vunpack.c.h.b16 %v3593
        %v3913 = vunpack.c.l.b16 %v3594
        %v3914 = vunpack.c.h.b16 %v3594
        %v3915 = vunpack.c.l.b16 %v3595
        %v3916 = vunpack.c.l.b16 %v3596
        %v3917 = vunpack.c.h.b16 %v3596
        %v3918 = vunpack.c.l.b16 %v3597
        %v3919 = vunpack.c.h.b16 %v3597
        %v3920 = vunpack.c.l.b16 %v3598
        %v3921 = vunpack.c.h.b16 %v3598
        %v3922 = vunpack.c.l.b16 %v3599
        %v3923 = vunpack.c.l.b16 %v3600
        %v3924 = vunpack.c.h.b16 %v3600
        %v3925 = vunpack.c.l.b16 %v3601
        %v3926 = vunpack.c.h.b16 %v3601
        %v3927 = vunpack.c.l.b16 %v3602
        %v3928 = vunpack.c.h.b16 %v3602
        %v3929 = vunpack.c.l.b16 %v3603
        %v3930 = vunpack.c.l.b16 %v3604
        %v3931 = vunpack.c.h.b16 %v3604
        %v3932 = vunpack.c.l.b16 %v3605
        %v3933 = vunpack.c.h.b16 %v3605
        %v3934 = vunpack.c.l.b16 %v3606
        %v3935 = vunpack.c.h.b16 %v3606
        %v3936 = vunpack.c.l.b16 %v3607
        %v3937 = vunpack.c.l.b16 %v3608
        %v3938 = vunpack.c.h.b16 %v3608
        %v3939 = vunpack.c.l.b16 %v3609
        %v3940 = vunpack.c.h.b16 %v3609
        %v3941 = vunpack.c.l.b16 %v3610
        %v3942 = vunpack.c.h.b16 %v3610
        %v3943 = vunpack.c.l.b16 %v3611
        %v3944 = vunpack.c.l.b16 %v3612
        %v3945 = vunpack.c.h.b16 %v3612
        %v3946 = vunpack.c.l.b16 %v3613
        %v3947 = vunpack.c.h.b16 %v3613
        %v3948 = vunpack.c.l.b16 %v3614
        %v3949 = vunpack.c.h.b16 %v3614
        %v3950 = vunpack.c.l.b16 %v3615
        %v3951 = vunpack.c.l.b16 %v3616
        %v3952 = vunpack.c.h.b16 %v3616
        %v3953 = vunpack.c.l.b16 %v3617
        %v3954 = vunpack.c.h.b16 %v3617
        %v3955 = vunpack.c.l.b16 %v3618
        %v3956 = vunpack.c.h.b16 %v3618
        %v3957 = vunpack.c.l.b16 %v3619
        %v3958 = vunpack.c.l.b16 %v3620
        %v3959 = vunpack.c.h.b16 %v3620
        %v3960 = vunpack.c.l.b16 %v3621
        %v3961 = vunpack.c.h.b16 %v3621
        %v3962 = vunpack.c.l.b16 %v3622
        %v3963 = vunpack.c.h.b16 %v3622
        %v3964 = vunpack.c.l.b16 %v3623
        %v3965 = vunpack.c.l.b16 %v3624
        %v3966 = vunpack.c.h.b16 %v3624
        %v3967 = vunpack.c.l.b16 %v3625
        %v3968 = vunpack.c.h.b16 %v3625
        %v3969 = vunpack.c.l.b16 %v3626
        %v3970 = vunpack.c.h.b16 %v3626
        %v3971 = vunpack.c.l.b16 %v3627
        %v3972 = vunpack.c.l.b16 %v3628
        %v3973 = vunpack.c.h.b16 %v3628
        %v3974 = vunpack.c.l.b16 %v3629
        %v3975 = vunpack.c.h.b16 %v3629
        %v3976 = vunpack.c.l.b16 %v3630
        %v3977 = vunpack.c.h.b16 %v3630
        %v3978 = vunpack.c.l.b16 %v3631
        %v3979 = vunpack.c.l.b16 %v3632
        %v3980 = vunpack.c.h.b16 %v3632
        %v3981 = vunpack.c.l.b16 %v3633
        %v3982 = vunpack.c.h.b16 %v3633
        %v3983 = vunpack.c.l.b16 %v3634
        %v3984 = vunpack.c.h.b16 %v3634
        %v3985 = vunpack.c.l.b16 %v3635
        %v3986 = vunpack.c.l.b16 %v3636
        %v3987 = vunpack.c.h.b16 %v3636
        %v3988 = vunpack.c.l.b16 %v3637
        %v3989 = vunpack.c.h.b16 %v3637
        %v3990 = vunpack.c.l.b16 %v3638
        %v3991 = vunpack.c.h.b16 %v3638
        %v3992 = vunpack.c.l.b16 %v3639
        %v3993 = vunpack.c.l.b16 %v3640
        %v3994 = vunpack.c.h.b16 %v3640
        %v3995 = vunpack.c.l.b16 %v3641
        %v3996 = vunpack.c.h.b16 %v3641
        %v3997 = vunpack.c.l.b16 %v3642
        %v3998 = vunpack.c.h.b16 %v3642
        %v3999 = vunpack.c.l.b16 %v3643
        %v4000 = vunpack.c.l.b16 %v3644
        %v4001 = vunpack.c.h.b16 %v3644
        %v4002 = vunpack.c.l.b16 %v3645
        %v4003 = vunpack.c.h.b16 %v3645
        %v4004 = vunpack.c.l.b16 %v3646
        %v4005 = vunpack.c.h.b16 %v3646
        %v4006 = vunpack.c.l.b16 %v3647
        %v4007 = vunpack.c.l.b16 %v3648
        %v4008 = vunpack.c.h.b16 %v3648
        %v4009 = vunpack.c.l.b16 %v3649
        %v4010 = vunpack.c.h.b16 %v3649
        %v4011 = vunpack.c.l.b16 %v3650
        %v4012 = vunpack.c.h.b16 %v3650
        %v4013 = vunpack.c.l.b16 %v3651
        %v4014 = vunpack.c.l.b16 %v3652
        %v4015 = vunpack.c.h.b16 %v3652
        %v4016 = vunpack.c.l.b16 %v3653
        %v4017 = vunpack.c.h.b16 %v3653
        %v4018 = vunpack.c.l.b16 %v3654
        %v4019 = vunpack.c.h.b16 %v3654
        %v4020 = vunpack.c.l.b16 %v3655
        %v4021 = vunpack.c.l.b16 %v3656
        %v4022 = vunpack.c.h.b16 %v3656
        %v4023 = vunpack.c.l.b16 %v3657
        %v4024 = vunpack.c.h.b16 %v3657
        %v4025 = vunpack.c.l.b16 %v3658
        %v4026 = vunpack.c.h.b16 %v3658
        %v4027 = vunpack.c.l.b16 %v3659
        %v4028 = vunpack.c.l.b16 %v3660
        %v4029 = vunpack.c.h.b16 %v3660
        %v4030 = vunpack.c.l.b16 %v3661
        %v4031 = vunpack.c.h.b16 %v3661
        %v4032 = vunpack.c.l.b16 %v3662
        %v4033 = vunpack.c.h.b16 %v3662
        %v4034 = vunpack.c.l.b16 %v3663
        %v4035 = vunpack.c.l.b16 %v3664
        %v4036 = vunpack.c.h.b16 %v3664
        %v4037 = vunpack.c.l.b16 %v3665
        %v4038 = vunpack.c.h.b16 %v3665
        %v4039 = vunpack.c.l.b16 %v3666
        %v4040 = vunpack.c.h.b16 %v3666
        %v4041 = vunpack.c.l.b16 %v3667
        %v4042 = vunpack.c.l.b16 %v3668
        %v4043 = vunpack.c.h.b16 %v3668
        %v4044 = vunpack.c.l.b16 %v3669
        %v4045 = vunpack.c.h.b16 %v3669
        %v4046 = vunpack.c.l.b16 %v3670
        %v4047 = vunpack.c.h.b16 %v3670
        %v4048 = vunpack.c.l.b16 %v3671
        %v4049 = vunpack.c.l.b16 %v3672
        %v4050 = vunpack.c.h.b16 %v3672
        %v4051 = vunpack.c.l.b16 %v3673
        %v4052 = vunpack.c.h.b16 %v3673
        %v4053 = vunpack.c.l.b16 %v3674
        %v4054 = vunpack.c.h.b16 %v3674
        %v4055 = vunpack.c.l.b16 %v3675
        %v4056 = vunpack.c.l.b16 %v3676
        %v4057 = vunpack.c.h.b16 %v3676
        %v4058 = vunpack.c.l.b16 %v3677
        %v4059 = vunpack.c.h.b16 %v3677
        %v4060 = vunpack.c.l.b16 %v3678
        %v4061 = vunpack.c.h.b16 %v3678
        %v4062 = vunpack.c.l.b16 %v3679
        %v4063 = vunpack.c.l.b16 %v3680
        %v4064 = vunpack.c.h.b16 %v3680
        %v4065 = vunpack.c.l.b16 %v3681
        %v4066 = vunpack.c.h.b16 %v3681
        %v4067 = vunpack.c.l.b16 %v3682
        %v4068 = vunpack.c.h.b16 %v3682
        %v4069 = vunpack.c.l.b16 %v3683
        %v4070 = vunpack.c.l.b16 %v3684
        %v4071 = vunpack.c.h.b16 %v3684
        %v4072 = vunpack.c.l.b16 %v3685
        %v4073 = vunpack.c.h.b16 %v3685
        %v4074 = vunpack.c.l.b16 %v3686
        %v4075 = vunpack.c.h.b16 %v3686
        %v4076 = vunpack.c.l.b16 %v3687
        %v4077 = vpack.c.b16 %v3860, %v3853
        %v4078 = vpack.c.b16 %v3861, %v3854
        %v4079 = vpack.c.b16 %v3862, %v3855
        %v4080 = vpack.c.b16 %v3863, %v3856
        %v4081 = vpack.c.b16 %v3864, %v3857
        %v4082 = vpack.c.b16 %v3865, %v3858
        %v4083 = vpack.c.b16 %v3866, %v3859
        %v4084 = vpack.c.b16 %v3874, %v3867
        %v4085 = vpack.c.b16 %v3875, %v3868
        %v4086 = vpack.c.b16 %v3876, %v3869
        %v4087 = vpack.c.b16 %v3877, %v3870
        %v4088 = vpack.c.b16 %v3878, %v3871
        %v4089 = vpack.c.b16 %v3879, %v3872
        %v4090 = vpack.c.b16 %v3880, %v3873
        %v4091 = vpack.c.b16 %v3888, %v3881
        %v4092 = vpack.c.b16 %v3889, %v3882
        %v4093 = vpack.c.b16 %v3890, %v3883
        %v4094 = vpack.c.b16 %v3891, %v3884
        %v4095 = vpack.c.b16 %v3892, %v3885
        %v4096 = vpack.c.b16 %v3893, %v3886
        %v4097 = vpack.c.b16 %v3894, %v3887
        %v4098 = vpack.c.b16 %v3902, %v3895
        %v4099 = vpack.c.b16 %v3903, %v3896
        %v4100 = vpack.c.b16 %v3904, %v3897
        %v4101 = vpack.c.b16 %v3905, %v3898
        %v4102 = vpack.c.b16 %v3906, %v3899
        %v4103 = vpack.c.b16 %v3907, %v3900
        %v4104 = vpack.c.b16 %v3908, %v3901
        %v4105 = vpack.c.b16 %v3916, %v3909
        %v4106 = vpack.c.b16 %v3917, %v3910
        %v4107 = vpack.c.b16 %v3918, %v3911
        %v4108 = vpack.c.b16 %v3919, %v3912
        %v4109 = vpack.c.b16 %v3920, %v3913
        %v4110 = vpack.c.b16 %v3921, %v3914
        %v4111 = vpack.c.b16 %v3922, %v3915
        %v4112 = vpack.c.b16 %v3930, %v3923
        %v4113 = vpack.c.b16 %v3931, %v3924
        %v4114 = vpack.c.b16 %v3932, %v3925
        %v4115 = vpack.c.b16 %v3933, %v3926
        %v4116 = vpack.c.b16 %v3934, %v3927
        %v4117 = vpack.c.b16 %v3935, %v3928
        %v4118 = vpack.c.b16 %v3936, %v3929
        %v4119 = vpack.c.b16 %v3944, %v3937
        %v4120 = vpack.c.b16 %v3945, %v3938
        %v4121 = vpack.c.b16 %v3946, %v3939
        %v4122 = vpack.c.b16 %v3947, %v3940
        %v4123 = vpack.c.b16 %v3948, %v3941
        %v4124 = vpack.c.b16 %v3949, %v3942
        %v4125 = vpack.c.b16 %v3950, %v3943
        %v4126 = vpack.c.b16 %v3958, %v3951
        %v4127 = vpack.c.b16 %v3959, %v3952
        %v4128 = vpack.c.b16 %v3960, %v3953
        %v4129 = vpack.c.b16 %v3961, %v3954
        %v4130 = vpack.c.b16 %v3962, %v3955
        %v4131 = vpack.c.b16 %v3963, %v3956
        %v4132 = vpack.c.b16 %v3964, %v3957
        %v4133 = vpack.c.b16 %v3972, %v3965
        %v4134 = vpack.c.b16 %v3973, %v3966
        %v4135 = vpack.c.b16 %v3974, %v3967
        %v4136 = vpack.c.b16 %v3975, %v3968
        %v4137 = vpack.c.b16 %v3976, %v3969
        %v4138 = vpack.c.b16 %v3977, %v3970
        %v4139 = vpack.c.b16 %v3978, %v3971
        %v4140 = vpack.c.b16 %v3986, %v3979
        %v4141 = vpack.c.b16 %v3987, %v3980
        %v4142 = vpack.c.b16 %v3988, %v3981
        %v4143 = vpack.c.b16 %v3989, %v3982
        %v4144 = vpack.c.b16 %v3990, %v3983
        %v4145 = vpack.c.b16 %v3991, %v3984
        %v4146 = vpack.c.b16 %v3992, %v3985
        %v4147 = vpack.c.b16 %v4000, %v3993
        %v4148 = vpack.c.b16 %v4001, %v3994
        %v4149 = vpack.c.b16 %v4002, %v3995
        %v4150 = vpack.c.b16 %v4003, %v3996
        %v4151 = vpack.c.b16 %v4004, %v3997
        %v4152 = vpack.c.b16 %v4005, %v3998
        %v4153 = vpack.c.b16 %v4006, %v3999
        %v4154 = vpack.c.b16 %v4014, %v4007
        %v4155 = vpack.c.b16 %v4015, %v4008
        %v4156 = vpack.c.b16 %v4016, %v4009
        %v4157 = vpack.c.b16 %v4017, %v4010
        %v4158 = vpack.c.b16 %v4018, %v4011
        %v4159 = vpack.c.b16 %v4019, %v4012
        %v4160 = vpack.c.b16 %v4020, %v4013
        %v4161 = vpack.c.b16 %v4028, %v4021
        %v4162 = vpack.c.b16 %v4029, %v4022
        %v4163 = vpack.c.b16 %v4030, %v4023
        %v4164 = vpack.c.b16 %v4031, %v4024
        %v4165 = vpack.c.b16 %v4032, %v4025
        %v4166 = vpack.c.b16 %v4033, %v4026
        %v4167 = vpack.c.b16 %v4034, %v4027
        %v4168 = vpack.c.b16 %v4042, %v4035
        %v4169 = vpack.c.b16 %v4043, %v4036
        %v4170 = vpack.c.b16 %v4044, %v4037
        %v4171 = vpack.c.b16 %v4045, %v4038
        %v4172 = vpack.c.b16 %v4046, %v4039
        %v4173 = vpack.c.b16 %v4047, %v4040
        %v4174 = vpack.c.b16 %v4048, %v4041
        %v4175 = vpack.c.b16 %v4056, %v4049
        %v4176 = vpack.c.b16 %v4057, %v4050
        %v4177 = vpack.c.b16 %v4058, %v4051
        %v4178 = vpack.c.b16 %v4059, %v4052
        %v4179 = vpack.c.b16 %v4060, %v4053
        %v4180 = vpack.c.b16 %v4061, %v4054
        %v4181 = vpack.c.b16 %v4062, %v4055
        %v4182 = vpack.c.b16 %v4070, %v4063
        %v4183 = vpack.c.b16 %v4071, %v4064
        %v4184 = vpack.c.b16 %v4072, %v4065
        %v4185 = vpack.c.b16 %v4073, %v4066
        %v4186 = vpack.c.b16 %v4074, %v4067
        %v4187 = vpack.c.b16 %v4075, %v4068
        %v4188 = vpack.c.b16 %v4076, %v4069
        %4301 = vmatprep.subr.bf16.mxu0 %v4078
        %4302 = vmatpush1.bf16.msra.mxu0 %v4077
        %4303 = vmatprep.subr.bf16.mxu0 %v4085
        %4304 = vmatpush1.bf16.msra.mxu0 %v4084
        %4305 = vmatprep.subr.bf16.mxu0 %v4092
        %4306 = vmatpush1.bf16.msra.mxu0 %v4091
        %4307 = vmatprep.subr.bf16.mxu0 %v4099
        %4308 = vmatpush1.bf16.msra.mxu0 %v4098
        %4309 = vmatprep.subr.bf16.mxu0 %v4106
        %4310 = vmatpush1.bf16.msra.mxu0 %v4105
        %4311 = vmatprep.subr.bf16.mxu0 %v4113
        %4312 = vmatpush1.bf16.msra.mxu0 %v4112
        %4313 = vmatprep.subr.bf16.mxu0 %v4120
        %4314 = vmatpush1.bf16.msra.mxu0 %v4119
        %4315 = vmatprep.subr.bf16.mxu0 %v4127
        %4316 = vmatpush1.bf16.msra.mxu0 %v4126
        %4317 = vmatprep.subr.bf16.mxu0 %v4134
        %4318 = vmatpush1.bf16.msra.mxu0 %v4133
        %4319 = vmatprep.subr.bf16.mxu0 %v4141
        %4320 = vmatpush1.bf16.msra.mxu0 %v4140
        %4321 = vmatprep.subr.bf16.mxu0 %v4148
        %4322 = vmatpush1.bf16.msra.mxu0 %v4147
        %4323 = vmatprep.subr.bf16.mxu0 %v4155
        %4324 = vmatpush1.bf16.msra.mxu0 %v4154
        %4325 = vmatprep.subr.bf16.mxu0 %v4162
        %4326 = vmatpush1.bf16.msra.mxu0 %v4161
        %4327 = vmatprep.subr.bf16.mxu0 %v4169
        %4328 = vmatpush1.bf16.msra.mxu0 %v4168
        %4329 = vmatprep.subr.bf16.mxu0 %v4176
        %4330 = vmatpush1.bf16.msra.mxu0 %v4175
        %4331 = vmatprep.subr.bf16.mxu0 %v4183
        %4332 = vmatpush1.bf16.msra.mxu0 %v4182
        %4333 = vmatprep.mubr.bf16.mxu0 %v3557
        %4334 = vmatmul.mubr.bf16.gmra.mrb[0].mxu0 %v3556
        %v4335 = vpop.f32.mrb[0].mxu0
        %v4336 = vadd.f32 %v3693, %v4335
        %v4337 = vpop.f32.mrb[0].mxu0
        %v4338 = vadd.f32 %v3697, %v4337
        %v4339 = vpop.f32.mrb[0].mxu0
        %v4340 = vadd.f32 %v3693, %v4339
        %v4341 = vpop.f32.mrb[0].mxu0
        %v4342 = vadd.f32 %v3697, %v4341
        %4343 = vmatprep.mubr.bf16.mxu0 %v3559
        %4344 = vmatmul.mubr.bf16.gmra.mrb[0].mxu0 %v3558
        %v4345 = vpop.f32.mrb[0].mxu0
        %v4346 = vadd.f32 %v3693, %v4345
        %v4347 = vpop.f32.mrb[0].mxu0
        %v4348 = vadd.f32 %v3697, %v4347
        %v4349 = vpop.f32.mrb[0].mxu0
        %v4350 = vpop.f32.mrb[0].mxu0
        %4351 = vdwg.mxu0
        %4352 = vmatprep.subr.bf16.mxu0 %v4080
        %4353 = vmatpush1.bf16.msra.mxu0 %v4079
        %4354 = vmatprep.subr.bf16.mxu0 %v4087
        %4355 = vmatpush1.bf16.msra.mxu0 %v4086
        %4356 = vmatprep.subr.bf16.mxu0 %v4094
        %4357 = vmatpush1.bf16.msra.mxu0 %v4093
        %4358 = vmatprep.subr.bf16.mxu0 %v4101
        %4359 = vmatpush1.bf16.msra.mxu0 %v4100
        %4360 = vmatprep.subr.bf16.mxu0 %v4108
        %4361 = vmatpush1.bf16.msra.mxu0 %v4107
        %4362 = vmatprep.subr.bf16.mxu0 %v4115
        %4363 = vmatpush1.bf16.msra.mxu0 %v4114
        %4364 = vmatprep.subr.bf16.mxu0 %v4122
        %4365 = vmatpush1.bf16.msra.mxu0 %v4121
        %4366 = vmatprep.subr.bf16.mxu0 %v4129
        %4367 = vmatpush1.bf16.msra.mxu0 %v4128
        %4368 = vmatprep.subr.bf16.mxu0 %v4136
        %4369 = vmatpush1.bf16.msra.mxu0 %v4135
        %4370 = vmatprep.subr.bf16.mxu0 %v4143
        %4371 = vmatpush1.bf16.msra.mxu0 %v4142
        %4372 = vmatprep.subr.bf16.mxu0 %v4150
        %4373 = vmatpush1.bf16.msra.mxu0 %v4149
        %4374 = vmatprep.subr.bf16.mxu0 %v4157
        %4375 = vmatpush1.bf16.msra.mxu0 %v4156
        %4376 = vmatprep.subr.bf16.mxu0 %v4164
        %4377 = vmatpush1.bf16.msra.mxu0 %v4163
        %4378 = vmatprep.subr.bf16.mxu0 %v4171
        %4379 = vmatpush1.bf16.msra.mxu0 %v4170
        %4380 = vmatprep.subr.bf16.mxu0 %v4178
        %4381 = vmatpush1.bf16.msra.mxu0 %v4177
        %4382 = vmatprep.subr.bf16.mxu0 %v4185
        %4383 = vmatpush1.bf16.msra.mxu0 %v4184
        %4384 = vmatprep.mubr.bf16.mxu0 %v3557
        %4385 = vmatmul.mubr.bf16.gmra.mrb[0].mxu0 %v3556
        %v4386 = vpop.f32.mrb[0].mxu0
        %v4387 = vadd.f32 %v3701, %v4386
        %v4388 = vpop.f32.mrb[0].mxu0
        %v4389 = vadd.f32 %v3705, %v4388
        %v4390 = vpop.f32.mrb[0].mxu0
        %v4391 = vadd.f32 %v3701, %v4390
        %v4392 = vpop.f32.mrb[0].mxu0
        %v4393 = vadd.f32 %v3705, %v4392
        %4394 = vmatprep.mubr.bf16.mxu0 %v3559
        %4395 = vmatmul.mubr.bf16.gmra.mrb[0].mxu0 %v3558
        %v4396 = vpop.f32.mrb[0].mxu0
        %v4397 = vadd.f32 %v3701, %v4396
        %v4398 = vpop.f32.mrb[0].mxu0
        %v4399 = vadd.f32 %v3705, %v4398
        %v4400 = vpop.f32.mrb[0].mxu0
        %v4401 = vpop.f32.mrb[0].mxu0
        %4402 = vdwg.mxu0
        %4403 = vmatprep.subr.bf16.mxu0 %v4082
        %4404 = vmatpush1.bf16.msra.mxu0 %v4081
        %4405 = vmatprep.subr.bf16.mxu0 %v4089
        %4406 = vmatpush1.bf16.msra.mxu0 %v4088
        %4407 = vmatprep.subr.bf16.mxu0 %v4096
        %4408 = vmatpush1.bf16.msra.mxu0 %v4095
        %4409 = vmatprep.subr.bf16.mxu0 %v4103
        %4410 = vmatpush1.bf16.msra.mxu0 %v4102
        %4411 = vmatprep.subr.bf16.mxu0 %v4110
        %4412 = vmatpush1.bf16.msra.mxu0 %v4109
        %4413 = vmatprep.subr.bf16.mxu0 %v4117
        %4414 = vmatpush1.bf16.msra.mxu0 %v4116
        %4415 = vmatprep.subr.bf16.mxu0 %v4124
        %4416 = vmatpush1.bf16.msra.mxu0 %v4123
        %4417 = vmatprep.subr.bf16.mxu0 %v4131
        %4418 = vmatpush1.bf16.msra.mxu0 %v4130
        %4419 = vmatprep.subr.bf16.mxu0 %v4138
        %4420 = vmatpush1.bf16.msra.mxu0 %v4137
        %4421 = vmatprep.subr.bf16.mxu0 %v4145
        %4422 = vmatpush1.bf16.msra.mxu0 %v4144
        %4423 = vmatprep.subr.bf16.mxu0 %v4152
        %4424 = vmatpush1.bf16.msra.mxu0 %v4151
        %4425 = vmatprep.subr.bf16.mxu0 %v4159
        %4426 = vmatpush1.bf16.msra.mxu0 %v4158
        %4427 = vmatprep.subr.bf16.mxu0 %v4166
        %4428 = vmatpush1.bf16.msra.mxu0 %v4165
        %4429 = vmatprep.subr.bf16.mxu0 %v4173
        %4430 = vmatpush1.bf16.msra.mxu0 %v4172
        %4431 = vmatprep.subr.bf16.mxu0 %v4180
        %4432 = vmatpush1.bf16.msra.mxu0 %v4179
        %4433 = vmatprep.subr.bf16.mxu0 %v4187
        %4434 = vmatpush1.bf16.msra.mxu0 %v4186
        %4435 = vmatprep.mubr.bf16.mxu0 %v3557
        %4436 = vmatmul.mubr.bf16.gmra.mrb[0].mxu0 %v3556
        %v4437 = vpop.f32.mrb[0].mxu0
        %v4438 = vadd.f32 %v3709, %v4437
        %v4439 = vpop.f32.mrb[0].mxu0
        %v4440 = vadd.f32 %v3713, %v4439
        %v4441 = vpop.f32.mrb[0].mxu0
        %v4442 = vadd.f32 %v3709, %v4441
        %v4443 = vpop.f32.mrb[0].mxu0
        %v4444 = vadd.f32 %v3713, %v4443
        %4445 = vmatprep.mubr.bf16.mxu0 %v3559
        %4446 = vmatmul.mubr.bf16.gmra.mrb[0].mxu0 %v3558
        %v4447 = vpop.f32.mrb[0].mxu0
        %v4448 = vadd.f32 %v3709, %v4447
        %v4449 = vpop.f32.mrb[0].mxu0
        %v4450 = vadd.f32 %v3713, %v4449
        %v4451 = vpop.f32.mrb[0].mxu0
        %v4452 = vpop.f32.mrb[0].mxu0
        %4453 = vdwg.mxu0
        %4454 = vmatprep.subr.bf16.mxu0 0
        %4455 = vmatpush1.bf16.msra.mxu0 %v4083
        %4456 = vmatprep.subr.bf16.mxu0 0
        %4457 = vmatpush1.bf16.msra.mxu0 %v4090
        %4458 = vmatprep.subr.bf16.mxu0 0
        %4459 = vmatpush1.bf16.msra.mxu0 %v4097
        %4460 = vmatprep.subr.bf16.mxu0 0
        %4461 = vmatpush1.bf16.msra.mxu0 %v4104
        %4462 = vmatprep.subr.bf16.mxu0 0
        %4463 = vmatpush1.bf16.msra.mxu0 %v4111
        %4464 = vmatprep.subr.bf16.mxu0 0
        %4465 = vmatpush1.bf16.msra.mxu0 %v4118
        %4466 = vmatprep.subr.bf16.mxu0 0
        %4467 = vmatpush1.bf16.msra.mxu0 %v4125
        %4468 = vmatprep.subr.bf16.mxu0 0
        %4469 = vmatpush1.bf16.msra.mxu0 %v4132
        %4470 = vmatprep.subr.bf16.mxu0 0
        %4471 = vmatpush1.bf16.msra.mxu0 %v4139
        %4472 = vmatprep.subr.bf16.mxu0 0
        %4473 = vmatpush1.bf16.msra.mxu0 %v4146
        %4474 = vmatprep.subr.bf16.mxu0 0
        %4475 = vmatpush1.bf16.msra.mxu0 %v4153
        %4476 = vmatprep.subr.bf16.mxu0 0
        %4477 = vmatpush1.bf16.msra.mxu0 %v4160
        %4478 = vmatprep.subr.bf16.mxu0 0
        %4479 = vmatpush1.bf16.msra.mxu0 %v4167
        %4480 = vmatprep.subr.bf16.mxu0 0
        %4481 = vmatpush1.bf16.msra.mxu0 %v4174
        %4482 = vmatprep.subr.bf16.mxu0 0
        %4483 = vmatpush1.bf16.msra.mxu0 %v4181
        %4484 = vmatprep.subr.bf16.mxu0 0
        %4485 = vmatpush1.bf16.msra.mxu0 %v4188
        %4486 = vmatprep.mubr.bf16.mxu0 %v3557
        %4487 = vmatmul.mubr.bf16.gmra.mrb[0].mxu0 %v3556
        %v4488 = vpop.f32.mrb[0].mxu0
        %v4489 = vadd.f32 %v3717, %v4488
        %v4490 = vpop.f32.mrb[0].mxu0
        %v4491 = vpop.f32.mrb[0].mxu0
        %v4492 = vadd.f32 %v3717, %v4491
        %v4493 = vpop.f32.mrb[0].mxu0
        %4494 = vmatprep.mubr.bf16.mxu0 %v3559
        %4495 = vmatmul.mubr.bf16.gmra.mrb[0].mxu0 %v3558
        %v4496 = vpop.f32.mrb[0].mxu0
        %v4497 = vadd.f32 %v3717, %v4496
        %v4498 = vpop.f32.mrb[0].mxu0
        %v4499 = vpop.f32.mrb[0].mxu0
        %v4500 = vpop.f32.mrb[0].mxu0
        %4501 = vdwg.mxu0
        %v4502 = vtanh.pop %v4336
        %v4503 = vtanh.pop %v4338
        %v4504 = vtanh.pop %v4387
        %v4505 = vtanh.pop %v4389
        %v4506 = vtanh.pop %v4438
        %v4507 = vtanh.pop %v4440
        %v4508 = vtanh.pop %v4489
        %v4509 = vtanh.pop %v4340
        %v4510 = vtanh.pop %v4342
        %v4511 = vtanh.pop %v4391
        %v4512 = vtanh.pop %v4393
        %v4513 = vtanh.pop %v4442
        %v4514 = vtanh.pop %v4444
        %v4515 = vtanh.pop %v4492
        %v4516 = vtanh.pop %v4346
        %v4517 = vtanh.pop %v4348
        %v4518 = vtanh.pop %v4397
        %v4519 = vtanh.pop %v4399
        %v4520 = vtanh.pop %v4448
        %v4521 = vtanh.pop %v4450
        %v4522 = vtanh.pop %v4497
        %v4523 = vpack.c.bf16 %v4509, %v4502
        %v4524 = vpack.c.bf16 %v4510, %v4503
        %v4525 = vpack.c.bf16 %v4511, %v4504
        %v4526 = vpack.c.bf16 %v4512, %v4505
        %v4527 = vpack.c.bf16 %v4513, %v4506
        %v4528 = vpack.c.bf16 %v4514, %v4507
        %v4529 = vpack.c.bf16 %v4515, %v4508
        %v4530 = vpack.c.bf16 %v4516, %v4516
        %v4531 = vpack.c.bf16 %v4517, %v4517
        %v4532 = vpack.c.bf16 %v4518, %v4518
        %v4533 = vpack.c.bf16 %v4519, %v4519
        %v4534 = vpack.c.bf16 %v4520, %v4520
        %v4535 = vpack.c.bf16 %v4521, %v4521
        %v4536 = vpack.c.bf16 %v4522, %v4522
        %v4551 = vunpack.c.l.b16 %v4523
        %v4552 = vunpack.c.l.b16 %v4524
        %v4553 = vunpack.c.l.b16 %v4525
        %v4554 = vunpack.c.l.b16 %v4526
        %v4555 = vunpack.c.l.b16 %v4527
        %v4556 = vunpack.c.l.b16 %v4528
        %v4557 = vunpack.c.l.b16 %v4529
        %v4558 = vunpack.c.h.b16 %v4523
        %v4559 = vunpack.c.h.b16 %v4524
        %v4560 = vunpack.c.h.b16 %v4525
        %v4561 = vunpack.c.h.b16 %v4526
        %v4562 = vunpack.c.h.b16 %v4527
        %v4563 = vunpack.c.h.b16 %v4528
        %v4564 = vunpack.c.h.b16 %v4529
        %v4565 = vunpack.c.l.b16 %v4530
        %v4566 = vunpack.c.l.b16 %v4531
        %v4567 = vunpack.c.l.b16 %v4532
        %v4568 = vunpack.c.l.b16 %v4533
        %v4569 = vunpack.c.l.b16 %v4534
        %v4570 = vunpack.c.l.b16 %v4535
        %v4571 = vunpack.c.l.b16 %v4536
        %v4572 = vpack.c.b16 %v4552, %v4551
        %v4573 = vpack.c.b16 %v4554, %v4553
        %v4574 = vpack.c.b16 %v4556, %v4555
        %v4575 = vpack.c.b16 %v4557, %v4557
        %v4576 = vpack.c.b16 %v4559, %v4558
        %v4577 = vpack.c.b16 %v4561, %v4560
        %v4578 = vpack.c.b16 %v4563, %v4562
        %v4579 = vpack.c.b16 %v4564, %v4564
        %v4580 = vpack.c.b16 %v4566, %v4565
        %v4581 = vpack.c.b16 %v4568, %v4567
        %v4582 = vpack.c.b16 %v4570, %v4569
        %v4583 = vpack.c.b16 %v4571, %v4571
        %4596 = vst [vmem:[%s421] sm:$0xff] %v4572
        %4597 = vst [vmem:[%s421 + $0x8] sm:$0xff] %v4573
        %4598 = vst [vmem:[%s421 + $0x10] sm:$0xff] %v4574
        %4599 = vst [vmem:[%s421 + $0x18] sm:$0xf] %v4575
        %4600 = vst [vmem:[%s421 + $0x1c] sm:$0xff] %v4576
        %4601 = vst [vmem:[%s421 + $0x24] sm:$0xff] %v4577
        %4602 = vst [vmem:[%s421 + $0x2c] sm:$0xff] %v4578
        %4603 = vst [vmem:[%s421 + $0x34] sm:$0xf] %v4579
        %4604 = vst [vmem:[%s421 + $0x38] sm:$0xff] %v4580
        %4605 = vst [vmem:[%s421 + $0x40] sm:$0xff] %v4581
        %4606 = vst [vmem:[%s421 + $0x48] sm:$0xff] %v4582
        %4607 = vst [vmem:[%s421 + $0x50] sm:$0xf] %v4583
        %s4608 = sand.u32 %s231, 1
        %s4609 = scalar_lea.sflag [#allocation4], %s4608
        %s4610 = sand.u32 %s231, 1
        %s4611 = smul.addr %s4610, 84
        %s4612 = scalar_lea.vmem [#allocation13], %s4611
        // Predicated region
        $region81: #{tpu_custom_call.1} parent=55 // pred_check
          %p4613 = pneg %p241
        $region82: #{tpu_custom_call.1} parent=55 // pred_check_branch
          %4615 = sbr.rel (%p4613) target = $region84
        $region83: #{tpu_custom_call.1} parent=55 // pred_region
          %s4616 = smul.u32 3, %s29
          %s4618 = ssub.s32 1344, 1344
          %4619 = vsyncadd %s4609, %s4618
          %s4620 = smul.addr %s4616, 7
          %s4621 = smul.addr %s4620, 64
          %s4622 = scalar_lea.hbm %s9, %s4621
          %s4623 = sshll.u32 %s4612, 4
          %s4624 = int_to_ptr.vmem [resolvable:$true] %s4623
          %4629 = dma.vmem_to_hbm [thread:$0]  %s4624, 1344, %s4622, %s4609, 448, 448, 28
        $region84: #{tpu_custom_call.1} parent=55 // pred_fallthru
          _
      $region56: #{tpu_custom_call.1} parent=5 // pred_fallthru
        _
      %p4630 = scmp.le.s32.totalorder 2, %s24
      // Predicated region
      $region85: #{tpu_custom_call.1} parent=5 // pred_check
        %p4631 = pneg %p4630
      $region86: #{tpu_custom_call.1} parent=5 // pred_check_branch
        %4633 = sbr.rel (%p4631) target = $region88
      $region87: #{tpu_custom_call.1} parent=5 // pred_region
        %s4634 = ssub.s32 %s24, 2
        // Predicated region
        $region89: #{tpu_custom_call.1} parent=87 // pred_check
          %p4635 = pneg %p247
        $region90: #{tpu_custom_call.1} parent=87 // pred_check_branch
          %4637 = sbr.rel (%p4635) target = $region92
        $region91: #{tpu_custom_call.1} parent=87 // pred_region
          %s4638 = sand.u32 %s232, 1
          %s4639 = scalar_lea.sflag [#allocation4], %s4638
          %s4640 = sand.u32 %s232, 1
          %s4641 = smul.addr %s4640, 84
          %s4642 = scalar_lea.vmem [#allocation13], %s4641
          %4643 = dma.done %s4639, 1344
        $region92: #{tpu_custom_call.1} parent=87 // pred_fallthru
          _
      $region88: #{tpu_custom_call.1} parent=5 // pred_fallthru
        _
    $region6: #{tpu_custom_call.1} parent=1 // loop_footer
      %s28 = sadd.s32 1, %s24
    $region7: #{tpu_custom_call.1} parent=1 // loop_footer_branch
      %23 = sbr.rel target = $region3
    $region8: #{tpu_custom_call.1} parent=1 // loop_exit
      _
    %4644 = vsyncpa [#allocation3], 1
    %s4645 = scalar_lea.sflag [#allocation3], 1
    %4646 = vsyncpa %s4645, 1
    %4647 = vsyncpa [#allocation6], 1
    %4648 = vsyncpa [#allocation9], 1
    %4649 = vsyncpa [#allocation12], 1
    %4650 = vsyncpa [#allocation4], 1
    %s4651 = scalar_lea.sflag [#allocation4], 1
    %4652 = vsyncpa %s4651, 1

</llo_original>
